<compile_context>
chip_gen: v6e
topology: v6e:2x2x1
jax: 0.10.0
libtpu: 0.0.40
codegen_flags: <defaults>
</compile_context>

<pallas_src>
import functools

import jax
import jax.numpy as jnp
from jax.experimental import pallas as pl
from jax.experimental.pallas import tpu as pltpu

BN_EPS = 1e-5


def _round_up(x, m):
    return ((x + m - 1) // m) * m


def _conv_out(size, k=5, s=2):
    return (size - (k - 1) - 1) // s + 1


# ----------------------------------------------------------------------------
# Kernel 1: fused GEMM + bias (+ optional ReLU).  x is f32 (cast to bf16 on the
# VPU in-kernel), w is pre-folded bf16, accumulation in f32 on the MXU.
# ----------------------------------------------------------------------------
def _gemm_bias_act_kernel(x_ref, w_ref, b_ref, o_ref, *, relu):
    acc = jnp.dot(x_ref[...].astype(jnp.bfloat16), w_ref[...],
                  preferred_element_type=jnp.float32)
    y = acc + b_ref[...]
    if relu:
        y = jnp.maximum(y, 0.0)
    o_ref[...] = y.astype(o_ref.dtype)


def gemm_bias_act(x, w, b, *, relu):
    """out = relu_opt(x @ w + b).  x:(M,K) f32, w:(K,N) bf16, b:(1,N) f32."""
    M, K = x.shape
    K2, N = w.shape
    assert K == K2 and b.shape == (1, N)
    return pl.pallas_call(
        functools.partial(_gemm_bias_act_kernel, relu=relu),
        out_shape=jax.ShapeDtypeStruct((M, N), jnp.float32),
        grid=(1,),
        in_specs=[pl.BlockSpec((M, K), lambda i: (0, 0)),
                  pl.BlockSpec((K, N), lambda i: (0, 0)),
                  pl.BlockSpec((1, N), lambda i: (0, 0))],
        out_specs=pl.BlockSpec((M, N), lambda i: (0, 0)),
        compiler_params=pltpu.CompilerParams(
            dimension_semantics=("arbitrary",)),
    )(x, w, b)


# ----------------------------------------------------------------------------
# Kernel 2: fused conv2 + conv3 + head.
# p2 rows are ordered (oh2, ow2, n_padded), so for conv3 (whose 5x5 window
# covers the whole 5x5 conv2 map -> 1x1 output) tap p = kh*5+kw is just the
# contiguous row slice y2[p*np : (p+1)*np, :], 8-aligned because the batch is
# padded to a multiple of 8.
# ----------------------------------------------------------------------------
def _tail_kernel(p2_ref, w2_ref, b2_ref, w3_ref, b3_ref, wh_ref, bh_ref, o_ref,
                 *, np_rows, c2, taps):
    # conv2 + bn2 + relu: one GEMM over all taps*np_rows patch rows.
    y2 = jnp.dot(p2_ref[...].astype(jnp.bfloat16), w2_ref[...],
                 preferred_element_type=jnp.float32) + b2_ref[...]
    y2 = jnp.maximum(y2, 0.0)                         # (taps*np_rows, c2) f32

    # conv3 + bn3 + relu: accumulate 25 aligned row-slices against W3 chunks.
    w3 = w3_ref[...]                                  # (taps*c2, c3) bf16
    acc = jnp.dot(y2[0:np_rows, :].astype(jnp.bfloat16), w3[0:c2, :],
                  preferred_element_type=jnp.float32)
    for p in range(1, taps):
        acc = acc + jnp.dot(
            y2[p * np_rows:(p + 1) * np_rows, :].astype(jnp.bfloat16),
            w3[p * c2:(p + 1) * c2, :],
            preferred_element_type=jnp.float32)
    y3 = jnp.maximum(acc + b3_ref[...], 0.0)          # (np_rows, c3)

    # head (1x1 spatial -> NCHW flatten is the identity on (n, c3)).
    out = jnp.dot(y3.astype(jnp.bfloat16), wh_ref[...],
                  preferred_element_type=jnp.float32) + bh_ref[...]
    o_ref[...] = out.astype(o_ref.dtype)


def tail_fused(p2, w2, b2, w3, b3, wh, bh, *, np_rows, c2, taps):
    M, K2 = p2.shape
    c3 = w3.shape[1]
    n_out = wh.shape[1]
    assert M == taps * np_rows and w2.shape == (K2, c2)
    assert w3.shape[0] == taps * c2 and wh.shape[0] == c3
    assert b2.shape == (1, c2) and b3.shape == (1, c3) and bh.shape == (1, n_out)
    return pl.pallas_call(
        functools.partial(_tail_kernel, np_rows=np_rows, c2=c2, taps=taps),
        out_shape=jax.ShapeDtypeStruct((np_rows, n_out), jnp.float32),
        grid=(1,),
        in_specs=[pl.BlockSpec(p2.shape, lambda i: (0, 0)),
                  pl.BlockSpec(w2.shape, lambda i: (0, 0)),
                  pl.BlockSpec(b2.shape, lambda i: (0, 0)),
                  pl.BlockSpec(w3.shape, lambda i: (0, 0)),
                  pl.BlockSpec(b3.shape, lambda i: (0, 0)),
                  pl.BlockSpec(wh.shape, lambda i: (0, 0)),
                  pl.BlockSpec(bh.shape, lambda i: (0, 0))],
        out_specs=pl.BlockSpec((np_rows, n_out), lambda i: (0, 0)),
        compiler_params=pltpu.CompilerParams(
            dimension_semantics=("arbitrary",)),
    )(p2, w2, b2, w3, b3, wh, bh)


# ----------------------------------------------------------------------------
# im2col glue (plain JAX).  Patch K-ordering is always (kh, kw, c).
# TODO(synk): the inter-layer patch extraction stays as XLA glue; expressing it
# in-kernel needs strided sublane gathers / relayout-heavy reshapes.
# ----------------------------------------------------------------------------
def im2col_nhw(x_nhwc, k, stride):
    """Rows ordered (n, oh, ow)."""
    N, H, W, C = x_nhwc.shape
    OH = (H - k) // stride + 1
    OW = (W - k) // stride + 1
    cols = [x_nhwc[:, di:di + stride * OH:stride, dj:dj + stride * OW:stride, :]
            for di in range(k) for dj in range(k)]
    patches = jnp.stack(cols, axis=3)                  # (N, OH, OW, k*k, C)
    return patches.reshape(N * OH * OW, k * k * C), (N, OH, OW)


def im2col_hwn_padded(x_nhwc, k, stride, n_pad):
    """Rows ordered (oh, ow, n) with the batch axis zero-padded to n_pad."""
    N, H, W, C = x_nhwc.shape
    OH = (H - k) // stride + 1
    OW = (W - k) // stride + 1
    cols = [x_nhwc[:, di:di + stride * OH:stride, dj:dj + stride * OW:stride, :]
            for di in range(k) for dj in range(k)]
    patches = jnp.stack(cols, axis=3)                  # (N, OH, OW, k*k, C)
    patches = jnp.transpose(patches, (1, 2, 0, 3, 4))  # (OH, OW, N, k*k, C)
    patches = jnp.pad(patches, ((0, 0), (0, 0), (0, n_pad - N), (0, 0), (0, 0)))
    return patches.reshape(OH * OW * n_pad, k * k * C), (OH, OW)


# ----------------------------------------------------------------------------
# One-time weight preparation: BN (eval) fold, scale folded into weight
# columns, torch layout -> GEMM layout, bf16 cast.
# ----------------------------------------------------------------------------
def prepare_params(params):
    prep = {}
    for name in ("c1", "c2", "c3"):
        w, b, gamma, beta, mean, var = params[name]
        scale = gamma / jnp.sqrt(var + BN_EPS)
        bias = (b - mean) * scale + beta
        oc = w.shape[0]
        # torch (OC, IC, KH, KW) -> (KH, KW, IC, OC) -> (K, OC), scale folded in.
        wmat = jnp.transpose(w, (2, 3, 1, 0)).reshape(-1, oc) * scale[None, :]
        prep[name] = (wmat.astype(jnp.bfloat16),
                      bias.reshape(1, oc).astype(jnp.float32))
    hw, hb = params["head"]
    prep["head"] = (hw.T.astype(jnp.bfloat16),
                    hb.reshape(1, -1).astype(jnp.float32))
    return prep


# ----------------------------------------------------------------------------
# DQN forward (matches the PyTorch module, BatchNorm in eval mode)
# ----------------------------------------------------------------------------
def dqn_forward(x_nchw, prep):
    N = x_nchw.shape[0]
    x = jnp.transpose(x_nchw, (0, 2, 3, 1))            # NCHW -> NHWC
    w1, b1 = prep["c1"]
    w2, b2 = prep["c2"]
    w3, b3 = prep["c3"]
    wh, bh = prep["head"]

    # conv1 + bn1 + relu
    p1, (_, OH1, OW1) = im2col_nhw(x, 5, 2)
    y1 = gemm_bias_act(p1, w1, b1, relu=True)          # (N*OH1*OW1, 16)
    y1 = y1.reshape(N, OH1, OW1, w1.shape[1])

    OH2, OW2 = _conv_out(OH1), _conv_out(OW1)
    if OH2 == 5 and OW2 == 5:
        # Fast path: conv3 output is 1x1, so conv2 + conv3 + head fuse into one
        # VMEM-resident kernel.
        n_pad = _round_up(max(N, 8), 8)
        p2, _ = im2col_hwn_padded(y1, 5, 2, n_pad)     # (25*n_pad, 25*C1)
        out = tail_fused(p2, w2, b2, w3, b3, wh, bh,
                         np_rows=n_pad, c2=w2.shape[1], taps=OH2 * OW2)
        return out[:N]

    # Generic fallback (conv3 output > 1x1): per-layer kernels.
    p2, _ = im2col_nhw(y1, 5, 2)
    y2 = gemm_bias_act(p2, w2, b2, relu=True).reshape(N, OH2, OW2, w2.shape[1])
    p3, (_, OH3, OW3) = im2col_nhw(y2, 5, 2)
    y3 = gemm_bias_act(p3, w3, b3, relu=True).reshape(N, OH3, OW3, w3.shape[1])
    feat = jnp.transpose(y3, (0, 3, 1, 2)).reshape(N, -1)   # NCHW flatten order
    return gemm_bias_act(feat, wh, bh, relu=False)


# ----------------------------------------------------------------------------
# Pure-JAX f32 reference (lax.conv, HIGHEST precision) for correctness check
# ----------------------------------------------------------------------------
def dqn_reference(x_nchw, params):
    def block(x, p):
        w, b, gamma, beta, mean, var = p
        y = jax.lax.conv_general_dilated(
            x, w, window_strides=(2, 2), padding="VALID",
            dimension_numbers=("NCHW", "OIHW", "NCHW"),
            precision=jax.lax.Precision.HIGHEST)
        y = y + b[None, :, None, None]
        y = gamma[None, :, None, None] * (y - mean[None, :, None, None]) / \
            jnp.sqrt(var[None, :, None, None] + BN_EPS) + beta[None, :, None, None]
        return jnp.maximum(y, 0.0)

    x = block(x_nchw, params["c1"])
    x = block(x, params["c2"])
    x = block(x, params["c3"])
    head_w, head_b = params["head"]
    feat = x.reshape(x.shape[0], -1)
    return jnp.dot(feat, head_w.T, precision=jax.lax.Precision.HIGHEST) + head_b


# ----------------------------------------------------------------------------
# Deterministic parameter construction (module __init__ shapes)
# ----------------------------------------------------------------------------
def make_params(key, h, w, outputs):
    def conv2d_size_out(size, kernel_size=5, stride=2):
        return (size - (kernel_size - 1) - 1) // stride + 1

    convw = conv2d_size_out(conv2d_size_out(conv2d_size_out(w)))
    convh = conv2d_size_out(conv2d_size_out(conv2d_size_out(h)))
    linear_input = convw * convh * 32

    keys = jax.random.split(key, 20)
    ki = iter(range(20))

    def conv_block(in_c, out_c):
        wk = jax.random.normal(keys[next(ki)], (out_c, in_c, 5, 5), jnp.float32) * 0.05
        bk = jax.random.normal(keys[next(ki)], (out_c,), jnp.float32) * 0.05
        gamma = 0.5 + jax.random.uniform(keys[next(ki)], (out_c,), jnp.float32)
        beta = jax.random.normal(keys[next(ki)], (out_c,), jnp.float32) * 0.1
        mean = jax.random.normal(keys[next(ki)], (out_c,), jnp.float32) * 0.1
        var = 0.5 + jax.random.uniform(keys[next(ki)], (out_c,), jnp.float32)
        return (wk, bk, gamma, beta, mean, var)

    params = {
        "c1": conv_block(3, 16),
        "c2": conv_block(16, 32),
        "c3": conv_block(32, 32),
        "head": (
            jax.random.normal(keys[next(ki)], (outputs, linear_input), jnp.float32) * 0.05,
            jax.random.normal(keys[next(ki)], (outputs,), jnp.float32) * 0.05,
        ),
    }
    return params


if __name__ == "__main__":
    # Small shapes consistent with the module: H=W=32 -> conv stack gives 1x1x32.
    B, C, H, W = 2, 3, 32, 32
    OUTPUTS = 4

    key = jax.random.PRNGKey(0)
    k_x, k_p = jax.random.split(key)
    x = jax.random.normal(k_x, (B, C, H, W), jnp.float32)
    params = make_params(k_p, H, W, OUTPUTS)

    prep = prepare_params(params)          # one-time: BN fold + layout + bf16
    fwd = jax.jit(dqn_forward)

    out = jax.block_until_ready(fwd(x, prep))
    ref = jax.block_until_ready(dqn_reference(x, params))

    assert out.shape == (B, OUTPUTS), out.shape
    # Tolerance accounts for bf16 MXU inputs (f32 accumulation) vs an all-f32
    # reference; wiring errors would be orders of magnitude larger.
    if not jnp.allclose(out, ref, rtol=5e-2, atol=5e-2):
        raise AssertionError(f"mismatch: max abs err {jnp.max(jnp.abs(out - ref))}")

    print("KERNEL_OK")
</pallas_src>

<mosaic_0001>
module attributes {stable_mosaic.version = 11 : i64} {
  func.func @_gemm_bias_act_kernel(%arg0: i32, %arg1: memref<392x75xf32, #tpu.memory_space<vmem>>, %arg2: memref<75x16xbf16, #tpu.memory_space<vmem>>, %arg3: memref<1x16xf32, #tpu.memory_space<vmem>>, %arg4: memref<392x16xf32, #tpu.memory_space<vmem>>) attributes {dimension_semantics = [#tpu.dimension_semantics<arbitrary>], iteration_bounds = array<i64: 1>, scalar_prefetch = 0 : i64, scratch_operands = 0 : i64, tpu.core_type = #tpu.core_type<tc>, window_params = [{pipeline_mode = #tpu.pipeline_mode<synchronous>, transform_indices = @transform_0, window_bounds = array<i64: 392, 75>}, {pipeline_mode = #tpu.pipeline_mode<synchronous>, transform_indices = @transform_1, window_bounds = array<i64: 75, 16>}, {pipeline_mode = #tpu.pipeline_mode<synchronous>, transform_indices = @transform_2, window_bounds = array<i64: 1, 16>}, {pipeline_mode = #tpu.pipeline_mode<synchronous>, transform_indices = @transform_3, window_bounds = array<i64: 392, 16>}]} {
    %c0 = arith.constant 0 : index
    %c0_0 = arith.constant 0 : index
    %0 = vector.load %arg1[%c0, %c0_0] : memref<392x75xf32, #tpu.memory_space<vmem>>, vector<392x75xf32>
    %1 = arith.truncf %0 : vector<392x75xf32> to vector<392x75xbf16>
    %c0_1 = arith.constant 0 : index
    %c0_2 = arith.constant 0 : index
    %2 = vector.load %arg2[%c0_1, %c0_2] : memref<75x16xbf16, #tpu.memory_space<vmem>>, vector<75x16xbf16>
    %cst = arith.constant dense<0.000000e+00> : vector<392x16xf32>
    %3 = tpu.matmul %1, %2, %cst {dimension_numbers = #tpu.dot_dimension_numbers<[1], [0], [0], [1], [0, 0, 1, 1], [], []>} : vector<392x75xbf16>, vector<75x16xbf16>, vector<392x16xf32> -> vector<392x16xf32>
    %c0_3 = arith.constant 0 : index
    %c0_4 = arith.constant 0 : index
    %4 = vector.load %arg3[%c0_3, %c0_4] : memref<1x16xf32, #tpu.memory_space<vmem>>, vector<1x16xf32>
    %5 = vector.broadcast %4 : vector<1x16xf32> to vector<392x16xf32>
    %6 = arith.addf %3, %5 : vector<392x16xf32>
    %cst_5 = arith.constant 0.000000e+00 : f32
    %7 = vector.broadcast %cst_5 : f32 to vector<392x16xf32>
    %8 = arith.maximumf %6, %7 : vector<392x16xf32>
    %c0_6 = arith.constant 0 : index
    %c0_7 = arith.constant 0 : index
    %9 = vector.load %arg4[%c0_6, %c0_7] : memref<392x16xf32, #tpu.memory_space<vmem>>, vector<392x16xf32>
    tpu.vector_store %arg4[%c0_6, %c0_7], %8 {strides = array<i32>} : memref<392x16xf32, #tpu.memory_space<vmem>>, vector<392x16xf32>,
    return
  }
  func.func @transform_0(%arg0: i32) -> (i32, i32) {
    %c0_i32 = arith.constant 0 : i32
    %c0_i32_0 = arith.constant 0 : i32
    %c0_i32_1 = arith.constant 0 : i32
    return %c0_i32, %c0_i32_0 : i32, i32
  }
  func.func @transform_1(%arg0: i32) -> (i32, i32) {
    %c0_i32 = arith.constant 0 : i32
    %c0_i32_0 = arith.constant 0 : i32
    %c0_i32_1 = arith.constant 0 : i32
    return %c0_i32, %c0_i32_0 : i32, i32
  }
  func.func @transform_2(%arg0: i32) -> (i32, i32) {
    %c0_i32 = arith.constant 0 : i32
    %c0_i32_0 = arith.constant 0 : i32
    %c0_i32_1 = arith.constant 0 : i32
    return %c0_i32, %c0_i32_0 : i32, i32
  }
  func.func @transform_3(%arg0: i32) -> (i32, i32) {
    %c0_i32 = arith.constant 0 : i32
    %c0_i32_0 = arith.constant 0 : i32
    %c0_i32_1 = arith.constant 0 : i32
    return %c0_i32, %c0_i32_0 : i32, i32
  }
}

module attributes {stable_mosaic.version = 11 : i64} {
  func.func @_tail_kernel(%arg0: i32, %arg1: memref<200x400xf32, #tpu.memory_space<vmem>>, %arg2: memref<400x32xbf16, #tpu.memory_space<vmem>>, %arg3: memref<1x32xf32, #tpu.memory_space<vmem>>, %arg4: memref<800x32xbf16, #tpu.memory_space<vmem>>, %arg5: memref<1x32xf32, #tpu.memory_space<vmem>>, %arg6: memref<32x4xbf16, #tpu.memory_space<vmem>>, %arg7: memref<1x4xf32, #tpu.memory_space<vmem>>, %arg8: memref<8x4xf32, #tpu.memory_space<vmem>>) attributes {dimension_semantics = [#tpu.dimension_semantics<arbitrary>], iteration_bounds = array<i64: 1>, scalar_prefetch = 0 : i64, scratch_operands = 0 : i64, tpu.core_type = #tpu.core_type<tc>, window_params = [{pipeline_mode = #tpu.pipeline_mode<synchronous>, transform_indices = @transform_0, window_bounds = array<i64: 200, 400>}, {pipeline_mode = #tpu.pipeline_mode<synchronous>, transform_indices = @transform_1, window_bounds = array<i64: 400, 32>}, {pipeline_mode = #tpu.pipeline_mode<synchronous>, transform_indices = @transform_2, window_bounds = array<i64: 1, 32>}, {pipeline_mode = #tpu.pipeline_mode<synchronous>, transform_indices = @transform_3, window_bounds = array<i64: 800, 32>}, {pipeline_mode = #tpu.pipeline_mode<synchronous>, transform_indices = @transform_4, window_bounds = array<i64: 1, 32>}, {pipeline_mode = #tpu.pipeline_mode<synchronous>, transform_indices = @transform_5, window_bounds = array<i64: 32, 4>}, {pipeline_mode = #tpu.pipeline_mode<synchronous>, transform_indices = @transform_6, window_bounds = array<i64: 1, 4>}, {pipeline_mode = #tpu.pipeline_mode<synchronous>, transform_indices = @transform_7, window_bounds = array<i64: 8, 4>}]} {
    %c0 = arith.constant 0 : index
    %c0_0 = arith.constant 0 : index
    %0 = vector.load %arg1[%c0, %c0_0] : memref<200x400xf32, #tpu.memory_space<vmem>>, vector<200x400xf32>
    %1 = arith.truncf %0 : vector<200x400xf32> to vector<200x400xbf16>
    %c0_1 = arith.constant 0 : index
    %c0_2 = arith.constant 0 : index
    %2 = vector.load %arg2[%c0_1, %c0_2] : memref<400x32xbf16, #tpu.memory_space<vmem>>, vector<400x32xbf16>
    %cst = arith.constant dense<0.000000e+00> : vector<200x32xf32>
    %3 = tpu.matmul %1, %2, %cst {dimension_numbers = #tpu.dot_dimension_numbers<[1], [0], [0], [1], [0, 0, 1, 1], [], []>} : vector<200x400xbf16>, vector<400x32xbf16>, vector<200x32xf32> -> vector<200x32xf32>
    %c0_3 = arith.constant 0 : index
    %c0_4 = arith.constant 0 : index
    %4 = vector.load %arg3[%c0_3, %c0_4] : memref<1x32xf32, #tpu.memory_space<vmem>>, vector<1x32xf32>
    %5 = vector.broadcast %4 : vector<1x32xf32> to vector<200x32xf32>
    %6 = arith.addf %3, %5 : vector<200x32xf32>
    %cst_5 = arith.constant 0.000000e+00 : f32
    %7 = vector.broadcast %cst_5 : f32 to vector<200x32xf32>
    %8 = arith.maximumf %6, %7 : vector<200x32xf32>
    %c0_6 = arith.constant 0 : index
    %c0_7 = arith.constant 0 : index
    %9 = vector.load %arg4[%c0_6, %c0_7] : memref<800x32xbf16, #tpu.memory_space<vmem>>, vector<800x32xbf16>
    %10 = vector.extract_strided_slice %8 {offsets = [0, 0], sizes = [8, 32], strides = [1, 1]} : vector<200x32xf32> to vector<8x32xf32>
    %11 = arith.truncf %10 : vector<8x32xf32> to vector<8x32xbf16>
    %12 = vector.extract_strided_slice %9 {offsets = [0, 0], sizes = [32, 32], strides = [1, 1]} : vector<800x32xbf16> to vector<32x32xbf16>
    %cst_8 = arith.constant dense<0.000000e+00> : vector<8x32xf32>
    %13 = tpu.matmul %11, %12, %cst_8 {dimension_numbers = #tpu.dot_dimension_numbers<[1], [0], [0], [1], [0, 0, 1, 1], [], []>} : vector<8x32xbf16>, vector<32x32xbf16>, vector<8x32xf32> -> vector<8x32xf32>
    %14 = vector.extract_strided_slice %8 {offsets = [8, 0], sizes = [8, 32], strides = [1, 1]} : vector<200x32xf32> to vector<8x32xf32>
    %15 = arith.truncf %14 : vector<8x32xf32> to vector<8x32xbf16>
    %16 = vector.extract_strided_slice %9 {offsets = [32, 0], sizes = [32, 32], strides = [1, 1]} : vector<800x32xbf16> to vector<32x32xbf16>
    %cst_9 = arith.constant dense<0.000000e+00> : vector<8x32xf32>
    %17 = tpu.matmul %15, %16, %cst_9 {dimension_numbers = #tpu.dot_dimension_numbers<[1], [0], [0], [1], [0, 0, 1, 1], [], []>} : vector<8x32xbf16>, vector<32x32xbf16>, vector<8x32xf32> -> vector<8x32xf32>
    %18 = arith.addf %13, %17 : vector<8x32xf32>
    %19 = vector.extract_strided_slice %8 {offsets = [16, 0], sizes = [8, 32], strides = [1, 1]} : vector<200x32xf32> to vector<8x32xf32>
    %20 = arith.truncf %19 : vector<8x32xf32> to vector<8x32xbf16>
    %21 = vector.extract_strided_slice %9 {offsets = [64, 0], sizes = [32, 32], strides = [1, 1]} : vector<800x32xbf16> to vector<32x32xbf16>
    %cst_10 = arith.constant dense<0.000000e+00> : vector<8x32xf32>
    %22 = tpu.matmul %20, %21, %cst_10 {dimension_numbers = #tpu.dot_dimension_numbers<[1], [0], [0], [1], [0, 0, 1, 1], [], []>} : vector<8x32xbf16>, vector<32x32xbf16>, vector<8x32xf32> -> vector<8x32xf32>
    %23 = arith.addf %18, %22 : vector<8x32xf32>
    %24 = vector.extract_strided_slice %8 {offsets = [24, 0], sizes = [8, 32], strides = [1, 1]} : vector<200x32xf32> to vector<8x32xf32>
    %25 = arith.truncf %24 : vector<8x32xf32> to vector<8x32xbf16>
    %26 = vector.extract_strided_slice %9 {offsets = [96, 0], sizes = [32, 32], strides = [1, 1]} : vector<800x32xbf16> to vector<32x32xbf16>
    %cst_11 = arith.constant dense<0.000000e+00> : vector<8x32xf32>
    %27 = tpu.matmul %25, %26, %cst_11 {dimension_numbers = #tpu.dot_dimension_numbers<[1], [0], [0], [1], [0, 0, 1, 1], [], []>} : vector<8x32xbf16>, vector<32x32xbf16>, vector<8x32xf32> -> vector<8x32xf32>
    %28 = arith.addf %23, %27 : vector<8x32xf32>
    %29 = vector.extract_strided_slice %8 {offsets = [32, 0], sizes = [8, 32], strides = [1, 1]} : vector<200x32xf32> to vector<8x32xf32>
    %30 = arith.truncf %29 : vector<8x32xf32> to vector<8x32xbf16>
    %31 = vector.extract_strided_slice %9 {offsets = [128, 0], sizes = [32, 32], strides = [1, 1]} : vector<800x32xbf16> to vector<32x32xbf16>
    %cst_12 = arith.constant dense<0.000000e+00> : vector<8x32xf32>
    %32 = tpu.matmul %30, %31, %cst_12 {dimension_numbers = #tpu.dot_dimension_numbers<[1], [0], [0], [1], [0, 0, 1, 1], [], []>} : vector<8x32xbf16>, vector<32x32xbf16>, vector<8x32xf32> -> vector<8x32xf32>
    %33 = arith.addf %28, %32 : vector<8x32xf32>
    %34 = vector.extract_strided_slice %8 {offsets = [40, 0], sizes = [8, 32], strides = [1, 1]} : vector<200x32xf32> to vector<8x32xf32>
    %35 = arith.truncf %34 : vector<8x32xf32> to vector<8x32xbf16>
    %36 = vector.extract_strided_slice %9 {offsets = [160, 0], sizes = [32, 32], strides = [1, 1]} : vector<800x32xbf16> to vector<32x32xbf16>
    %cst_13 = arith.constant dense<0.000000e+00> : vector<8x32xf32>
    %37 = tpu.matmul %35, %36, %cst_13 {dimension_numbers = #tpu.dot_dimension_numbers<[1], [0], [0], [1], [0, 0, 1, 1], [], []>} : vector<8x32xbf16>, vector<32x32xbf16>, vector<8x32xf32> -> vector<8x32xf32>
    %38 = arith.addf %33, %37 : vector<8x32xf32>
    %39 = vector.extract_strided_slice %8 {offsets = [48, 0], sizes = [8, 32], strides = [1, 1]} : vector<200x32xf32> to vector<8x32xf32>
    %40 = arith.truncf %39 : vector<8x32xf32> to vector<8x32xbf16>
    %41 = vector.extract_strided_slice %9 {offsets = [192, 0], sizes = [32, 32], strides = [1, 1]} : vector<800x32xbf16> to vector<32x32xbf16>
    %cst_14 = arith.constant dense<0.000000e+00> : vector<8x32xf32>
    %42 = tpu.matmul %40, %41, %cst_14 {dimension_numbers = #tpu.dot_dimension_numbers<[1], [0], [0], [1], [0, 0, 1, 1], [], []>} : vector<8x32xbf16>, vector<32x32xbf16>, vector<8x32xf32> -> vector<8x32xf32>
    %43 = arith.addf %38, %42 : vector<8x32xf32>
    %44 = vector.extract_strided_slice %8 {offsets = [56, 0], sizes = [8, 32], strides = [1, 1]} : vector<200x32xf32> to vector<8x32xf32>
    %45 = arith.truncf %44 : vector<8x32xf32> to vector<8x32xbf16>
    %46 = vector.extract_strided_slice %9 {offsets = [224, 0], sizes = [32, 32], strides = [1, 1]} : vector<800x32xbf16> to vector<32x32xbf16>
    %cst_15 = arith.constant dense<0.000000e+00> : vector<8x32xf32>
    %47 = tpu.matmul %45, %46, %cst_15 {dimension_numbers = #tpu.dot_dimension_numbers<[1], [0], [0], [1], [0, 0, 1, 1], [], []>} : vector<8x32xbf16>, vector<32x32xbf16>, vector<8x32xf32> -> vector<8x32xf32>
    %48 = arith.addf %43, %47 : vector<8x32xf32>
    %49 = vector.extract_strided_slice %8 {offsets = [64, 0], sizes = [8, 32], strides = [1, 1]} : vector<200x32xf32> to vector<8x32xf32>
    %50 = arith.truncf %49 : vector<8x32xf32> to vector<8x32xbf16>
    %51 = vector.extract_strided_slice %9 {offsets = [256, 0], sizes = [32, 32], strides = [1, 1]} : vector<800x32xbf16> to vector<32x32xbf16>
    %cst_16 = arith.constant dense<0.000000e+00> : vector<8x32xf32>
    %52 = tpu.matmul %50, %51, %cst_16 {dimension_numbers = #tpu.dot_dimension_numbers<[1], [0], [0], [1], [0, 0, 1, 1], [], []>} : vector<8x32xbf16>, vector<32x32xbf16>, vector<8x32xf32> -> vector<8x32xf32>
    %53 = arith.addf %48, %52 : vector<8x32xf32>
    %54 = vector.extract_strided_slice %8 {offsets = [72, 0], sizes = [8, 32], strides = [1, 1]} : vector<200x32xf32> to vector<8x32xf32>
    %55 = arith.truncf %54 : vector<8x32xf32> to vector<8x32xbf16>
    %56 = vector.extract_strided_slice %9 {offsets = [288, 0], sizes = [32, 32], strides = [1, 1]} : vector<800x32xbf16> to vector<32x32xbf16>
    %cst_17 = arith.constant dense<0.000000e+00> : vector<8x32xf32>
    %57 = tpu.matmul %55, %56, %cst_17 {dimension_numbers = #tpu.dot_dimension_numbers<[1], [0], [0], [1], [0, 0, 1, 1], [], []>} : vector<8x32xbf16>, vector<32x32xbf16>, vector<8x32xf32> -> vector<8x32xf32>
    %58 = arith.addf %53, %57 : vector<8x32xf32>
    %59 = vector.extract_strided_slice %8 {offsets = [80, 0], sizes = [8, 32], strides = [1, 1]} : vector<200x32xf32> to vector<8x32xf32>
    %60 = arith.truncf %59 : vector<8x32xf32> to vector<8x32xbf16>
    %61 = vector.extract_strided_slice %9 {offsets = [320, 0], sizes = [32, 32], strides = [1, 1]} : vector<800x32xbf16> to vector<32x32xbf16>
    %cst_18 = arith.constant dense<0.000000e+00> : vector<8x32xf32>
    %62 = tpu.matmul %60, %61, %cst_18 {dimension_numbers = #tpu.dot_dimension_numbers<[1], [0], [0], [1], [0, 0, 1, 1], [], []>} : vector<8x32xbf16>, vector<32x32xbf16>, vector<8x32xf32> -> vector<8x32xf32>
    %63 = arith.addf %58, %62 : vector<8x32xf32>
    %64 = vector.extract_strided_slice %8 {offsets = [88, 0], sizes = [8, 32], strides = [1, 1]} : vector<200x32xf32> to vector<8x32xf32>
    %65 = arith.truncf %64 : vector<8x32xf32> to vector<8x32xbf16>
    %66 = vector.extract_strided_slice %9 {offsets = [352, 0], sizes = [32, 32], strides = [1, 1]} : vector<800x32xbf16> to vector<32x32xbf16>
    %cst_19 = arith.constant dense<0.000000e+00> : vector<8x32xf32>
    %67 = tpu.matmul %65, %66, %cst_19 {dimension_numbers = #tpu.dot_dimension_numbers<[1], [0], [0], [1], [0, 0, 1, 1], [], []>} : vector<8x32xbf16>, vector<32x32xbf16>, vector<8x32xf32> -> vector<8x32xf32>
    %68 = arith.addf %63, %67 : vector<8x32xf32>
    %69 = vector.extract_strided_slice %8 {offsets = [96, 0], sizes = [8, 32], strides = [1, 1]} : vector<200x32xf32> to vector<8x32xf32>
    %70 = arith.truncf %69 : vector<8x32xf32> to vector<8x32xbf16>
    %71 = vector.extract_strided_slice %9 {offsets = [384, 0], sizes = [32, 32], strides = [1, 1]} : vector<800x32xbf16> to vector<32x32xbf16>
    %cst_20 = arith.constant dense<0.000000e+00> : vector<8x32xf32>
    %72 = tpu.matmul %70, %71, %cst_20 {dimension_numbers = #tpu.dot_dimension_numbers<[1], [0], [0], [1], [0, 0, 1, 1], [], []>} : vector<8x32xbf16>, vector<32x32xbf16>, vector<8x32xf32> -> vector<8x32xf32>
    %73 = arith.addf %68, %72 : vector<8x32xf32>
    %74 = vector.extract_strided_slice %8 {offsets = [104, 0], sizes = [8, 32], strides = [1, 1]} : vector<200x32xf32> to vector<8x32xf32>
    %75 = arith.truncf %74 : vector<8x32xf32> to vector<8x32xbf16>
    %76 = vector.extract_strided_slice %9 {offsets = [416, 0], sizes = [32, 32], strides = [1, 1]} : vector<800x32xbf16> to vector<32x32xbf16>
    %cst_21 = arith.constant dense<0.000000e+00> : vector<8x32xf32>
    %77 = tpu.matmul %75, %76, %cst_21 {dimension_numbers = #tpu.dot_dimension_numbers<[1], [0], [0], [1], [0, 0, 1, 1], [], []>} : vector<8x32xbf16>, vector<32x32xbf16>, vector<8x32xf32> -> vector<8x32xf32>
    %78 = arith.addf %73, %77 : vector<8x32xf32>
    %79 = vector.extract_strided_slice %8 {offsets = [112, 0], sizes = [8, 32], strides = [1, 1]} : vector<200x32xf32> to vector<8x32xf32>
    %80 = arith.truncf %79 : vector<8x32xf32> to vector<8x32xbf16>
    %81 = vector.extract_strided_slice %9 {offsets = [448, 0], sizes = [32, 32], strides = [1, 1]} : vector<800x32xbf16> to vector<32x32xbf16>
    %cst_22 = arith.constant dense<0.000000e+00> : vector<8x32xf32>
    %82 = tpu.matmul %80, %81, %cst_22 {dimension_numbers = #tpu.dot_dimension_numbers<[1], [0], [0], [1], [0, 0, 1, 1], [], []>} : vector<8x32xbf16>, vector<32x32xbf16>, vector<8x32xf32> -> vector<8x32xf32>
    %83 = arith.addf %78, %82 : vector<8x32xf32>
    %84 = vector.extract_strided_slice %8 {offsets = [120, 0], sizes = [8, 32], strides = [1, 1]} : vector<200x32xf32> to vector<8x32xf32>
    %85 = arith.truncf %84 : vector<8x32xf32> to vector<8x32xbf16>
    %86 = vector.extract_strided_slice %9 {offsets = [480, 0], sizes = [32, 32], strides = [1, 1]} : vector<800x32xbf16> to vector<32x32xbf16>
    %cst_23 = arith.constant dense<0.000000e+00> : vector<8x32xf32>
    %87 = tpu.matmul %85, %86, %cst_23 {dimension_numbers = #tpu.dot_dimension_numbers<[1], [0], [0], [1], [0, 0, 1, 1], [], []>} : vector<8x32xbf16>, vector<32x32xbf16>, vector<8x32xf32> -> vector<8x32xf32>
    %88 = arith.addf %83, %87 : vector<8x32xf32>
    %89 = vector.extract_strided_slice %8 {offsets = [128, 0], sizes = [8, 32], strides = [1, 1]} : vector<200x32xf32> to vector<8x32xf32>
    %90 = arith.truncf %89 : vector<8x32xf32> to vector<8x32xbf16>
    %91 = vector.extract_strided_slice %9 {offsets = [512, 0], sizes = [32, 32], strides = [1, 1]} : vector<800x32xbf16> to vector<32x32xbf16>
    %cst_24 = arith.constant dense<0.000000e+00> : vector<8x32xf32>
    %92 = tpu.matmul %90, %91, %cst_24 {dimension_numbers = #tpu.dot_dimension_numbers<[1], [0], [0], [1], [0, 0, 1, 1], [], []>} : vector<8x32xbf16>, vector<32x32xbf16>, vector<8x32xf32> -> vector<8x32xf32>
    %93 = arith.addf %88, %92 : vector<8x32xf32>
    %94 = vector.extract_strided_slice %8 {offsets = [136, 0], sizes = [8, 32], strides = [1, 1]} : vector<200x32xf32> to vector<8x32xf32>
    %95 = arith.truncf %94 : vector<8x32xf32> to vector<8x32xbf16>
    %96 = vector.extract_strided_slice %9 {offsets = [544, 0], sizes = [32, 32], strides = [1, 1]} : vector<800x32xbf16> to vector<32x32xbf16>
    %cst_25 = arith.constant dense<0.000000e+00> : vector<8x32xf32>
    %97 = tpu.matmul %95, %96, %cst_25 {dimension_numbers = #tpu.dot_dimension_numbers<[1], [0], [0], [1], [0, 0, 1, 1], [], []>} : vector<8x32xbf16>, vector<32x32xbf16>, vector<8x32xf32> -> vector<8x32xf32>
    %98 = arith.addf %93, %97 : vector<8x32xf32>
    %99 = vector.extract_strided_slice %8 {offsets = [144, 0], sizes = [8, 32], strides = [1, 1]} : vector<200x32xf32> to vector<8x32xf32>
    %100 = arith.truncf %99 : vector<8x32xf32> to vector<8x32xbf16>
    %101 = vector.extract_strided_slice %9 {offsets = [576, 0], sizes = [32, 32], strides = [1, 1]} : vector<800x32xbf16> to vector<32x32xbf16>
    %cst_26 = arith.constant dense<0.000000e+00> : vector<8x32xf32>
    %102 = tpu.matmul %100, %101, %cst_26 {dimension_numbers = #tpu.dot_dimension_numbers<[1], [0], [0], [1], [0, 0, 1, 1], [], []>} : vector<8x32xbf16>, vector<32x32xbf16>, vector<8x32xf32> -> vector<8x32xf32>
    %103 = arith.addf %98, %102 : vector<8x32xf32>
    %104 = vector.extract_strided_slice %8 {offsets = [152, 0], sizes = [8, 32], strides = [1, 1]} : vector<200x32xf32> to vector<8x32xf32>
    %105 = arith.truncf %104 : vector<8x32xf32> to vector<8x32xbf16>
    %106 = vector.extract_strided_slice %9 {offsets = [608, 0], sizes = [32, 32], strides = [1, 1]} : vector<800x32xbf16> to vector<32x32xbf16>
    %cst_27 = arith.constant dense<0.000000e+00> : vector<8x32xf32>
    %107 = tpu.matmul %105, %106, %cst_27 {dimension_numbers = #tpu.dot_dimension_numbers<[1], [0], [0], [1], [0, 0, 1, 1], [], []>} : vector<8x32xbf16>, vector<32x32xbf16>, vector<8x32xf32> -> vector<8x32xf32>
    %108 = arith.addf %103, %107 : vector<8x32xf32>
    %109 = vector.extract_strided_slice %8 {offsets = [160, 0], sizes = [8, 32], strides = [1, 1]} : vector<200x32xf32> to vector<8x32xf32>
    %110 = arith.truncf %109 : vector<8x32xf32> to vector<8x32xbf16>
    %111 = vector.extract_strided_slice %9 {offsets = [640, 0], sizes = [32, 32], strides = [1, 1]} : vector<800x32xbf16> to vector<32x32xbf16>
    %cst_28 = arith.constant dense<0.000000e+00> : vector<8x32xf32>
    %112 = tpu.matmul %110, %111, %cst_28 {dimension_numbers = #tpu.dot_dimension_numbers<[1], [0], [0], [1], [0, 0, 1, 1], [], []>} : vector<8x32xbf16>, vector<32x32xbf16>, vector<8x32xf32> -> vector<8x32xf32>
    %113 = arith.addf %108, %112 : vector<8x32xf32>
    %114 = vector.extract_strided_slice %8 {offsets = [168, 0], sizes = [8, 32], strides = [1, 1]} : vector<200x32xf32> to vector<8x32xf32>
    %115 = arith.truncf %114 : vector<8x32xf32> to vector<8x32xbf16>
    %116 = vector.extract_strided_slice %9 {offsets = [672, 0], sizes = [32, 32], strides = [1, 1]} : vector<800x32xbf16> to vector<32x32xbf16>
    %cst_29 = arith.constant dense<0.000000e+00> : vector<8x32xf32>
    %117 = tpu.matmul %115, %116, %cst_29 {dimension_numbers = #tpu.dot_dimension_numbers<[1], [0], [0], [1], [0, 0, 1, 1], [], []>} : vector<8x32xbf16>, vector<32x32xbf16>, vector<8x32xf32> -> vector<8x32xf32>
    %118 = arith.addf %113, %117 : vector<8x32xf32>
    %119 = vector.extract_strided_slice %8 {offsets = [176, 0], sizes = [8, 32], strides = [1, 1]} : vector<200x32xf32> to vector<8x32xf32>
    %120 = arith.truncf %119 : vector<8x32xf32> to vector<8x32xbf16>
    %121 = vector.extract_strided_slice %9 {offsets = [704, 0], sizes = [32, 32], strides = [1, 1]} : vector<800x32xbf16> to vector<32x32xbf16>
    %cst_30 = arith.constant dense<0.000000e+00> : vector<8x32xf32>
    %122 = tpu.matmul %120, %121, %cst_30 {dimension_numbers = #tpu.dot_dimension_numbers<[1], [0], [0], [1], [0, 0, 1, 1], [], []>} : vector<8x32xbf16>, vector<32x32xbf16>, vector<8x32xf32> -> vector<8x32xf32>
    %123 = arith.addf %118, %122 : vector<8x32xf32>
    %124 = vector.extract_strided_slice %8 {offsets = [184, 0], sizes = [8, 32], strides = [1, 1]} : vector<200x32xf32> to vector<8x32xf32>
    %125 = arith.truncf %124 : vector<8x32xf32> to vector<8x32xbf16>
    %126 = vector.extract_strided_slice %9 {offsets = [736, 0], sizes = [32, 32], strides = [1, 1]} : vector<800x32xbf16> to vector<32x32xbf16>
    %cst_31 = arith.constant dense<0.000000e+00> : vector<8x32xf32>
    %127 = tpu.matmul %125, %126, %cst_31 {dimension_numbers = #tpu.dot_dimension_numbers<[1], [0], [0], [1], [0, 0, 1, 1], [], []>} : vector<8x32xbf16>, vector<32x32xbf16>, vector<8x32xf32> -> vector<8x32xf32>
    %128 = arith.addf %123, %127 : vector<8x32xf32>
    %129 = vector.extract_strided_slice %8 {offsets = [192, 0], sizes = [8, 32], strides = [1, 1]} : vector<200x32xf32> to vector<8x32xf32>
    %130 = arith.truncf %129 : vector<8x32xf32> to vector<8x32xbf16>
    %131 = vector.extract_strided_slice %9 {offsets = [768, 0], sizes = [32, 32], strides = [1, 1]} : vector<800x32xbf16> to vector<32x32xbf16>
    %cst_32 = arith.constant dense<0.000000e+00> : vector<8x32xf32>
    %132 = tpu.matmul %130, %131, %cst_32 {dimension_numbers = #tpu.dot_dimension_numbers<[1], [0], [0], [1], [0, 0, 1, 1], [], []>} : vector<8x32xbf16>, vector<32x32xbf16>, vector<8x32xf32> -> vector<8x32xf32>
    %133 = arith.addf %128, %132 : vector<8x32xf32>
    %c0_33 = arith.constant 0 : index
    %c0_34 = arith.constant 0 : index
    %134 = vector.load %arg5[%c0_33, %c0_34] : memref<1x32xf32, #tpu.memory_space<vmem>>, vector<1x32xf32>
    %135 = vector.broadcast %134 : vector<1x32xf32> to vector<8x32xf32>
    %136 = arith.addf %133, %135 : vector<8x32xf32>
    %cst_35 = arith.constant 0.000000e+00 : f32
    %137 = vector.broadcast %cst_35 : f32 to vector<8x32xf32>
    %138 = arith.maximumf %136, %137 : vector<8x32xf32>
    %139 = arith.truncf %138 : vector<8x32xf32> to vector<8x32xbf16>
    %c0_36 = arith.constant 0 : index
    %c0_37 = arith.constant 0 : index
    %140 = vector.load %arg6[%c0_36, %c0_37] : memref<32x4xbf16, #tpu.memory_space<vmem>>, vector<32x4xbf16>
    %cst_38 = arith.constant dense<0.000000e+00> : vector<8x4xf32>
    %141 = tpu.matmul %139, %140, %cst_38 {dimension_numbers = #tpu.dot_dimension_numbers<[1], [0], [0], [1], [0, 0, 1, 1], [], []>} : vector<8x32xbf16>, vector<32x4xbf16>, vector<8x4xf32> -> vector<8x4xf32>
    %c0_39 = arith.constant 0 : index
    %c0_40 = arith.constant 0 : index
    %142 = vector.load %arg7[%c0_39, %c0_40] : memref<1x4xf32, #tpu.memory_space<vmem>>, vector<1x4xf32>
    %143 = vector.broadcast %142 : vector<1x4xf32> to vector<8x4xf32>
    %144 = arith.addf %141, %143 : vector<8x4xf32>
    %c0_41 = arith.constant 0 : index
    %c0_42 = arith.constant 0 : index
    %145 = vector.load %arg8[%c0_41, %c0_42] : memref<8x4xf32, #tpu.memory_space<vmem>>, vector<8x4xf32>
    tpu.vector_store %arg8[%c0_41, %c0_42], %144 {strides = array<i32>} : memref<8x4xf32, #tpu.memory_space<vmem>>, vector<8x4xf32>,
    return
  }
  func.func @transform_0(%arg0: i32) -> (i32, i32) {
    %c0_i32 = arith.constant 0 : i32
    %c0_i32_0 = arith.constant 0 : i32
    %c0_i32_1 = arith.constant 0 : i32
    return %c0_i32, %c0_i32_0 : i32, i32
  }
  func.func @transform_1(%arg0: i32) -> (i32, i32) {
    %c0_i32 = arith.constant 0 : i32
    %c0_i32_0 = arith.constant 0 : i32
    %c0_i32_1 = arith.constant 0 : i32
    return %c0_i32, %c0_i32_0 : i32, i32
  }
  func.func @transform_2(%arg0: i32) -> (i32, i32) {
    %c0_i32 = arith.constant 0 : i32
    %c0_i32_0 = arith.constant 0 : i32
    %c0_i32_1 = arith.constant 0 : i32
    return %c0_i32, %c0_i32_0 : i32, i32
  }
  func.func @transform_3(%arg0: i32) -> (i32, i32) {
    %c0_i32 = arith.constant 0 : i32
    %c0_i32_0 = arith.constant 0 : i32
    %c0_i32_1 = arith.constant 0 : i32
    return %c0_i32, %c0_i32_0 : i32, i32
  }
  func.func @transform_4(%arg0: i32) -> (i32, i32) {
    %c0_i32 = arith.constant 0 : i32
    %c0_i32_0 = arith.constant 0 : i32
    %c0_i32_1 = arith.constant 0 : i32
    return %c0_i32, %c0_i32_0 : i32, i32
  }
  func.func @transform_5(%arg0: i32) -> (i32, i32) {
    %c0_i32 = arith.constant 0 : i32
    %c0_i32_0 = arith.constant 0 : i32
    %c0_i32_1 = arith.constant 0 : i32
    return %c0_i32, %c0_i32_0 : i32, i32
  }
  func.func @transform_6(%arg0: i32) -> (i32, i32) {
    %c0_i32 = arith.constant 0 : i32
    %c0_i32_0 = arith.constant 0 : i32
    %c0_i32_1 = arith.constant 0 : i32
    return %c0_i32, %c0_i32_0 : i32, i32
  }
  func.func @transform_7(%arg0: i32) -> (i32, i32) {
    %c0_i32 = arith.constant 0 : i32
    %c0_i32_0 = arith.constant 0 : i32
    %c0_i32_1 = arith.constant 0 : i32
    return %c0_i32, %c0_i32_0 : i32, i32
  }
}

</mosaic_0001>

<llo_original>
// kernel: dqn_forward.2
$region0: #{dqn_forward.2}
  #allocation0 [shape = 'u32[]', space=smem, size = 0x4, offset = 0x4, fixed_abs, tag = 'smem constant byte address 0x4 - core index']
  #allocation1 [shape = 'u32[144,128]{1,0:T(1,128)}', space=vmem, size = 0x12000, scoped, tag = 'internal scratch']
  %s0 = inlined_call_operand.vmem [shape: f32[392,75], index: 0, kind: input, shape index: {}]
  %s1 = inlined_call_operand.vmem [shape: bf16[75,16], index: 1, kind: input, shape index: {}]
  %s2 = inlined_call_operand.vmem [shape: f32[1,16], index: 2, kind: input, shape index: {}]
  %s3 = inlined_call_operand.vmem [shape: f32[392,16], index: 3, kind: output, shape index: {}]
  %s4 = sld [smem:[#allocation0]]
  $region22: #{dqn_forward.2} parent=0
    _
  %s6 = ssub.s32 1, %s4
  %s7 = scalar_select 0, %s6, %s4
  // Predicated region
  $region2: #{dqn_forward.2} parent=0 // pred_check
    _
  $region3: #{dqn_forward.2} parent=0 // pred_check_branch
    %9 = sbr.rel (0) target = $region5
  $region4: #{dqn_forward.2} parent=0 // pred_region
    _
  $region5: #{dqn_forward.2} parent=0 // pred_fallthru
    _
  // Predicated region
  $region6: #{dqn_forward.2} parent=0 // pred_check
    _
  $region7: #{dqn_forward.2} parent=0 // pred_check_branch
    %11 = sbr.rel (0) target = $region9
  $region8: #{dqn_forward.2} parent=0 // pred_region
    _
  $region9: #{dqn_forward.2} parent=0 // pred_fallthru
    _
  // Predicated region
  $region10: #{dqn_forward.2} parent=0 // pred_check
    _
  $region11: #{dqn_forward.2} parent=0 // pred_check_branch
    %13 = sbr.rel (0) target = $region13
  $region12: #{dqn_forward.2} parent=0 // pred_region
    _
  $region13: #{dqn_forward.2} parent=0 // pred_fallthru
    _
  %v15 = vld [vmem:[%s0] sm:$0xff]
  %v16 = vld [vmem:[%s0 + $0x8] sm:$0xff]
  %v17 = vld [vmem:[%s0 + $0x10] sm:$0xff]
  %v18 = vld [vmem:[%s0 + $0x18] sm:$0xff]
  %v19 = vld [vmem:[%s0 + $0x20] sm:$0xff]
  %v20 = vld [vmem:[%s0 + $0x28] sm:$0xff]
  %v21 = vld [vmem:[%s0 + $0x30] sm:$0xff]
  %v22 = vld [vmem:[%s0 + $0x38] sm:$0xff]
  %v23 = vld [vmem:[%s0 + $0x40] sm:$0xff]
  %v24 = vld [vmem:[%s0 + $0x48] sm:$0xff]
  %v25 = vld [vmem:[%s0 + $0x50] sm:$0xff]
  %v26 = vld [vmem:[%s0 + $0x58] sm:$0xff]
  %v27 = vld [vmem:[%s0 + $0x60] sm:$0xff]
  %v28 = vld [vmem:[%s0 + $0x68] sm:$0xff]
  %v29 = vld [vmem:[%s0 + $0x70] sm:$0xff]
  %v30 = vld [vmem:[%s0 + $0x78] sm:$0xff]
  %v31 = vld [vmem:[%s0 + $0x80] sm:$0xff]
  %v32 = vld [vmem:[%s0 + $0x88] sm:$0xff]
  %v33 = vld [vmem:[%s0 + $0x90] sm:$0xff]
  %v34 = vld [vmem:[%s0 + $0x98] sm:$0xff]
  %v35 = vld [vmem:[%s0 + $0xa0] sm:$0xff]
  %v36 = vld [vmem:[%s0 + $0xa8] sm:$0xff]
  %v37 = vld [vmem:[%s0 + $0xb0] sm:$0xff]
  %v38 = vld [vmem:[%s0 + $0xb8] sm:$0xff]
  %v39 = vld [vmem:[%s0 + $0xc0] sm:$0xff]
  %v40 = vld [vmem:[%s0 + $0xc8] sm:$0xff]
  %v41 = vld [vmem:[%s0 + $0xd0] sm:$0xff]
  %v42 = vld [vmem:[%s0 + $0xd8] sm:$0xff]
  %v43 = vld [vmem:[%s0 + $0xe0] sm:$0xff]
  %v44 = vld [vmem:[%s0 + $0xe8] sm:$0xff]
  %v45 = vld [vmem:[%s0 + $0xf0] sm:$0xff]
  %v46 = vld [vmem:[%s0 + $0xf8] sm:$0xff]
  %v47 = vld [vmem:[%s0 + $0x100] sm:$0xff]
  %v48 = vld [vmem:[%s0 + $0x108] sm:$0xff]
  %v49 = vld [vmem:[%s0 + $0x110] sm:$0xff]
  %v50 = vld [vmem:[%s0 + $0x118] sm:$0xff]
  %v51 = vld [vmem:[%s0 + $0x120] sm:$0xff]
  %v52 = vld [vmem:[%s0 + $0x128] sm:$0xff]
  %v53 = vld [vmem:[%s0 + $0x130] sm:$0xff]
  %v54 = vld [vmem:[%s0 + $0x138] sm:$0xff]
  %v55 = vld [vmem:[%s0 + $0x140] sm:$0xff]
  %v56 = vld [vmem:[%s0 + $0x148] sm:$0xff]
  %v57 = vld [vmem:[%s0 + $0x150] sm:$0xff]
  %v58 = vld [vmem:[%s0 + $0x158] sm:$0xff]
  %v59 = vld [vmem:[%s0 + $0x160] sm:$0xff]
  %v60 = vld [vmem:[%s0 + $0x168] sm:$0xff]
  %v61 = vld [vmem:[%s0 + $0x170] sm:$0xff]
  %v62 = vld [vmem:[%s0 + $0x178] sm:$0xff]
  %v63 = vld [vmem:[%s0 + $0x180] sm:$0xff]
  %v64 = vpack.c.bf16 %v16, %v15
  %v65 = vpack.c.bf16 %v18, %v17
  %v66 = vpack.c.bf16 %v20, %v19
  %v67 = vpack.c.bf16 %v22, %v21
  %v68 = vpack.c.bf16 %v24, %v23
  %v69 = vpack.c.bf16 %v26, %v25
  %v70 = vpack.c.bf16 %v28, %v27
  %v71 = vpack.c.bf16 %v30, %v29
  %v72 = vpack.c.bf16 %v32, %v31
  %v73 = vpack.c.bf16 %v34, %v33
  %v74 = vpack.c.bf16 %v36, %v35
  %v75 = vpack.c.bf16 %v38, %v37
  %v76 = vpack.c.bf16 %v40, %v39
  %v77 = vpack.c.bf16 %v42, %v41
  %v78 = vpack.c.bf16 %v44, %v43
  %v79 = vpack.c.bf16 %v46, %v45
  %v80 = vpack.c.bf16 %v48, %v47
  %v81 = vpack.c.bf16 %v50, %v49
  %v82 = vpack.c.bf16 %v52, %v51
  %v83 = vpack.c.bf16 %v54, %v53
  %v84 = vpack.c.bf16 %v56, %v55
  %v85 = vpack.c.bf16 %v58, %v57
  %v86 = vpack.c.bf16 %v60, %v59
  %v87 = vpack.c.bf16 %v62, %v61
  %v88 = vpack.c.bf16 %v63, %v63
  %v89 = vld [vmem:[%s1] sm:$0xf]
  %v90 = vld [vmem:[%s1 + $0x4] sm:$0xf]
  %v91 = vld [vmem:[%s1 + $0x8] sm:$0xf]
  %v92 = vld [vmem:[%s1 + $0xc] sm:$0xf]
  %v93 = vld [vmem:[%s1 + $0x10] sm:$0xf]
  %v94 = vld [vmem:[%s1 + $0x14] sm:$0xf]
  %v95 = vld [vmem:[%s1 + $0x18] sm:$0xf]
  %v96 = vld [vmem:[%s1 + $0x1c] sm:$0xf]
  %v97 = vld [vmem:[%s1 + $0x20] sm:$0xf]
  %v98 = vld [vmem:[%s1 + $0x24] sm:$0x3]
  %v99 = vld [vmem:[%s2] sm:$0x1]
  %v101 = vlaneseq
  %v102 = vshrl.u32 %v101, 7
  %v103 = vsub.s32 0, %v102
  %v104 = vrot.slane %v99, %v103
  %v116 = vunpack.c.l.b16 %v89
  %v117 = vunpack.c.l.b16 %v90
  %v118 = vunpack.c.l.b16 %v91
  %v119 = vunpack.c.l.b16 %v92
  %v120 = vunpack.c.l.b16 %v93
  %v121 = vunpack.c.l.b16 %v94
  %v122 = vunpack.c.l.b16 %v95
  %v123 = vunpack.c.l.b16 %v96
  %v124 = vunpack.c.l.b16 %v97
  %v125 = vunpack.c.l.b16 %v98
  %v126 = vpack.c.b16 %v117, %v116
  %v127 = vpack.c.b16 %v119, %v118
  %v128 = vpack.c.b16 %v121, %v120
  %v129 = vpack.c.b16 %v123, %v122
  %v130 = vpack.c.b16 %v125, %v124
  %vm135 = vcmask 613376
  %v137 = vsel %vm135, %v64, 0
  %v140 = vsel %vm135, %v65, 0
  %v143 = vsel %vm135, %v66, 0
  %v146 = vsel %vm135, %v67, 0
  %v149 = vsel %vm135, %v68, 0
  %v152 = vsel %vm135, %v69, 0
  %v155 = vsel %vm135, %v70, 0
  %v158 = vsel %vm135, %v71, 0
  %v161 = vsel %vm135, %v72, 0
  %v164 = vsel %vm135, %v73, 0
  %v167 = vsel %vm135, %v74, 0
  %v170 = vsel %vm135, %v75, 0
  %v173 = vsel %vm135, %v76, 0
  %v176 = vsel %vm135, %v77, 0
  %v179 = vsel %vm135, %v78, 0
  %v182 = vsel %vm135, %v79, 0
  %v185 = vsel %vm135, %v80, 0
  %v188 = vsel %vm135, %v81, 0
  %v191 = vsel %vm135, %v82, 0
  %v194 = vsel %vm135, %v83, 0
  %v197 = vsel %vm135, %v84, 0
  %v200 = vsel %vm135, %v85, 0
  %v203 = vsel %vm135, %v86, 0
  %v206 = vsel %vm135, %v87, 0
  %v209 = vsel %vm135, %v88, 0
  %vm211 = vcmask 1044480
  %vm212 = vcmask 1045504
  %v213 = vsel %vm211, 4294967295, 65535
  %v214 = vsel %vm212, %v213, 0
  %v216 = vand.u32 %v130, %v214
  %218 = vmatprep.subr.bf16.mxu0 0
  %219 = vmatpush1.bf16.msra.mxu0 0
  %220 = vmatprep.subr.bf16.mxu0 0
  %221 = vmatpush1.bf16.msra.mxu0 0
  %222 = vmatprep.subr.bf16.mxu0 0
  %223 = vmatpush1.bf16.msra.mxu0 0
  %224 = vmatprep.subr.bf16.mxu0 0
  %225 = vmatpush1.bf16.msra.mxu0 %v216
  %226 = vmatprep.subr.bf16.mxu0 0
  %227 = vmatpush1.bf16.msra.mxu0 %v129
  %228 = vmatprep.subr.bf16.mxu0 0
  %229 = vmatpush1.bf16.msra.mxu0 %v128
  %230 = vmatprep.subr.bf16.mxu0 0
  %231 = vmatpush1.bf16.msra.mxu0 %v127
  %232 = vmatprep.subr.bf16.mxu0 0
  %233 = vmatpush1.bf16.msra.mxu0 %v126
  %234 = vmatprep.subr.bf16.mxu0 0
  %235 = vmatpush2.bf16.msra.mxu0 0
  %236 = vmatprep.subr.bf16.mxu0 0
  %237 = vmatpush2.bf16.msra.mxu0 0
  %238 = vmatprep.subr.bf16.mxu0 0
  %239 = vmatpush2.bf16.msra.mxu0 0
  %240 = vmatprep.subr.bf16.mxu0 0
  %241 = vmatpush2.bf16.msra.mxu0 0
  %242 = vmatprep.subr.bf16.mxu0 0
  %243 = vmatpush2.bf16.msra.mxu0 0
  %244 = vmatprep.subr.bf16.mxu0 0
  %245 = vmatpush2.bf16.msra.mxu0 0
  %246 = vmatprep.subr.bf16.mxu0 0
  %247 = vmatpush2.bf16.msra.mxu0 0
  %248 = vmatprep.subr.bf16.mxu0 0
  %249 = vmatpush2.bf16.msra.mxu0 0
  %250 = vmatprep.mubr.bf16.mxu0 0
  %251 = vmatmul.mubr.bf16.gmra.mxu0 %v137
  %v252 = vpop.f32.mrf.mxu0
  %v253 = vadd.f32 %v104, %v252
  %v254 = vpop.f32.mrf.mxu0
  %v255 = vpop.f32.mrf.mxu0
  %v256 = vadd.f32 %v104, %v255
  %v257 = vpop.f32.mrf.mxu0
  %258 = vmatprep.mubr.bf16.mxu0 0
  %259 = vmatmul.mubr.bf16.gmra.mxu0 %v140
  %v260 = vpop.f32.mrf.mxu0
  %v261 = vadd.f32 %v104, %v260
  %v262 = vpop.f32.mrf.mxu0
  %v263 = vpop.f32.mrf.mxu0
  %v264 = vadd.f32 %v104, %v263
  %v265 = vpop.f32.mrf.mxu0
  %266 = vmatprep.mubr.bf16.mxu0 0
  %267 = vmatmul.mubr.bf16.gmra.mxu0 %v143
  %v268 = vpop.f32.mrf.mxu0
  %v269 = vadd.f32 %v104, %v268
  %v270 = vpop.f32.mrf.mxu0
  %v271 = vpop.f32.mrf.mxu0
  %v272 = vadd.f32 %v104, %v271
  %v273 = vpop.f32.mrf.mxu0
  %274 = vmatprep.mubr.bf16.mxu0 0
  %275 = vmatmul.mubr.bf16.gmra.mxu0 %v146
  %v276 = vpop.f32.mrf.mxu0
  %v277 = vadd.f32 %v104, %v276
  %v278 = vpop.f32.mrf.mxu0
  %v279 = vpop.f32.mrf.mxu0
  %v280 = vadd.f32 %v104, %v279
  %v281 = vpop.f32.mrf.mxu0
  %282 = vmatprep.mubr.bf16.mxu0 0
  %283 = vmatmul.mubr.bf16.gmra.mxu0 %v149
  %v284 = vpop.f32.mrf.mxu0
  %v285 = vadd.f32 %v104, %v284
  %v286 = vpop.f32.mrf.mxu0
  %v287 = vpop.f32.mrf.mxu0
  %v288 = vadd.f32 %v104, %v287
  %v289 = vpop.f32.mrf.mxu0
  %290 = vmatprep.mubr.bf16.mxu0 0
  %291 = vmatmul.mubr.bf16.gmra.mxu0 %v152
  %v292 = vpop.f32.mrf.mxu0
  %v293 = vadd.f32 %v104, %v292
  %v294 = vpop.f32.mrf.mxu0
  %v295 = vpop.f32.mrf.mxu0
  %v296 = vadd.f32 %v104, %v295
  %v297 = vpop.f32.mrf.mxu0
  %298 = vmatprep.mubr.bf16.mxu0 0
  %299 = vmatmul.mubr.bf16.gmra.mxu0 %v155
  %v300 = vpop.f32.mrf.mxu0
  %v301 = vadd.f32 %v104, %v300
  %v302 = vpop.f32.mrf.mxu0
  %v303 = vpop.f32.mrf.mxu0
  %v304 = vadd.f32 %v104, %v303
  %v305 = vpop.f32.mrf.mxu0
  %306 = vmatprep.mubr.bf16.mxu0 0
  %307 = vmatmul.mubr.bf16.gmra.mxu0 %v158
  %v308 = vpop.f32.mrf.mxu0
  %v309 = vadd.f32 %v104, %v308
  %v310 = vpop.f32.mrf.mxu0
  %v311 = vpop.f32.mrf.mxu0
  %v312 = vadd.f32 %v104, %v311
  %v313 = vpop.f32.mrf.mxu0
  %314 = vmatprep.mubr.bf16.mxu0 0
  %315 = vmatmul.mubr.bf16.gmra.mxu0 %v161
  %v316 = vpop.f32.mrf.mxu0
  %v317 = vadd.f32 %v104, %v316
  %v318 = vpop.f32.mrf.mxu0
  %v319 = vpop.f32.mrf.mxu0
  %v320 = vadd.f32 %v104, %v319
  %v321 = vpop.f32.mrf.mxu0
  %322 = vmatprep.mubr.bf16.mxu0 0
  %323 = vmatmul.mubr.bf16.gmra.mxu0 %v164
  %v324 = vpop.f32.mrf.mxu0
  %v325 = vadd.f32 %v104, %v324
  %v326 = vpop.f32.mrf.mxu0
  %v327 = vpop.f32.mrf.mxu0
  %v328 = vadd.f32 %v104, %v327
  %v329 = vpop.f32.mrf.mxu0
  %330 = vmatprep.mubr.bf16.mxu0 0
  %331 = vmatmul.mubr.bf16.gmra.mxu0 %v167
  %v332 = vpop.f32.mrf.mxu0
  %v333 = vadd.f32 %v104, %v332
  %v334 = vpop.f32.mrf.mxu0
  %v335 = vpop.f32.mrf.mxu0
  %v336 = vadd.f32 %v104, %v335
  %v337 = vpop.f32.mrf.mxu0
  %338 = vmatprep.mubr.bf16.mxu0 0
  %339 = vmatmul.mubr.bf16.gmra.mxu0 %v170
  %v340 = vpop.f32.mrf.mxu0
  %v341 = vadd.f32 %v104, %v340
  %v342 = vpop.f32.mrf.mxu0
  %v343 = vpop.f32.mrf.mxu0
  %v344 = vadd.f32 %v104, %v343
  %v345 = vpop.f32.mrf.mxu0
  %346 = vmatprep.mubr.bf16.mxu0 0
  %347 = vmatmul.mubr.bf16.gmra.mxu0 %v173
  %v348 = vpop.f32.mrf.mxu0
  %v349 = vadd.f32 %v104, %v348
  %v350 = vpop.f32.mrf.mxu0
  %v351 = vpop.f32.mrf.mxu0
  %v352 = vadd.f32 %v104, %v351
  %v353 = vpop.f32.mrf.mxu0
  %354 = vmatprep.mubr.bf16.mxu0 0
  %355 = vmatmul.mubr.bf16.gmra.mxu0 %v176
  %v356 = vpop.f32.mrf.mxu0
  %v357 = vadd.f32 %v104, %v356
  %v358 = vpop.f32.mrf.mxu0
  %v359 = vpop.f32.mrf.mxu0
  %v360 = vadd.f32 %v104, %v359
  %v361 = vpop.f32.mrf.mxu0
  %362 = vmatprep.mubr.bf16.mxu0 0
  %363 = vmatmul.mubr.bf16.gmra.mxu0 %v179
  %v364 = vpop.f32.mrf.mxu0
  %v365 = vadd.f32 %v104, %v364
  %v366 = vpop.f32.mrf.mxu0
  %v367 = vpop.f32.mrf.mxu0
  %v368 = vadd.f32 %v104, %v367
  %v369 = vpop.f32.mrf.mxu0
  %370 = vmatprep.mubr.bf16.mxu0 0
  %371 = vmatmul.mubr.bf16.gmra.mxu0 %v182
  %v372 = vpop.f32.mrf.mxu0
  %v373 = vadd.f32 %v104, %v372
  %v374 = vpop.f32.mrf.mxu0
  %v375 = vpop.f32.mrf.mxu0
  %v376 = vadd.f32 %v104, %v375
  %v377 = vpop.f32.mrf.mxu0
  %378 = vmatprep.mubr.bf16.mxu0 0
  %379 = vmatmul.mubr.bf16.gmra.mxu0 %v185
  %v380 = vpop.f32.mrf.mxu0
  %v381 = vadd.f32 %v104, %v380
  %v382 = vpop.f32.mrf.mxu0
  %v383 = vpop.f32.mrf.mxu0
  %v384 = vadd.f32 %v104, %v383
  %v385 = vpop.f32.mrf.mxu0
  %386 = vmatprep.mubr.bf16.mxu0 0
  %387 = vmatmul.mubr.bf16.gmra.mxu0 %v188
  %v388 = vpop.f32.mrf.mxu0
  %v389 = vadd.f32 %v104, %v388
  %v390 = vpop.f32.mrf.mxu0
  %v391 = vpop.f32.mrf.mxu0
  %v392 = vadd.f32 %v104, %v391
  %v393 = vpop.f32.mrf.mxu0
  %394 = vmatprep.mubr.bf16.mxu0 0
  %395 = vmatmul.mubr.bf16.gmra.mxu0 %v191
  %v396 = vpop.f32.mrf.mxu0
  %v397 = vadd.f32 %v104, %v396
  %v398 = vpop.f32.mrf.mxu0
  %v399 = vpop.f32.mrf.mxu0
  %v400 = vadd.f32 %v104, %v399
  %v401 = vpop.f32.mrf.mxu0
  %402 = vmatprep.mubr.bf16.mxu0 0
  %403 = vmatmul.mubr.bf16.gmra.mxu0 %v194
  %v404 = vpop.f32.mrf.mxu0
  %v405 = vadd.f32 %v104, %v404
  %v406 = vpop.f32.mrf.mxu0
  %v407 = vpop.f32.mrf.mxu0
  %v408 = vadd.f32 %v104, %v407
  %v409 = vpop.f32.mrf.mxu0
  %410 = vmatprep.mubr.bf16.mxu0 0
  %411 = vmatmul.mubr.bf16.gmra.mxu0 %v197
  %v412 = vpop.f32.mrf.mxu0
  %v413 = vadd.f32 %v104, %v412
  %v414 = vpop.f32.mrf.mxu0
  %v415 = vpop.f32.mrf.mxu0
  %v416 = vadd.f32 %v104, %v415
  %v417 = vpop.f32.mrf.mxu0
  %418 = vmatprep.mubr.bf16.mxu0 0
  %419 = vmatmul.mubr.bf16.gmra.mxu0 %v200
  %v420 = vpop.f32.mrf.mxu0
  %v421 = vadd.f32 %v104, %v420
  %v422 = vpop.f32.mrf.mxu0
  %v423 = vpop.f32.mrf.mxu0
  %v424 = vadd.f32 %v104, %v423
  %v425 = vpop.f32.mrf.mxu0
  %426 = vmatprep.mubr.bf16.mxu0 0
  %427 = vmatmul.mubr.bf16.gmra.mxu0 %v203
  %v428 = vpop.f32.mrf.mxu0
  %v429 = vadd.f32 %v104, %v428
  %v430 = vpop.f32.mrf.mxu0
  %v431 = vpop.f32.mrf.mxu0
  %v432 = vadd.f32 %v104, %v431
  %v433 = vpop.f32.mrf.mxu0
  %434 = vmatprep.mubr.bf16.mxu0 0
  %435 = vmatmul.mubr.bf16.gmra.mxu0 %v206
  %v436 = vpop.f32.mrf.mxu0
  %v437 = vadd.f32 %v104, %v436
  %v438 = vpop.f32.mrf.mxu0
  %v439 = vpop.f32.mrf.mxu0
  %v440 = vadd.f32 %v104, %v439
  %v441 = vpop.f32.mrf.mxu0
  %442 = vmatprep.mubr.bf16.mxu0 0
  %443 = vmatmul.mubr.bf16.gmra.mxu0 %v209
  %v444 = vpop.f32.mrf.mxu0
  %v445 = vadd.f32 %v104, %v444
  %v446 = vpop.f32.mrf.mxu0
  %v447 = vpop.f32.mrf.mxu0
  %v448 = vpop.f32.mrf.mxu0
  %449 = vdwg.mxu0
  %v450 = vmax.f32 %v253, 0.0
  %v451 = vmax.f32 %v256, 0.0
  %v452 = vmax.f32 %v261, 0.0
  %v453 = vmax.f32 %v264, 0.0
  %v454 = vmax.f32 %v269, 0.0
  %v455 = vmax.f32 %v272, 0.0
  %v456 = vmax.f32 %v277, 0.0
  %v457 = vmax.f32 %v280, 0.0
  %v458 = vmax.f32 %v285, 0.0
  %v459 = vmax.f32 %v288, 0.0
  %v460 = vmax.f32 %v293, 0.0
  %v461 = vmax.f32 %v296, 0.0
  %v462 = vmax.f32 %v301, 0.0
  %v463 = vmax.f32 %v304, 0.0
  %v464 = vmax.f32 %v309, 0.0
  %v465 = vmax.f32 %v312, 0.0
  %v466 = vmax.f32 %v317, 0.0
  %v467 = vmax.f32 %v320, 0.0
  %v468 = vmax.f32 %v325, 0.0
  %v469 = vmax.f32 %v328, 0.0
  %v470 = vmax.f32 %v333, 0.0
  %v471 = vmax.f32 %v336, 0.0
  %v472 = vmax.f32 %v341, 0.0
  %v473 = vmax.f32 %v344, 0.0
  %v474 = vmax.f32 %v349, 0.0
  %v475 = vmax.f32 %v352, 0.0
  %v476 = vmax.f32 %v357, 0.0
  %v477 = vmax.f32 %v360, 0.0
  %v478 = vmax.f32 %v365, 0.0
  %v479 = vmax.f32 %v368, 0.0
  %v480 = vmax.f32 %v373, 0.0
  %v481 = vmax.f32 %v376, 0.0
  %v482 = vmax.f32 %v381, 0.0
  %v483 = vmax.f32 %v384, 0.0
  %v484 = vmax.f32 %v389, 0.0
  %v485 = vmax.f32 %v392, 0.0
  %v486 = vmax.f32 %v397, 0.0
  %v487 = vmax.f32 %v400, 0.0
  %v488 = vmax.f32 %v405, 0.0
  %v489 = vmax.f32 %v408, 0.0
  %v490 = vmax.f32 %v413, 0.0
  %v491 = vmax.f32 %v416, 0.0
  %v492 = vmax.f32 %v421, 0.0
  %v493 = vmax.f32 %v424, 0.0
  %v494 = vmax.f32 %v429, 0.0
  %v495 = vmax.f32 %v432, 0.0
  %v496 = vmax.f32 %v437, 0.0
  %v497 = vmax.f32 %v440, 0.0
  %v498 = vmax.f32 %v445, 0.0
  %vm499 = vcmask 130048
  %500 = vst.msk [vmem:[%s3] sm:$0xff] %vm499, %v450
  %501 = vst.msk [vmem:[%s3 + $0x8] sm:$0xff] %vm499, %v451
  %502 = vst.msk [vmem:[%s3 + $0x10] sm:$0xff] %vm499, %v452
  %503 = vst.msk [vmem:[%s3 + $0x18] sm:$0xff] %vm499, %v453
  %504 = vst.msk [vmem:[%s3 + $0x20] sm:$0xff] %vm499, %v454
  %505 = vst.msk [vmem:[%s3 + $0x28] sm:$0xff] %vm499, %v455
  %506 = vst.msk [vmem:[%s3 + $0x30] sm:$0xff] %vm499, %v456
  %507 = vst.msk [vmem:[%s3 + $0x38] sm:$0xff] %vm499, %v457
  %508 = vst.msk [vmem:[%s3 + $0x40] sm:$0xff] %vm499, %v458
  %509 = vst.msk [vmem:[%s3 + $0x48] sm:$0xff] %vm499, %v459
  %510 = vst.msk [vmem:[%s3 + $0x50] sm:$0xff] %vm499, %v460
  %511 = vst.msk [vmem:[%s3 + $0x58] sm:$0xff] %vm499, %v461
  %512 = vst.msk [vmem:[%s3 + $0x60] sm:$0xff] %vm499, %v462
  %513 = vst.msk [vmem:[%s3 + $0x68] sm:$0xff] %vm499, %v463
  %514 = vst.msk [vmem:[%s3 + $0x70] sm:$0xff] %vm499, %v464
  %515 = vst.msk [vmem:[%s3 + $0x78] sm:$0xff] %vm499, %v465
  %516 = vst.msk [vmem:[%s3 + $0x80] sm:$0xff] %vm499, %v466
  %517 = vst.msk [vmem:[%s3 + $0x88] sm:$0xff] %vm499, %v467
  %518 = vst.msk [vmem:[%s3 + $0x90] sm:$0xff] %vm499, %v468
  %519 = vst.msk [vmem:[%s3 + $0x98] sm:$0xff] %vm499, %v469
  %520 = vst.msk [vmem:[%s3 + $0xa0] sm:$0xff] %vm499, %v470
  %521 = vst.msk [vmem:[%s3 + $0xa8] sm:$0xff] %vm499, %v471
  %522 = vst.msk [vmem:[%s3 + $0xb0] sm:$0xff] %vm499, %v472
  %523 = vst.msk [vmem:[%s3 + $0xb8] sm:$0xff] %vm499, %v473
  %524 = vst.msk [vmem:[%s3 + $0xc0] sm:$0xff] %vm499, %v474
  %525 = vst.msk [vmem:[%s3 + $0xc8] sm:$0xff] %vm499, %v475
  %526 = vst.msk [vmem:[%s3 + $0xd0] sm:$0xff] %vm499, %v476
  %527 = vst.msk [vmem:[%s3 + $0xd8] sm:$0xff] %vm499, %v477
  %528 = vst.msk [vmem:[%s3 + $0xe0] sm:$0xff] %vm499, %v478
  %529 = vst.msk [vmem:[%s3 + $0xe8] sm:$0xff] %vm499, %v479
  %530 = vst.msk [vmem:[%s3 + $0xf0] sm:$0xff] %vm499, %v480
  %531 = vst.msk [vmem:[%s3 + $0xf8] sm:$0xff] %vm499, %v481
  %532 = vst.msk [vmem:[%s3 + $0x100] sm:$0xff] %vm499, %v482
  %533 = vst.msk [vmem:[%s3 + $0x108] sm:$0xff] %vm499, %v483
  %534 = vst.msk [vmem:[%s3 + $0x110] sm:$0xff] %vm499, %v484
  %535 = vst.msk [vmem:[%s3 + $0x118] sm:$0xff] %vm499, %v485
  %536 = vst.msk [vmem:[%s3 + $0x120] sm:$0xff] %vm499, %v486
  %537 = vst.msk [vmem:[%s3 + $0x128] sm:$0xff] %vm499, %v487
  %538 = vst.msk [vmem:[%s3 + $0x130] sm:$0xff] %vm499, %v488
  %539 = vst.msk [vmem:[%s3 + $0x138] sm:$0xff] %vm499, %v489
  %540 = vst.msk [vmem:[%s3 + $0x140] sm:$0xff] %vm499, %v490
  %541 = vst.msk [vmem:[%s3 + $0x148] sm:$0xff] %vm499, %v491
  %542 = vst.msk [vmem:[%s3 + $0x150] sm:$0xff] %vm499, %v492
  %543 = vst.msk [vmem:[%s3 + $0x158] sm:$0xff] %vm499, %v493
  %544 = vst.msk [vmem:[%s3 + $0x160] sm:$0xff] %vm499, %v494
  %545 = vst.msk [vmem:[%s3 + $0x168] sm:$0xff] %vm499, %v495
  %546 = vst.msk [vmem:[%s3 + $0x170] sm:$0xff] %vm499, %v496
  %547 = vst.msk [vmem:[%s3 + $0x178] sm:$0xff] %vm499, %v497
  %548 = vst.msk [vmem:[%s3 + $0x180] sm:$0xff] %vm499, %v498
  // Predicated region
  $region14: #{dqn_forward.2} parent=0 // pred_check
    _
  $region15: #{dqn_forward.2} parent=0 // pred_check_branch
    %550 = sbr.rel (0) target = $region17
  $region16: #{dqn_forward.2} parent=0 // pred_region
    _
  $region17: #{dqn_forward.2} parent=0 // pred_fallthru
    _
  // Predicated region
  $region18: #{dqn_forward.2} parent=0 // pred_check
    _
  $region19: #{dqn_forward.2} parent=0 // pred_check_branch
    %552 = sbr.rel (0) target = $region21
  $region20: #{dqn_forward.2} parent=0 // pred_region
    _
  $region21: #{dqn_forward.2} parent=0 // pred_fallthru
    _

// kernel: dqn_forward.3
$region0: #{dqn_forward.3}
  #allocation0 [shape = 'u32[]', space=smem, size = 0x4, offset = 0x4, fixed_abs, tag = 'smem constant byte address 0x4 - core index']
  #allocation1 [shape = 'u32[144,128]{1,0:T(1,128)}', space=vmem, size = 0x12000, scoped, tag = 'internal scratch']
  %s0 = inlined_call_operand.vmem [shape: f32[200,400], index: 0, kind: input, shape index: {}]
  %s1 = inlined_call_operand.vmem [shape: bf16[400,32], index: 1, kind: input, shape index: {}]
  %s2 = inlined_call_operand.vmem [shape: f32[1,32], index: 2, kind: input, shape index: {}]
  %s3 = inlined_call_operand.vmem [shape: bf16[800,32], index: 3, kind: input, shape index: {}]
  %s4 = inlined_call_operand.vmem [shape: f32[1,32], index: 4, kind: input, shape index: {}]
  %s5 = inlined_call_operand.vmem [shape: bf16[32,4], index: 5, kind: input, shape index: {}]
  %s6 = inlined_call_operand.vmem [shape: f32[1,4], index: 6, kind: input, shape index: {}]
  %s7 = inlined_call_operand.vmem [shape: f32[8,4], index: 7, kind: output, shape index: {}]
  %s8 = sld [smem:[#allocation0]]
  $region38: #{dqn_forward.3} parent=0
    _
  %s10 = ssub.s32 1, %s8
  %s11 = scalar_select 0, %s10, %s8
  // Predicated region
  $region2: #{dqn_forward.3} parent=0 // pred_check
    _
  $region3: #{dqn_forward.3} parent=0 // pred_check_branch
    %13 = sbr.rel (0) target = $region5
  $region4: #{dqn_forward.3} parent=0 // pred_region
    _
  $region5: #{dqn_forward.3} parent=0 // pred_fallthru
    _
  // Predicated region
  $region6: #{dqn_forward.3} parent=0 // pred_check
    _
  $region7: #{dqn_forward.3} parent=0 // pred_check_branch
    %15 = sbr.rel (0) target = $region9
  $region8: #{dqn_forward.3} parent=0 // pred_region
    _
  $region9: #{dqn_forward.3} parent=0 // pred_fallthru
    _
  // Predicated region
  $region10: #{dqn_forward.3} parent=0 // pred_check
    _
  $region11: #{dqn_forward.3} parent=0 // pred_check_branch
    %17 = sbr.rel (0) target = $region13
  $region12: #{dqn_forward.3} parent=0 // pred_region
    _
  $region13: #{dqn_forward.3} parent=0 // pred_fallthru
    _
  // Predicated region
  $region14: #{dqn_forward.3} parent=0 // pred_check
    _
  $region15: #{dqn_forward.3} parent=0 // pred_check_branch
    %19 = sbr.rel (0) target = $region17
  $region16: #{dqn_forward.3} parent=0 // pred_region
    _
  $region17: #{dqn_forward.3} parent=0 // pred_fallthru
    _
  // Predicated region
  $region18: #{dqn_forward.3} parent=0 // pred_check
    _
  $region19: #{dqn_forward.3} parent=0 // pred_check_branch
    %21 = sbr.rel (0) target = $region21
  $region20: #{dqn_forward.3} parent=0 // pred_region
    _
  $region21: #{dqn_forward.3} parent=0 // pred_fallthru
    _
  // Predicated region
  $region22: #{dqn_forward.3} parent=0 // pred_check
    _
  $region23: #{dqn_forward.3} parent=0 // pred_check_branch
    %23 = sbr.rel (0) target = $region25
  $region24: #{dqn_forward.3} parent=0 // pred_region
    _
  $region25: #{dqn_forward.3} parent=0 // pred_fallthru
    _
  // Predicated region
  $region26: #{dqn_forward.3} parent=0 // pred_check
    _
  $region27: #{dqn_forward.3} parent=0 // pred_check_branch
    %25 = sbr.rel (0) target = $region29
  $region28: #{dqn_forward.3} parent=0 // pred_region
    _
  $region29: #{dqn_forward.3} parent=0 // pred_fallthru
    _
  %v27 = vld [vmem:[%s0] sm:$0xff]
  %v28 = vld [vmem:[%s0 + $0x8] sm:$0xff]
  %v29 = vld [vmem:[%s0 + $0x10] sm:$0xff]
  %v30 = vld [vmem:[%s0 + $0x18] sm:$0xff]
  %v31 = vld [vmem:[%s0 + $0x20] sm:$0xff]
  %v32 = vld [vmem:[%s0 + $0x28] sm:$0xff]
  %v33 = vld [vmem:[%s0 + $0x30] sm:$0xff]
  %v34 = vld [vmem:[%s0 + $0x38] sm:$0xff]
  %v35 = vld [vmem:[%s0 + $0x40] sm:$0xff]
  %v36 = vld [vmem:[%s0 + $0x48] sm:$0xff]
  %v37 = vld [vmem:[%s0 + $0x50] sm:$0xff]
  %v38 = vld [vmem:[%s0 + $0x58] sm:$0xff]
  %v39 = vld [vmem:[%s0 + $0x60] sm:$0xff]
  %v40 = vld [vmem:[%s0 + $0x68] sm:$0xff]
  %v41 = vld [vmem:[%s0 + $0x70] sm:$0xff]
  %v42 = vld [vmem:[%s0 + $0x78] sm:$0xff]
  %v43 = vld [vmem:[%s0 + $0x80] sm:$0xff]
  %v44 = vld [vmem:[%s0 + $0x88] sm:$0xff]
  %v45 = vld [vmem:[%s0 + $0x90] sm:$0xff]
  %v46 = vld [vmem:[%s0 + $0x98] sm:$0xff]
  %v47 = vld [vmem:[%s0 + $0xa0] sm:$0xff]
  %v48 = vld [vmem:[%s0 + $0xa8] sm:$0xff]
  %v49 = vld [vmem:[%s0 + $0xb0] sm:$0xff]
  %v50 = vld [vmem:[%s0 + $0xb8] sm:$0xff]
  %v51 = vld [vmem:[%s0 + $0xc0] sm:$0xff]
  %v52 = vld [vmem:[%s0 + $0xc8] sm:$0xff]
  %v53 = vld [vmem:[%s0 + $0xd0] sm:$0xff]
  %v54 = vld [vmem:[%s0 + $0xd8] sm:$0xff]
  %v55 = vld [vmem:[%s0 + $0xe0] sm:$0xff]
  %v56 = vld [vmem:[%s0 + $0xe8] sm:$0xff]
  %v57 = vld [vmem:[%s0 + $0xf0] sm:$0xff]
  %v58 = vld [vmem:[%s0 + $0xf8] sm:$0xff]
  %v59 = vld [vmem:[%s0 + $0x100] sm:$0xff]
  %v60 = vld [vmem:[%s0 + $0x108] sm:$0xff]
  %v61 = vld [vmem:[%s0 + $0x110] sm:$0xff]
  %v62 = vld [vmem:[%s0 + $0x118] sm:$0xff]
  %v63 = vld [vmem:[%s0 + $0x120] sm:$0xff]
  %v64 = vld [vmem:[%s0 + $0x128] sm:$0xff]
  %v65 = vld [vmem:[%s0 + $0x130] sm:$0xff]
  %v66 = vld [vmem:[%s0 + $0x138] sm:$0xff]
  %v67 = vld [vmem:[%s0 + $0x140] sm:$0xff]
  %v68 = vld [vmem:[%s0 + $0x148] sm:$0xff]
  %v69 = vld [vmem:[%s0 + $0x150] sm:$0xff]
  %v70 = vld [vmem:[%s0 + $0x158] sm:$0xff]
  %v71 = vld [vmem:[%s0 + $0x160] sm:$0xff]
  %v72 = vld [vmem:[%s0 + $0x168] sm:$0xff]
  %v73 = vld [vmem:[%s0 + $0x170] sm:$0xff]
  %v74 = vld [vmem:[%s0 + $0x178] sm:$0xff]
  %v75 = vld [vmem:[%s0 + $0x180] sm:$0xff]
  %v76 = vld [vmem:[%s0 + $0x188] sm:$0xff]
  %v77 = vld [vmem:[%s0 + $0x190] sm:$0xff]
  %v78 = vld [vmem:[%s0 + $0x198] sm:$0xff]
  %v79 = vld [vmem:[%s0 + $0x1a0] sm:$0xff]
  %v80 = vld [vmem:[%s0 + $0x1a8] sm:$0xff]
  %v81 = vld [vmem:[%s0 + $0x1b0] sm:$0xff]
  %v82 = vld [vmem:[%s0 + $0x1b8] sm:$0xff]
  %v83 = vld [vmem:[%s0 + $0x1c0] sm:$0xff]
  %v84 = vld [vmem:[%s0 + $0x1c8] sm:$0xff]
  %v85 = vld [vmem:[%s0 + $0x1d0] sm:$0xff]
  %v86 = vld [vmem:[%s0 + $0x1d8] sm:$0xff]
  %v87 = vld [vmem:[%s0 + $0x1e0] sm:$0xff]
  %v88 = vld [vmem:[%s0 + $0x1e8] sm:$0xff]
  %v89 = vld [vmem:[%s0 + $0x1f0] sm:$0xff]
  %v90 = vld [vmem:[%s0 + $0x1f8] sm:$0xff]
  %v91 = vld [vmem:[%s0 + $0x200] sm:$0xff]
  %v92 = vld [vmem:[%s0 + $0x208] sm:$0xff]
  %v93 = vld [vmem:[%s0 + $0x210] sm:$0xff]
  %v94 = vld [vmem:[%s0 + $0x218] sm:$0xff]
  %v95 = vld [vmem:[%s0 + $0x220] sm:$0xff]
  %v96 = vld [vmem:[%s0 + $0x228] sm:$0xff]
  %v97 = vld [vmem:[%s0 + $0x230] sm:$0xff]
  %v98 = vld [vmem:[%s0 + $0x238] sm:$0xff]
  %v99 = vld [vmem:[%s0 + $0x240] sm:$0xff]
  %v100 = vld [vmem:[%s0 + $0x248] sm:$0xff]
  %v101 = vld [vmem:[%s0 + $0x250] sm:$0xff]
  %v102 = vld [vmem:[%s0 + $0x258] sm:$0xff]
  %v103 = vld [vmem:[%s0 + $0x260] sm:$0xff]
  %v104 = vld [vmem:[%s0 + $0x268] sm:$0xff]
  %v105 = vld [vmem:[%s0 + $0x270] sm:$0xff]
  %v106 = vld [vmem:[%s0 + $0x278] sm:$0xff]
  %v107 = vld [vmem:[%s0 + $0x280] sm:$0xff]
  %v108 = vld [vmem:[%s0 + $0x288] sm:$0xff]
  %v109 = vld [vmem:[%s0 + $0x290] sm:$0xff]
  %v110 = vld [vmem:[%s0 + $0x298] sm:$0xff]
  %v111 = vld [vmem:[%s0 + $0x2a0] sm:$0xff]
  %v112 = vld [vmem:[%s0 + $0x2a8] sm:$0xff]
  %v113 = vld [vmem:[%s0 + $0x2b0] sm:$0xff]
  %v114 = vld [vmem:[%s0 + $0x2b8] sm:$0xff]
  %v115 = vld [vmem:[%s0 + $0x2c0] sm:$0xff]
  %v116 = vld [vmem:[%s0 + $0x2c8] sm:$0xff]
  %v117 = vld [vmem:[%s0 + $0x2d0] sm:$0xff]
  %v118 = vld [vmem:[%s0 + $0x2d8] sm:$0xff]
  %v119 = vld [vmem:[%s0 + $0x2e0] sm:$0xff]
  %v120 = vld [vmem:[%s0 + $0x2e8] sm:$0xff]
  %v121 = vld [vmem:[%s0 + $0x2f0] sm:$0xff]
  %v122 = vld [vmem:[%s0 + $0x2f8] sm:$0xff]
  %v123 = vld [vmem:[%s0 + $0x300] sm:$0xff]
  %v124 = vld [vmem:[%s0 + $0x308] sm:$0xff]
  %v125 = vld [vmem:[%s0 + $0x310] sm:$0xff]
  %v126 = vld [vmem:[%s0 + $0x318] sm:$0xff]
  %v127 = vpack.c.bf16 %v31, %v27
  %v128 = vpack.c.bf16 %v32, %v28
  %v129 = vpack.c.bf16 %v33, %v29
  %v130 = vpack.c.bf16 %v34, %v30
  %v131 = vpack.c.bf16 %v39, %v35
  %v132 = vpack.c.bf16 %v40, %v36
  %v133 = vpack.c.bf16 %v41, %v37
  %v134 = vpack.c.bf16 %v42, %v38
  %v135 = vpack.c.bf16 %v47, %v43
  %v136 = vpack.c.bf16 %v48, %v44
  %v137 = vpack.c.bf16 %v49, %v45
  %v138 = vpack.c.bf16 %v50, %v46
  %v139 = vpack.c.bf16 %v55, %v51
  %v140 = vpack.c.bf16 %v56, %v52
  %v141 = vpack.c.bf16 %v57, %v53
  %v142 = vpack.c.bf16 %v58, %v54
  %v143 = vpack.c.bf16 %v63, %v59
  %v144 = vpack.c.bf16 %v64, %v60
  %v145 = vpack.c.bf16 %v65, %v61
  %v146 = vpack.c.bf16 %v66, %v62
  %v147 = vpack.c.bf16 %v71, %v67
  %v148 = vpack.c.bf16 %v72, %v68
  %v149 = vpack.c.bf16 %v73, %v69
  %v150 = vpack.c.bf16 %v74, %v70
  %v151 = vpack.c.bf16 %v79, %v75
  %v152 = vpack.c.bf16 %v80, %v76
  %v153 = vpack.c.bf16 %v81, %v77
  %v154 = vpack.c.bf16 %v82, %v78
  %v155 = vpack.c.bf16 %v87, %v83
  %v156 = vpack.c.bf16 %v88, %v84
  %v157 = vpack.c.bf16 %v89, %v85
  %v158 = vpack.c.bf16 %v90, %v86
  %v159 = vpack.c.bf16 %v95, %v91
  %v160 = vpack.c.bf16 %v96, %v92
  %v161 = vpack.c.bf16 %v97, %v93
  %v162 = vpack.c.bf16 %v98, %v94
  %v163 = vpack.c.bf16 %v103, %v99
  %v164 = vpack.c.bf16 %v104, %v100
  %v165 = vpack.c.bf16 %v105, %v101
  %v166 = vpack.c.bf16 %v106, %v102
  %v167 = vpack.c.bf16 %v111, %v107
  %v168 = vpack.c.bf16 %v112, %v108
  %v169 = vpack.c.bf16 %v113, %v109
  %v170 = vpack.c.bf16 %v114, %v110
  %v171 = vpack.c.bf16 %v119, %v115
  %v172 = vpack.c.bf16 %v120, %v116
  %v173 = vpack.c.bf16 %v121, %v117
  %v174 = vpack.c.bf16 %v122, %v118
  %v175 = vpack.c.bf16 %v123, %v123
  %v176 = vpack.c.bf16 %v124, %v124
  %v177 = vpack.c.bf16 %v125, %v125
  %v178 = vpack.c.bf16 %v126, %v126
  %v179 = vld [vmem:[%s1] sm:$0xf]
  %v180 = vld [vmem:[%s1 + $0x4] sm:$0xf]
  %v181 = vld [vmem:[%s1 + $0x8] sm:$0xf]
  %v182 = vld [vmem:[%s1 + $0xc] sm:$0xf]
  %v183 = vld [vmem:[%s1 + $0x10] sm:$0xf]
  %v184 = vld [vmem:[%s1 + $0x14] sm:$0xf]
  %v185 = vld [vmem:[%s1 + $0x18] sm:$0xf]
  %v186 = vld [vmem:[%s1 + $0x1c] sm:$0xf]
  %v187 = vld [vmem:[%s1 + $0x20] sm:$0xf]
  %v188 = vld [vmem:[%s1 + $0x24] sm:$0xf]
  %v189 = vld [vmem:[%s1 + $0x28] sm:$0xf]
  %v190 = vld [vmem:[%s1 + $0x2c] sm:$0xf]
  %v191 = vld [vmem:[%s1 + $0x30] sm:$0xf]
  %v192 = vld [vmem:[%s1 + $0x34] sm:$0xf]
  %v193 = vld [vmem:[%s1 + $0x38] sm:$0xf]
  %v194 = vld [vmem:[%s1 + $0x3c] sm:$0xf]
  %v195 = vld [vmem:[%s1 + $0x40] sm:$0xf]
  %v196 = vld [vmem:[%s1 + $0x44] sm:$0xf]
  %v197 = vld [vmem:[%s1 + $0x48] sm:$0xf]
  %v198 = vld [vmem:[%s1 + $0x4c] sm:$0xf]
  %v199 = vld [vmem:[%s1 + $0x50] sm:$0xf]
  %v200 = vld [vmem:[%s1 + $0x54] sm:$0xf]
  %v201 = vld [vmem:[%s1 + $0x58] sm:$0xf]
  %v202 = vld [vmem:[%s1 + $0x5c] sm:$0xf]
  %v203 = vld [vmem:[%s1 + $0x60] sm:$0xf]
  %v204 = vld [vmem:[%s1 + $0x64] sm:$0xf]
  %v205 = vld [vmem:[%s1 + $0x68] sm:$0xf]
  %v206 = vld [vmem:[%s1 + $0x6c] sm:$0xf]
  %v207 = vld [vmem:[%s1 + $0x70] sm:$0xf]
  %v208 = vld [vmem:[%s1 + $0x74] sm:$0xf]
  %v209 = vld [vmem:[%s1 + $0x78] sm:$0xf]
  %v210 = vld [vmem:[%s1 + $0x7c] sm:$0xf]
  %v211 = vld [vmem:[%s1 + $0x80] sm:$0xf]
  %v212 = vld [vmem:[%s1 + $0x84] sm:$0xf]
  %v213 = vld [vmem:[%s1 + $0x88] sm:$0xf]
  %v214 = vld [vmem:[%s1 + $0x8c] sm:$0xf]
  %v215 = vld [vmem:[%s1 + $0x90] sm:$0xf]
  %v216 = vld [vmem:[%s1 + $0x94] sm:$0xf]
  %v217 = vld [vmem:[%s1 + $0x98] sm:$0xf]
  %v218 = vld [vmem:[%s1 + $0x9c] sm:$0xf]
  %v219 = vld [vmem:[%s1 + $0xa0] sm:$0xf]
  %v220 = vld [vmem:[%s1 + $0xa4] sm:$0xf]
  %v221 = vld [vmem:[%s1 + $0xa8] sm:$0xf]
  %v222 = vld [vmem:[%s1 + $0xac] sm:$0xf]
  %v223 = vld [vmem:[%s1 + $0xb0] sm:$0xf]
  %v224 = vld [vmem:[%s1 + $0xb4] sm:$0xf]
  %v225 = vld [vmem:[%s1 + $0xb8] sm:$0xf]
  %v226 = vld [vmem:[%s1 + $0xbc] sm:$0xf]
  %v227 = vld [vmem:[%s1 + $0xc0] sm:$0xf]
  %v228 = vld [vmem:[%s1 + $0xc4] sm:$0xf]
  %v229 = vld [vmem:[%s2] sm:$0x1]
  %v231 = vlaneseq
  %v232 = vshrl.u32 %v231, 7
  %v233 = vsub.s32 0, %v232
  %v234 = vrot.slane %v229, %v233
  %v286 = vunpack.c.l.b16 %v179
  %v287 = vunpack.c.l.b16 %v180
  %v288 = vunpack.c.l.b16 %v181
  %v289 = vunpack.c.l.b16 %v182
  %v290 = vunpack.c.l.b16 %v183
  %v291 = vunpack.c.l.b16 %v184
  %v292 = vunpack.c.l.b16 %v185
  %v293 = vunpack.c.l.b16 %v186
  %v294 = vunpack.c.l.b16 %v187
  %v295 = vunpack.c.l.b16 %v188
  %v296 = vunpack.c.l.b16 %v189
  %v297 = vunpack.c.l.b16 %v190
  %v298 = vunpack.c.l.b16 %v191
  %v299 = vunpack.c.l.b16 %v192
  %v300 = vunpack.c.l.b16 %v193
  %v301 = vunpack.c.l.b16 %v194
  %v302 = vunpack.c.l.b16 %v195
  %v303 = vunpack.c.l.b16 %v196
  %v304 = vunpack.c.l.b16 %v197
  %v305 = vunpack.c.l.b16 %v198
  %v306 = vunpack.c.l.b16 %v199
  %v307 = vunpack.c.l.b16 %v200
  %v308 = vunpack.c.l.b16 %v201
  %v309 = vunpack.c.l.b16 %v202
  %v310 = vunpack.c.l.b16 %v203
  %v311 = vunpack.c.l.b16 %v204
  %v312 = vunpack.c.l.b16 %v205
  %v313 = vunpack.c.l.b16 %v206
  %v314 = vunpack.c.l.b16 %v207
  %v315 = vunpack.c.l.b16 %v208
  %v316 = vunpack.c.l.b16 %v209
  %v317 = vunpack.c.l.b16 %v210
  %v318 = vunpack.c.l.b16 %v211
  %v319 = vunpack.c.l.b16 %v212
  %v320 = vunpack.c.l.b16 %v213
  %v321 = vunpack.c.l.b16 %v214
  %v322 = vunpack.c.l.b16 %v215
  %v323 = vunpack.c.l.b16 %v216
  %v324 = vunpack.c.l.b16 %v217
  %v325 = vunpack.c.l.b16 %v218
  %v326 = vunpack.c.l.b16 %v219
  %v327 = vunpack.c.l.b16 %v220
  %v328 = vunpack.c.l.b16 %v221
  %v329 = vunpack.c.l.b16 %v222
  %v330 = vunpack.c.l.b16 %v223
  %v331 = vunpack.c.l.b16 %v224
  %v332 = vunpack.c.l.b16 %v225
  %v333 = vunpack.c.l.b16 %v226
  %v334 = vunpack.c.l.b16 %v227
  %v335 = vunpack.c.l.b16 %v228
  %v336 = vpack.c.b16 %v287, %v286
  %v337 = vpack.c.b16 %v289, %v288
  %v338 = vpack.c.b16 %v291, %v290
  %v339 = vpack.c.b16 %v293, %v292
  %v340 = vpack.c.b16 %v295, %v294
  %v341 = vpack.c.b16 %v297, %v296
  %v342 = vpack.c.b16 %v299, %v298
  %v343 = vpack.c.b16 %v301, %v300
  %v344 = vpack.c.b16 %v303, %v302
  %v345 = vpack.c.b16 %v305, %v304
  %v346 = vpack.c.b16 %v307, %v306
  %v347 = vpack.c.b16 %v309, %v308
  %v348 = vpack.c.b16 %v311, %v310
  %v349 = vpack.c.b16 %v313, %v312
  %v350 = vpack.c.b16 %v315, %v314
  %v351 = vpack.c.b16 %v317, %v316
  %v352 = vpack.c.b16 %v319, %v318
  %v353 = vpack.c.b16 %v321, %v320
  %v354 = vpack.c.b16 %v323, %v322
  %v355 = vpack.c.b16 %v325, %v324
  %v356 = vpack.c.b16 %v327, %v326
  %v357 = vpack.c.b16 %v329, %v328
  %v358 = vpack.c.b16 %v331, %v330
  %v359 = vpack.c.b16 %v333, %v332
  %v360 = vpack.c.b16 %v335, %v334
  %vm386 = vcmask 130048
  %v388 = vsel %vm386, %v130, 0
  %v391 = vsel %vm386, %v134, 0
  %v394 = vsel %vm386, %v138, 0
  %v397 = vsel %vm386, %v142, 0
  %v400 = vsel %vm386, %v146, 0
  %v403 = vsel %vm386, %v150, 0
  %v406 = vsel %vm386, %v154, 0
  %v409 = vsel %vm386, %v158, 0
  %v412 = vsel %vm386, %v162, 0
  %v415 = vsel %vm386, %v166, 0
  %v418 = vsel %vm386, %v170, 0
  %v421 = vsel %vm386, %v174, 0
  %v424 = vsel %vm386, %v178, 0
  %426 = vmatprep.subr.bf16.mxu0 0
  %427 = vmatpush1.bf16.msra.mxu0 %v343
  %428 = vmatprep.subr.bf16.mxu0 0
  %429 = vmatpush1.bf16.msra.mxu0 %v342
  %430 = vmatprep.subr.bf16.mxu0 0
  %431 = vmatpush1.bf16.msra.mxu0 %v341
  %432 = vmatprep.subr.bf16.mxu0 0
  %433 = vmatpush1.bf16.msra.mxu0 %v340
  %434 = vmatprep.subr.bf16.mxu0 0
  %435 = vmatpush1.bf16.msra.mxu0 %v339
  %436 = vmatprep.subr.bf16.mxu0 0
  %437 = vmatpush1.bf16.msra.mxu0 %v338
  %438 = vmatprep.subr.bf16.mxu0 0
  %439 = vmatpush1.bf16.msra.mxu0 %v337
  %440 = vmatprep.subr.bf16.mxu0 0
  %441 = vmatpush1.bf16.msra.mxu0 %v336
  %442 = vmatprep.subr.bf16.mxu0 0
  %443 = vmatpush2.bf16.msra.mxu0 %v351
  %444 = vmatprep.subr.bf16.mxu0 0
  %445 = vmatpush2.bf16.msra.mxu0 %v350
  %446 = vmatprep.subr.bf16.mxu0 0
  %447 = vmatpush2.bf16.msra.mxu0 %v349
  %448 = vmatprep.subr.bf16.mxu0 0
  %449 = vmatpush2.bf16.msra.mxu0 %v348
  %450 = vmatprep.subr.bf16.mxu0 0
  %451 = vmatpush2.bf16.msra.mxu0 %v347
  %452 = vmatprep.subr.bf16.mxu0 0
  %453 = vmatpush2.bf16.msra.mxu0 %v346
  %454 = vmatprep.subr.bf16.mxu0 0
  %455 = vmatpush2.bf16.msra.mxu0 %v345
  %456 = vmatprep.subr.bf16.mxu0 0
  %457 = vmatpush2.bf16.msra.mxu0 %v344
  %458 = vmatprep.mubr.bf16.mxu0 %v128
  %459 = vmatmul.mubr.bf16.gmra.mxu0 %v127
  %v460 = vpop.f32.mrf.mxu0
  %v461 = vadd.f32 %v234, %v460
  %v462 = vpop.f32.mrf.mxu0
  %v463 = vpop.f32.mrf.mxu0
  %v464 = vadd.f32 %v234, %v463
  %v465 = vpop.f32.mrf.mxu0
  %466 = vmatprep.mubr.bf16.mxu0 %v132
  %467 = vmatmul.mubr.bf16.gmra.mxu0 %v131
  %v468 = vpop.f32.mrf.mxu0
  %v469 = vadd.f32 %v234, %v468
  %v470 = vpop.f32.mrf.mxu0
  %v471 = vpop.f32.mrf.mxu0
  %v472 = vadd.f32 %v234, %v471
  %v473 = vpop.f32.mrf.mxu0
  %474 = vmatprep.mubr.bf16.mxu0 %v136
  %475 = vmatmul.mubr.bf16.gmra.mxu0 %v135
  %v476 = vpop.f32.mrf.mxu0
  %v477 = vadd.f32 %v234, %v476
  %v478 = vpop.f32.mrf.mxu0
  %v479 = vpop.f32.mrf.mxu0
  %v480 = vadd.f32 %v234, %v479
  %v481 = vpop.f32.mrf.mxu0
  %482 = vmatprep.mubr.bf16.mxu0 %v140
  %483 = vmatmul.mubr.bf16.gmra.mxu0 %v139
  %v484 = vpop.f32.mrf.mxu0
  %v485 = vadd.f32 %v234, %v484
  %v486 = vpop.f32.mrf.mxu0
  %v487 = vpop.f32.mrf.mxu0
  %v488 = vadd.f32 %v234, %v487
  %v489 = vpop.f32.mrf.mxu0
  %490 = vmatprep.mubr.bf16.mxu0 %v144
  %491 = vmatmul.mubr.bf16.gmra.mxu0 %v143
  %v492 = vpop.f32.mrf.mxu0
  %v493 = vadd.f32 %v234, %v492
  %v494 = vpop.f32.mrf.mxu0
  %v495 = vpop.f32.mrf.mxu0
  %v496 = vadd.f32 %v234, %v495
  %v497 = vpop.f32.mrf.mxu0
  %498 = vmatprep.mubr.bf16.mxu0 %v148
  %499 = vmatmul.mubr.bf16.gmra.mxu0 %v147
  %v500 = vpop.f32.mrf.mxu0
  %v501 = vadd.f32 %v234, %v500
  %v502 = vpop.f32.mrf.mxu0
  %v503 = vpop.f32.mrf.mxu0
  %v504 = vadd.f32 %v234, %v503
  %v505 = vpop.f32.mrf.mxu0
  %506 = vmatprep.mubr.bf16.mxu0 %v152
  %507 = vmatmul.mubr.bf16.gmra.mxu0 %v151
  %v508 = vpop.f32.mrf.mxu0
  %v509 = vadd.f32 %v234, %v508
  %v510 = vpop.f32.mrf.mxu0
  %v511 = vpop.f32.mrf.mxu0
  %v512 = vadd.f32 %v234, %v511
  %v513 = vpop.f32.mrf.mxu0
  %514 = vmatprep.mubr.bf16.mxu0 %v156
  %515 = vmatmul.mubr.bf16.gmra.mxu0 %v155
  %v516 = vpop.f32.mrf.mxu0
  %v517 = vadd.f32 %v234, %v516
  %v518 = vpop.f32.mrf.mxu0
  %v519 = vpop.f32.mrf.mxu0
  %v520 = vadd.f32 %v234, %v519
  %v521 = vpop.f32.mrf.mxu0
  %522 = vmatprep.mubr.bf16.mxu0 %v160
  %523 = vmatmul.mubr.bf16.gmra.mxu0 %v159
  %v524 = vpop.f32.mrf.mxu0
  %v525 = vadd.f32 %v234, %v524
  %v526 = vpop.f32.mrf.mxu0
  %v527 = vpop.f32.mrf.mxu0
  %v528 = vadd.f32 %v234, %v527
  %v529 = vpop.f32.mrf.mxu0
  %530 = vmatprep.mubr.bf16.mxu0 %v164
  %531 = vmatmul.mubr.bf16.gmra.mxu0 %v163
  %v532 = vpop.f32.mrf.mxu0
  %v533 = vadd.f32 %v234, %v532
  %v534 = vpop.f32.mrf.mxu0
  %v535 = vpop.f32.mrf.mxu0
  %v536 = vadd.f32 %v234, %v535
  %v537 = vpop.f32.mrf.mxu0
  %538 = vmatprep.mubr.bf16.mxu0 %v168
  %539 = vmatmul.mubr.bf16.gmra.mxu0 %v167
  %v540 = vpop.f32.mrf.mxu0
  %v541 = vadd.f32 %v234, %v540
  %v542 = vpop.f32.mrf.mxu0
  %v543 = vpop.f32.mrf.mxu0
  %v544 = vadd.f32 %v234, %v543
  %v545 = vpop.f32.mrf.mxu0
  %546 = vmatprep.mubr.bf16.mxu0 %v172
  %547 = vmatmul.mubr.bf16.gmra.mxu0 %v171
  %v548 = vpop.f32.mrf.mxu0
  %v549 = vadd.f32 %v234, %v548
  %v550 = vpop.f32.mrf.mxu0
  %v551 = vpop.f32.mrf.mxu0
  %v552 = vadd.f32 %v234, %v551
  %v553 = vpop.f32.mrf.mxu0
  %554 = vmatprep.mubr.bf16.mxu0 %v176
  %555 = vmatmul.mubr.bf16.gmra.mxu0 %v175
  %v556 = vpop.f32.mrf.mxu0
  %v557 = vadd.f32 %v234, %v556
  %v558 = vpop.f32.mrf.mxu0
  %v559 = vpop.f32.mrf.mxu0
  %v560 = vpop.f32.mrf.mxu0
  %561 = vdwg.mxu0
  %562 = vmatprep.subr.bf16.mxu0 0
  %563 = vmatpush1.bf16.msra.mxu0 %v359
  %564 = vmatprep.subr.bf16.mxu0 0
  %565 = vmatpush1.bf16.msra.mxu0 %v358
  %566 = vmatprep.subr.bf16.mxu0 0
  %567 = vmatpush1.bf16.msra.mxu0 %v357
  %568 = vmatprep.subr.bf16.mxu0 0
  %569 = vmatpush1.bf16.msra.mxu0 %v356
  %570 = vmatprep.subr.bf16.mxu0 0
  %571 = vmatpush1.bf16.msra.mxu0 %v355
  %572 = vmatprep.subr.bf16.mxu0 0
  %573 = vmatpush1.bf16.msra.mxu0 %v354
  %574 = vmatprep.subr.bf16.mxu0 0
  %575 = vmatpush1.bf16.msra.mxu0 %v353
  %576 = vmatprep.subr.bf16.mxu0 0
  %577 = vmatpush1.bf16.msra.mxu0 %v352
  %578 = vmatprep.subr.bf16.mxu0 0
  %579 = vmatpush2.bf16.msra.mxu0 0
  %580 = vmatprep.subr.bf16.mxu0 0
  %581 = vmatpush2.bf16.msra.mxu0 0
  %582 = vmatprep.subr.bf16.mxu0 0
  %583 = vmatpush2.bf16.msra.mxu0 0
  %584 = vmatprep.subr.bf16.mxu0 0
  %585 = vmatpush2.bf16.msra.mxu0 0
  %586 = vmatprep.subr.bf16.mxu0 0
  %587 = vmatpush2.bf16.msra.mxu0 0
  %588 = vmatprep.subr.bf16.mxu0 0
  %589 = vmatpush2.bf16.msra.mxu0 0
  %590 = vmatprep.subr.bf16.mxu0 0
  %591 = vmatpush2.bf16.msra.mxu0 0
  %592 = vmatprep.subr.bf16.mxu0 0
  %593 = vmatpush2.bf16.msra.mxu0 %v360
  %594 = vmatprep.mubr.bf16.mxu0 %v388
  %595 = vmatmul.mubr.bf16.gmra.mxu0 %v129
  %v596 = vpop.f32.mrf.mxu0
  %v597 = vadd.f32 %v461, %v596
  %v598 = vpop.f32.mrf.mxu0
  %v599 = vpop.f32.mrf.mxu0
  %v600 = vadd.f32 %v464, %v599
  %v601 = vpop.f32.mrf.mxu0
  %602 = vmatprep.mubr.bf16.mxu0 %v391
  %603 = vmatmul.mubr.bf16.gmra.mxu0 %v133
  %v604 = vpop.f32.mrf.mxu0
  %v605 = vadd.f32 %v469, %v604
  %v606 = vpop.f32.mrf.mxu0
  %v607 = vpop.f32.mrf.mxu0
  %v608 = vadd.f32 %v472, %v607
  %v609 = vpop.f32.mrf.mxu0
  %610 = vmatprep.mubr.bf16.mxu0 %v394
  %611 = vmatmul.mubr.bf16.gmra.mxu0 %v137
  %v612 = vpop.f32.mrf.mxu0
  %v613 = vadd.f32 %v477, %v612
  %v614 = vpop.f32.mrf.mxu0
  %v615 = vpop.f32.mrf.mxu0
  %v616 = vadd.f32 %v480, %v615
  %v617 = vpop.f32.mrf.mxu0
  %618 = vmatprep.mubr.bf16.mxu0 %v397
  %619 = vmatmul.mubr.bf16.gmra.mxu0 %v141
  %v620 = vpop.f32.mrf.mxu0
  %v621 = vadd.f32 %v485, %v620
  %v622 = vpop.f32.mrf.mxu0
  %v623 = vpop.f32.mrf.mxu0
  %v624 = vadd.f32 %v488, %v623
  %v625 = vpop.f32.mrf.mxu0
  %626 = vmatprep.mubr.bf16.mxu0 %v400
  %627 = vmatmul.mubr.bf16.gmra.mxu0 %v145
  %v628 = vpop.f32.mrf.mxu0
  %v629 = vadd.f32 %v493, %v628
  %v630 = vpop.f32.mrf.mxu0
  %v631 = vpop.f32.mrf.mxu0
  %v632 = vadd.f32 %v496, %v631
  %v633 = vpop.f32.mrf.mxu0
  %634 = vmatprep.mubr.bf16.mxu0 %v403
  %635 = vmatmul.mubr.bf16.gmra.mxu0 %v149
  %v636 = vpop.f32.mrf.mxu0
  %v637 = vadd.f32 %v501, %v636
  %v638 = vpop.f32.mrf.mxu0
  %v639 = vpop.f32.mrf.mxu0
  %v640 = vadd.f32 %v504, %v639
  %v641 = vpop.f32.mrf.mxu0
  %642 = vmatprep.mubr.bf16.mxu0 %v406
  %643 = vmatmul.mubr.bf16.gmra.mxu0 %v153
  %v644 = vpop.f32.mrf.mxu0
  %v645 = vadd.f32 %v509, %v644
  %v646 = vpop.f32.mrf.mxu0
  %v647 = vpop.f32.mrf.mxu0
  %v648 = vadd.f32 %v512, %v647
  %v649 = vpop.f32.mrf.mxu0
  %650 = vmatprep.mubr.bf16.mxu0 %v409
  %651 = vmatmul.mubr.bf16.gmra.mxu0 %v157
  %v652 = vpop.f32.mrf.mxu0
  %v653 = vadd.f32 %v517, %v652
  %v654 = vpop.f32.mrf.mxu0
  %v655 = vpop.f32.mrf.mxu0
  %v656 = vadd.f32 %v520, %v655
  %v657 = vpop.f32.mrf.mxu0
  %658 = vmatprep.mubr.bf16.mxu0 %v412
  %659 = vmatmul.mubr.bf16.gmra.mxu0 %v161
  %v660 = vpop.f32.mrf.mxu0
  %v661 = vadd.f32 %v525, %v660
  %v662 = vpop.f32.mrf.mxu0
  %v663 = vpop.f32.mrf.mxu0
  %v664 = vadd.f32 %v528, %v663
  %v665 = vpop.f32.mrf.mxu0
  %666 = vmatprep.mubr.bf16.mxu0 %v415
  %667 = vmatmul.mubr.bf16.gmra.mxu0 %v165
  %v668 = vpop.f32.mrf.mxu0
  %v669 = vadd.f32 %v533, %v668
  %v670 = vpop.f32.mrf.mxu0
  %v671 = vpop.f32.mrf.mxu0
  %v672 = vadd.f32 %v536, %v671
  %v673 = vpop.f32.mrf.mxu0
  %674 = vmatprep.mubr.bf16.mxu0 %v418
  %675 = vmatmul.mubr.bf16.gmra.mxu0 %v169
  %v676 = vpop.f32.mrf.mxu0
  %v677 = vadd.f32 %v541, %v676
  %v678 = vpop.f32.mrf.mxu0
  %v679 = vpop.f32.mrf.mxu0
  %v680 = vadd.f32 %v544, %v679
  %v681 = vpop.f32.mrf.mxu0
  %682 = vmatprep.mubr.bf16.mxu0 %v421
  %683 = vmatmul.mubr.bf16.gmra.mxu0 %v173
  %v684 = vpop.f32.mrf.mxu0
  %v685 = vadd.f32 %v549, %v684
  %v686 = vpop.f32.mrf.mxu0
  %v687 = vpop.f32.mrf.mxu0
  %v688 = vadd.f32 %v552, %v687
  %v689 = vpop.f32.mrf.mxu0
  %690 = vmatprep.mubr.bf16.mxu0 %v424
  %691 = vmatmul.mubr.bf16.gmra.mxu0 %v177
  %v692 = vpop.f32.mrf.mxu0
  %v693 = vadd.f32 %v557, %v692
  %v694 = vpop.f32.mrf.mxu0
  %v695 = vpop.f32.mrf.mxu0
  %v696 = vpop.f32.mrf.mxu0
  %697 = vdwg.mxu0
  %v698 = vmax.f32 %v597, 0.0
  %v699 = vmax.f32 %v600, 0.0
  %v700 = vmax.f32 %v605, 0.0
  %v701 = vmax.f32 %v608, 0.0
  %v702 = vmax.f32 %v613, 0.0
  %v703 = vmax.f32 %v616, 0.0
  %v704 = vmax.f32 %v621, 0.0
  %v705 = vmax.f32 %v624, 0.0
  %v706 = vmax.f32 %v629, 0.0
  %v707 = vmax.f32 %v632, 0.0
  %v708 = vmax.f32 %v637, 0.0
  %v709 = vmax.f32 %v640, 0.0
  %v710 = vmax.f32 %v645, 0.0
  %v711 = vmax.f32 %v648, 0.0
  %v712 = vmax.f32 %v653, 0.0
  %v713 = vmax.f32 %v656, 0.0
  %v714 = vmax.f32 %v661, 0.0
  %v715 = vmax.f32 %v664, 0.0
  %v716 = vmax.f32 %v669, 0.0
  %v717 = vmax.f32 %v672, 0.0
  %v718 = vmax.f32 %v677, 0.0
  %v719 = vmax.f32 %v680, 0.0
  %v720 = vmax.f32 %v685, 0.0
  %v721 = vmax.f32 %v688, 0.0
  %v722 = vmax.f32 %v693, 0.0
  %v723 = vld [vmem:[%s3] sm:$0xf]
  %v724 = vld [vmem:[%s3 + $0x4] sm:$0xf]
  %v725 = vld [vmem:[%s3 + $0x8] sm:$0xf]
  %v726 = vld [vmem:[%s3 + $0xc] sm:$0xf]
  %v727 = vld [vmem:[%s3 + $0x10] sm:$0xf]
  %v728 = vld [vmem:[%s3 + $0x14] sm:$0xf]
  %v729 = vld [vmem:[%s3 + $0x18] sm:$0xf]
  %v730 = vld [vmem:[%s3 + $0x1c] sm:$0xf]
  %v731 = vld [vmem:[%s3 + $0x20] sm:$0xf]
  %v732 = vld [vmem:[%s3 + $0x24] sm:$0xf]
  %v733 = vld [vmem:[%s3 + $0x28] sm:$0xf]
  %v734 = vld [vmem:[%s3 + $0x2c] sm:$0xf]
  %v735 = vld [vmem:[%s3 + $0x30] sm:$0xf]
  %v736 = vld [vmem:[%s3 + $0x34] sm:$0xf]
  %v737 = vld [vmem:[%s3 + $0x38] sm:$0xf]
  %v738 = vld [vmem:[%s3 + $0x3c] sm:$0xf]
  %v739 = vld [vmem:[%s3 + $0x40] sm:$0xf]
  %v740 = vld [vmem:[%s3 + $0x44] sm:$0xf]
  %v741 = vld [vmem:[%s3 + $0x48] sm:$0xf]
  %v742 = vld [vmem:[%s3 + $0x4c] sm:$0xf]
  %v743 = vld [vmem:[%s3 + $0x50] sm:$0xf]
  %v744 = vld [vmem:[%s3 + $0x54] sm:$0xf]
  %v745 = vld [vmem:[%s3 + $0x58] sm:$0xf]
  %v746 = vld [vmem:[%s3 + $0x5c] sm:$0xf]
  %v747 = vld [vmem:[%s3 + $0x60] sm:$0xf]
  %v748 = vld [vmem:[%s3 + $0x64] sm:$0xf]
  %v749 = vld [vmem:[%s3 + $0x68] sm:$0xf]
  %v750 = vld [vmem:[%s3 + $0x6c] sm:$0xf]
  %v751 = vld [vmem:[%s3 + $0x70] sm:$0xf]
  %v752 = vld [vmem:[%s3 + $0x74] sm:$0xf]
  %v753 = vld [vmem:[%s3 + $0x78] sm:$0xf]
  %v754 = vld [vmem:[%s3 + $0x7c] sm:$0xf]
  %v755 = vld [vmem:[%s3 + $0x80] sm:$0xf]
  %v756 = vld [vmem:[%s3 + $0x84] sm:$0xf]
  %v757 = vld [vmem:[%s3 + $0x88] sm:$0xf]
  %v758 = vld [vmem:[%s3 + $0x8c] sm:$0xf]
  %v759 = vld [vmem:[%s3 + $0x90] sm:$0xf]
  %v760 = vld [vmem:[%s3 + $0x94] sm:$0xf]
  %v761 = vld [vmem:[%s3 + $0x98] sm:$0xf]
  %v762 = vld [vmem:[%s3 + $0x9c] sm:$0xf]
  %v763 = vld [vmem:[%s3 + $0xa0] sm:$0xf]
  %v764 = vld [vmem:[%s3 + $0xa4] sm:$0xf]
  %v765 = vld [vmem:[%s3 + $0xa8] sm:$0xf]
  %v766 = vld [vmem:[%s3 + $0xac] sm:$0xf]
  %v767 = vld [vmem:[%s3 + $0xb0] sm:$0xf]
  %v768 = vld [vmem:[%s3 + $0xb4] sm:$0xf]
  %v769 = vld [vmem:[%s3 + $0xb8] sm:$0xf]
  %v770 = vld [vmem:[%s3 + $0xbc] sm:$0xf]
  %v771 = vld [vmem:[%s3 + $0xc0] sm:$0xf]
  %v772 = vld [vmem:[%s3 + $0xc4] sm:$0xf]
  %v773 = vld [vmem:[%s3 + $0xc8] sm:$0xf]
  %v774 = vld [vmem:[%s3 + $0xcc] sm:$0xf]
  %v775 = vld [vmem:[%s3 + $0xd0] sm:$0xf]
  %v776 = vld [vmem:[%s3 + $0xd4] sm:$0xf]
  %v777 = vld [vmem:[%s3 + $0xd8] sm:$0xf]
  %v778 = vld [vmem:[%s3 + $0xdc] sm:$0xf]
  %v779 = vld [vmem:[%s3 + $0xe0] sm:$0xf]
  %v780 = vld [vmem:[%s3 + $0xe4] sm:$0xf]
  %v781 = vld [vmem:[%s3 + $0xe8] sm:$0xf]
  %v782 = vld [vmem:[%s3 + $0xec] sm:$0xf]
  %v783 = vld [vmem:[%s3 + $0xf0] sm:$0xf]
  %v784 = vld [vmem:[%s3 + $0xf4] sm:$0xf]
  %v785 = vld [vmem:[%s3 + $0xf8] sm:$0xf]
  %v786 = vld [vmem:[%s3 + $0xfc] sm:$0xf]
  %v787 = vld [vmem:[%s3 + $0x100] sm:$0xf]
  %v788 = vld [vmem:[%s3 + $0x104] sm:$0xf]
  %v789 = vld [vmem:[%s3 + $0x108] sm:$0xf]
  %v790 = vld [vmem:[%s3 + $0x10c] sm:$0xf]
  %v791 = vld [vmem:[%s3 + $0x110] sm:$0xf]
  %v792 = vld [vmem:[%s3 + $0x114] sm:$0xf]
  %v793 = vld [vmem:[%s3 + $0x118] sm:$0xf]
  %v794 = vld [vmem:[%s3 + $0x11c] sm:$0xf]
  %v795 = vld [vmem:[%s3 + $0x120] sm:$0xf]
  %v796 = vld [vmem:[%s3 + $0x124] sm:$0xf]
  %v797 = vld [vmem:[%s3 + $0x128] sm:$0xf]
  %v798 = vld [vmem:[%s3 + $0x12c] sm:$0xf]
  %v799 = vld [vmem:[%s3 + $0x130] sm:$0xf]
  %v800 = vld [vmem:[%s3 + $0x134] sm:$0xf]
  %v801 = vld [vmem:[%s3 + $0x138] sm:$0xf]
  %v802 = vld [vmem:[%s3 + $0x13c] sm:$0xf]
  %v803 = vld [vmem:[%s3 + $0x140] sm:$0xf]
  %v804 = vld [vmem:[%s3 + $0x144] sm:$0xf]
  %v805 = vld [vmem:[%s3 + $0x148] sm:$0xf]
  %v806 = vld [vmem:[%s3 + $0x14c] sm:$0xf]
  %v807 = vld [vmem:[%s3 + $0x150] sm:$0xf]
  %v808 = vld [vmem:[%s3 + $0x154] sm:$0xf]
  %v809 = vld [vmem:[%s3 + $0x158] sm:$0xf]
  %v810 = vld [vmem:[%s3 + $0x15c] sm:$0xf]
  %v811 = vld [vmem:[%s3 + $0x160] sm:$0xf]
  %v812 = vld [vmem:[%s3 + $0x164] sm:$0xf]
  %v813 = vld [vmem:[%s3 + $0x168] sm:$0xf]
  %v814 = vld [vmem:[%s3 + $0x16c] sm:$0xf]
  %v815 = vld [vmem:[%s3 + $0x170] sm:$0xf]
  %v816 = vld [vmem:[%s3 + $0x174] sm:$0xf]
  %v817 = vld [vmem:[%s3 + $0x178] sm:$0xf]
  %v818 = vld [vmem:[%s3 + $0x17c] sm:$0xf]
  %v819 = vld [vmem:[%s3 + $0x180] sm:$0xf]
  %v820 = vld [vmem:[%s3 + $0x184] sm:$0xf]
  %v821 = vld [vmem:[%s3 + $0x188] sm:$0xf]
  %v822 = vld [vmem:[%s3 + $0x18c] sm:$0xf]
  %v823 = vpack.c.bf16 %v698, %v698
  %v824 = vpack.c.bf16 %v699, %v699
  %v829 = vunpack.c.l.b16 %v727
  %v830 = vunpack.c.l.b16 %v728
  %v831 = vunpack.c.l.b16 %v729
  %v832 = vunpack.c.l.b16 %v730
  %v833 = vpack.c.b16 %v830, %v829
  %v834 = vpack.c.b16 %v832, %v831
  %vm837 = vcmask 261120
  %v839 = vsel %vm837, %v824, 0
  %841 = vmatprep.subr.bf16.mxu0 0
  %842 = vmatpush1.bf16.msra.mxu0 0
  %843 = vmatprep.subr.bf16.mxu0 0
  %844 = vmatpush1.bf16.msra.mxu0 0
  %845 = vmatprep.subr.bf16.mxu0 0
  %846 = vmatpush1.bf16.msra.mxu0 0
  %847 = vmatprep.subr.bf16.mxu0 0
  %848 = vmatpush1.bf16.msra.mxu0 0
  %849 = vmatprep.subr.bf16.mxu0 0
  %850 = vmatpush1.bf16.msra.mxu0 0
  %851 = vmatprep.subr.bf16.mxu0 0
  %852 = vmatpush1.bf16.msra.mxu0 0
  %853 = vmatprep.subr.bf16.mxu0 0
  %854 = vmatpush1.bf16.msra.mxu0 %v834
  %855 = vmatprep.subr.bf16.mxu0 0
  %856 = vmatpush1.bf16.msra.mxu0 %v833
  %857 = vmatprep.subr.bf16.mxu0 0
  %858 = vmatpush2.bf16.msra.mxu0 0
  %859 = vmatprep.subr.bf16.mxu0 0
  %860 = vmatpush2.bf16.msra.mxu0 0
  %861 = vmatprep.subr.bf16.mxu0 0
  %862 = vmatpush2.bf16.msra.mxu0 0
  %863 = vmatprep.subr.bf16.mxu0 0
  %864 = vmatpush2.bf16.msra.mxu0 0
  %865 = vmatprep.subr.bf16.mxu0 0
  %866 = vmatpush2.bf16.msra.mxu0 0
  %867 = vmatprep.subr.bf16.mxu0 0
  %868 = vmatpush2.bf16.msra.mxu0 0
  %869 = vmatprep.subr.bf16.mxu0 0
  %870 = vmatpush2.bf16.msra.mxu0 0
  %871 = vmatprep.subr.bf16.mxu0 0
  %872 = vmatpush2.bf16.msra.mxu0 0
  %873 = vmatprep.mubr.bf16.mxu0 0
  %874 = vmatmul.mubr.bf16.gmra.mxu0 %v839
  %v875 = vpop.f32.mrf.mxu0
  %v876 = vadd.f32 0.0, %v875
  %v877 = vpop.f32.mrf.mxu0
  %v878 = vpop.f32.mrf.mxu0
  %v879 = vpop.f32.mrf.mxu0
  %880 = vdwg.mxu0
  %v885 = vunpack.c.l.b16 %v723
  %v886 = vunpack.c.l.b16 %v724
  %v887 = vunpack.c.l.b16 %v725
  %v888 = vunpack.c.l.b16 %v726
  %v889 = vpack.c.b16 %v886, %v885
  %v890 = vpack.c.b16 %v888, %v887
  %v894 = vsel %vm837, %v823, 0
  %896 = vmatprep.subr.bf16.mxu0 0
  %897 = vmatpush1.bf16.msra.mxu0 0
  %898 = vmatprep.subr.bf16.mxu0 0
  %899 = vmatpush1.bf16.msra.mxu0 0
  %900 = vmatprep.subr.bf16.mxu0 0
  %901 = vmatpush1.bf16.msra.mxu0 0
  %902 = vmatprep.subr.bf16.mxu0 0
  %903 = vmatpush1.bf16.msra.mxu0 0
  %904 = vmatprep.subr.bf16.mxu0 0
  %905 = vmatpush1.bf16.msra.mxu0 0
  %906 = vmatprep.subr.bf16.mxu0 0
  %907 = vmatpush1.bf16.msra.mxu0 0
  %908 = vmatprep.subr.bf16.mxu0 0
  %909 = vmatpush1.bf16.msra.mxu0 %v890
  %910 = vmatprep.subr.bf16.mxu0 0
  %911 = vmatpush1.bf16.msra.mxu0 %v889
  %912 = vmatprep.subr.bf16.mxu0 0
  %913 = vmatpush2.bf16.msra.mxu0 0
  %914 = vmatprep.subr.bf16.mxu0 0
  %915 = vmatpush2.bf16.msra.mxu0 0
  %916 = vmatprep.subr.bf16.mxu0 0
  %917 = vmatpush2.bf16.msra.mxu0 0
  %918 = vmatprep.subr.bf16.mxu0 0
  %919 = vmatpush2.bf16.msra.mxu0 0
  %920 = vmatprep.subr.bf16.mxu0 0
  %921 = vmatpush2.bf16.msra.mxu0 0
  %922 = vmatprep.subr.bf16.mxu0 0
  %923 = vmatpush2.bf16.msra.mxu0 0
  %924 = vmatprep.subr.bf16.mxu0 0
  %925 = vmatpush2.bf16.msra.mxu0 0
  %926 = vmatprep.subr.bf16.mxu0 0
  %927 = vmatpush2.bf16.msra.mxu0 0
  %928 = vmatprep.mubr.bf16.mxu0 0
  %929 = vmatmul.mubr.bf16.gmra.mxu0 %v894
  %v930 = vpop.f32.mrf.mxu0
  %v931 = vadd.f32 %v876, %v930
  %v932 = vpop.f32.mrf.mxu0
  %v933 = vpop.f32.mrf.mxu0
  %v934 = vpop.f32.mrf.mxu0
  %935 = vdwg.mxu0
  %v936 = vpack.c.bf16 %v700, %v700
  %v941 = vunpack.c.l.b16 %v731
  %v942 = vunpack.c.l.b16 %v732
  %v943 = vunpack.c.l.b16 %v733
  %v944 = vunpack.c.l.b16 %v734
  %v945 = vpack.c.b16 %v942, %v941
  %v946 = vpack.c.b16 %v944, %v943
  %v950 = vsel %vm837, %v936, 0
  %952 = vmatprep.subr.bf16.mxu0 0
  %953 = vmatpush1.bf16.msra.mxu0 0
  %954 = vmatprep.subr.bf16.mxu0 0
  %955 = vmatpush1.bf16.msra.mxu0 0
  %956 = vmatprep.subr.bf16.mxu0 0
  %957 = vmatpush1.bf16.msra.mxu0 0
  %958 = vmatprep.subr.bf16.mxu0 0
  %959 = vmatpush1.bf16.msra.mxu0 0
  %960 = vmatprep.subr.bf16.mxu0 0
  %961 = vmatpush1.bf16.msra.mxu0 0
  %962 = vmatprep.subr.bf16.mxu0 0
  %963 = vmatpush1.bf16.msra.mxu0 0
  %964 = vmatprep.subr.bf16.mxu0 0
  %965 = vmatpush1.bf16.msra.mxu0 %v946
  %966 = vmatprep.subr.bf16.mxu0 0
  %967 = vmatpush1.bf16.msra.mxu0 %v945
  %968 = vmatprep.subr.bf16.mxu0 0
  %969 = vmatpush2.bf16.msra.mxu0 0
  %970 = vmatprep.subr.bf16.mxu0 0
  %971 = vmatpush2.bf16.msra.mxu0 0
  %972 = vmatprep.subr.bf16.mxu0 0
  %973 = vmatpush2.bf16.msra.mxu0 0
  %974 = vmatprep.subr.bf16.mxu0 0
  %975 = vmatpush2.bf16.msra.mxu0 0
  %976 = vmatprep.subr.bf16.mxu0 0
  %977 = vmatpush2.bf16.msra.mxu0 0
  %978 = vmatprep.subr.bf16.mxu0 0
  %979 = vmatpush2.bf16.msra.mxu0 0
  %980 = vmatprep.subr.bf16.mxu0 0
  %981 = vmatpush2.bf16.msra.mxu0 0
  %982 = vmatprep.subr.bf16.mxu0 0
  %983 = vmatpush2.bf16.msra.mxu0 0
  %984 = vmatprep.mubr.bf16.mxu0 0
  %985 = vmatmul.mubr.bf16.gmra.mxu0 %v950
  %v986 = vpop.f32.mrf.mxu0
  %v987 = vadd.f32 0.0, %v986
  %v988 = vpop.f32.mrf.mxu0
  %v989 = vpop.f32.mrf.mxu0
  %v990 = vpop.f32.mrf.mxu0
  %991 = vdwg.mxu0
  %v992 = vadd.f32 %v931, %v987
  %v993 = vpack.c.bf16 %v701, %v701
  %v998 = vunpack.c.l.b16 %v735
  %v999 = vunpack.c.l.b16 %v736
  %v1000 = vunpack.c.l.b16 %v737
  %v1001 = vunpack.c.l.b16 %v738
  %v1002 = vpack.c.b16 %v999, %v998
  %v1003 = vpack.c.b16 %v1001, %v1000
  %v1007 = vsel %vm837, %v993, 0
  %1009 = vmatprep.subr.bf16.mxu0 0
  %1010 = vmatpush1.bf16.msra.mxu0 0
  %1011 = vmatprep.subr.bf16.mxu0 0
  %1012 = vmatpush1.bf16.msra.mxu0 0
  %1013 = vmatprep.subr.bf16.mxu0 0
  %1014 = vmatpush1.bf16.msra.mxu0 0
  %1015 = vmatprep.subr.bf16.mxu0 0
  %1016 = vmatpush1.bf16.msra.mxu0 0
  %1017 = vmatprep.subr.bf16.mxu0 0
  %1018 = vmatpush1.bf16.msra.mxu0 0
  %1019 = vmatprep.subr.bf16.mxu0 0
  %1020 = vmatpush1.bf16.msra.mxu0 0
  %1021 = vmatprep.subr.bf16.mxu0 0
  %1022 = vmatpush1.bf16.msra.mxu0 %v1003
  %1023 = vmatprep.subr.bf16.mxu0 0
  %1024 = vmatpush1.bf16.msra.mxu0 %v1002
  %1025 = vmatprep.subr.bf16.mxu0 0
  %1026 = vmatpush2.bf16.msra.mxu0 0
  %1027 = vmatprep.subr.bf16.mxu0 0
  %1028 = vmatpush2.bf16.msra.mxu0 0
  %1029 = vmatprep.subr.bf16.mxu0 0
  %1030 = vmatpush2.bf16.msra.mxu0 0
  %1031 = vmatprep.subr.bf16.mxu0 0
  %1032 = vmatpush2.bf16.msra.mxu0 0
  %1033 = vmatprep.subr.bf16.mxu0 0
  %1034 = vmatpush2.bf16.msra.mxu0 0
  %1035 = vmatprep.subr.bf16.mxu0 0
  %1036 = vmatpush2.bf16.msra.mxu0 0
  %1037 = vmatprep.subr.bf16.mxu0 0
  %1038 = vmatpush2.bf16.msra.mxu0 0
  %1039 = vmatprep.subr.bf16.mxu0 0
  %1040 = vmatpush2.bf16.msra.mxu0 0
  %1041 = vmatprep.mubr.bf16.mxu0 0
  %1042 = vmatmul.mubr.bf16.gmra.mxu0 %v1007
  %v1043 = vpop.f32.mrf.mxu0
  %v1044 = vadd.f32 0.0, %v1043
  %v1045 = vpop.f32.mrf.mxu0
  %v1046 = vpop.f32.mrf.mxu0
  %v1047 = vpop.f32.mrf.mxu0
  %1048 = vdwg.mxu0
  %v1049 = vadd.f32 %v992, %v1044
  %v1050 = vpack.c.bf16 %v702, %v702
  %v1055 = vunpack.c.l.b16 %v739
  %v1056 = vunpack.c.l.b16 %v740
  %v1057 = vunpack.c.l.b16 %v741
  %v1058 = vunpack.c.l.b16 %v742
  %v1059 = vpack.c.b16 %v1056, %v1055
  %v1060 = vpack.c.b16 %v1058, %v1057
  %v1064 = vsel %vm837, %v1050, 0
  %1066 = vmatprep.subr.bf16.mxu0 0
  %1067 = vmatpush1.bf16.msra.mxu0 0
  %1068 = vmatprep.subr.bf16.mxu0 0
  %1069 = vmatpush1.bf16.msra.mxu0 0
  %1070 = vmatprep.subr.bf16.mxu0 0
  %1071 = vmatpush1.bf16.msra.mxu0 0
  %1072 = vmatprep.subr.bf16.mxu0 0
  %1073 = vmatpush1.bf16.msra.mxu0 0
  %1074 = vmatprep.subr.bf16.mxu0 0
  %1075 = vmatpush1.bf16.msra.mxu0 0
  %1076 = vmatprep.subr.bf16.mxu0 0
  %1077 = vmatpush1.bf16.msra.mxu0 0
  %1078 = vmatprep.subr.bf16.mxu0 0
  %1079 = vmatpush1.bf16.msra.mxu0 %v1060
  %1080 = vmatprep.subr.bf16.mxu0 0
  %1081 = vmatpush1.bf16.msra.mxu0 %v1059
  %1082 = vmatprep.subr.bf16.mxu0 0
  %1083 = vmatpush2.bf16.msra.mxu0 0
  %1084 = vmatprep.subr.bf16.mxu0 0
  %1085 = vmatpush2.bf16.msra.mxu0 0
  %1086 = vmatprep.subr.bf16.mxu0 0
  %1087 = vmatpush2.bf16.msra.mxu0 0
  %1088 = vmatprep.subr.bf16.mxu0 0
  %1089 = vmatpush2.bf16.msra.mxu0 0
  %1090 = vmatprep.subr.bf16.mxu0 0
  %1091 = vmatpush2.bf16.msra.mxu0 0
  %1092 = vmatprep.subr.bf16.mxu0 0
  %1093 = vmatpush2.bf16.msra.mxu0 0
  %1094 = vmatprep.subr.bf16.mxu0 0
  %1095 = vmatpush2.bf16.msra.mxu0 0
  %1096 = vmatprep.subr.bf16.mxu0 0
  %1097 = vmatpush2.bf16.msra.mxu0 0
  %1098 = vmatprep.mubr.bf16.mxu0 0
  %1099 = vmatmul.mubr.bf16.gmra.mxu0 %v1064
  %v1100 = vpop.f32.mrf.mxu0
  %v1101 = vadd.f32 0.0, %v1100
  %v1102 = vpop.f32.mrf.mxu0
  %v1103 = vpop.f32.mrf.mxu0
  %v1104 = vpop.f32.mrf.mxu0
  %1105 = vdwg.mxu0
  %v1106 = vadd.f32 %v1049, %v1101
  %v1107 = vpack.c.bf16 %v703, %v703
  %v1112 = vunpack.c.l.b16 %v743
  %v1113 = vunpack.c.l.b16 %v744
  %v1114 = vunpack.c.l.b16 %v745
  %v1115 = vunpack.c.l.b16 %v746
  %v1116 = vpack.c.b16 %v1113, %v1112
  %v1117 = vpack.c.b16 %v1115, %v1114
  %v1121 = vsel %vm837, %v1107, 0
  %1123 = vmatprep.subr.bf16.mxu0 0
  %1124 = vmatpush1.bf16.msra.mxu0 0
  %1125 = vmatprep.subr.bf16.mxu0 0
  %1126 = vmatpush1.bf16.msra.mxu0 0
  %1127 = vmatprep.subr.bf16.mxu0 0
  %1128 = vmatpush1.bf16.msra.mxu0 0
  %1129 = vmatprep.subr.bf16.mxu0 0
  %1130 = vmatpush1.bf16.msra.mxu0 0
  %1131 = vmatprep.subr.bf16.mxu0 0
  %1132 = vmatpush1.bf16.msra.mxu0 0
  %1133 = vmatprep.subr.bf16.mxu0 0
  %1134 = vmatpush1.bf16.msra.mxu0 0
  %1135 = vmatprep.subr.bf16.mxu0 0
  %1136 = vmatpush1.bf16.msra.mxu0 %v1117
  %1137 = vmatprep.subr.bf16.mxu0 0
  %1138 = vmatpush1.bf16.msra.mxu0 %v1116
  %1139 = vmatprep.subr.bf16.mxu0 0
  %1140 = vmatpush2.bf16.msra.mxu0 0
  %1141 = vmatprep.subr.bf16.mxu0 0
  %1142 = vmatpush2.bf16.msra.mxu0 0
  %1143 = vmatprep.subr.bf16.mxu0 0
  %1144 = vmatpush2.bf16.msra.mxu0 0
  %1145 = vmatprep.subr.bf16.mxu0 0
  %1146 = vmatpush2.bf16.msra.mxu0 0
  %1147 = vmatprep.subr.bf16.mxu0 0
  %1148 = vmatpush2.bf16.msra.mxu0 0
  %1149 = vmatprep.subr.bf16.mxu0 0
  %1150 = vmatpush2.bf16.msra.mxu0 0
  %1151 = vmatprep.subr.bf16.mxu0 0
  %1152 = vmatpush2.bf16.msra.mxu0 0
  %1153 = vmatprep.subr.bf16.mxu0 0
  %1154 = vmatpush2.bf16.msra.mxu0 0
  %1155 = vmatprep.mubr.bf16.mxu0 0
  %1156 = vmatmul.mubr.bf16.gmra.mxu0 %v1121
  %v1157 = vpop.f32.mrf.mxu0
  %v1158 = vadd.f32 0.0, %v1157
  %v1159 = vpop.f32.mrf.mxu0
  %v1160 = vpop.f32.mrf.mxu0
  %v1161 = vpop.f32.mrf.mxu0
  %1162 = vdwg.mxu0
  %v1163 = vadd.f32 %v1106, %v1158
  %v1164 = vpack.c.bf16 %v704, %v704
  %v1169 = vunpack.c.l.b16 %v747
  %v1170 = vunpack.c.l.b16 %v748
  %v1171 = vunpack.c.l.b16 %v749
  %v1172 = vunpack.c.l.b16 %v750
  %v1173 = vpack.c.b16 %v1170, %v1169
  %v1174 = vpack.c.b16 %v1172, %v1171
  %v1178 = vsel %vm837, %v1164, 0
  %1180 = vmatprep.subr.bf16.mxu0 0
  %1181 = vmatpush1.bf16.msra.mxu0 0
  %1182 = vmatprep.subr.bf16.mxu0 0
  %1183 = vmatpush1.bf16.msra.mxu0 0
  %1184 = vmatprep.subr.bf16.mxu0 0
  %1185 = vmatpush1.bf16.msra.mxu0 0
  %1186 = vmatprep.subr.bf16.mxu0 0
  %1187 = vmatpush1.bf16.msra.mxu0 0
  %1188 = vmatprep.subr.bf16.mxu0 0
  %1189 = vmatpush1.bf16.msra.mxu0 0
  %1190 = vmatprep.subr.bf16.mxu0 0
  %1191 = vmatpush1.bf16.msra.mxu0 0
  %1192 = vmatprep.subr.bf16.mxu0 0
  %1193 = vmatpush1.bf16.msra.mxu0 %v1174
  %1194 = vmatprep.subr.bf16.mxu0 0
  %1195 = vmatpush1.bf16.msra.mxu0 %v1173
  %1196 = vmatprep.subr.bf16.mxu0 0
  %1197 = vmatpush2.bf16.msra.mxu0 0
  %1198 = vmatprep.subr.bf16.mxu0 0
  %1199 = vmatpush2.bf16.msra.mxu0 0
  %1200 = vmatprep.subr.bf16.mxu0 0
  %1201 = vmatpush2.bf16.msra.mxu0 0
  %1202 = vmatprep.subr.bf16.mxu0 0
  %1203 = vmatpush2.bf16.msra.mxu0 0
  %1204 = vmatprep.subr.bf16.mxu0 0
  %1205 = vmatpush2.bf16.msra.mxu0 0
  %1206 = vmatprep.subr.bf16.mxu0 0
  %1207 = vmatpush2.bf16.msra.mxu0 0
  %1208 = vmatprep.subr.bf16.mxu0 0
  %1209 = vmatpush2.bf16.msra.mxu0 0
  %1210 = vmatprep.subr.bf16.mxu0 0
  %1211 = vmatpush2.bf16.msra.mxu0 0
  %1212 = vmatprep.mubr.bf16.mxu0 0
  %1213 = vmatmul.mubr.bf16.gmra.mxu0 %v1178
  %v1214 = vpop.f32.mrf.mxu0
  %v1215 = vadd.f32 0.0, %v1214
  %v1216 = vpop.f32.mrf.mxu0
  %v1217 = vpop.f32.mrf.mxu0
  %v1218 = vpop.f32.mrf.mxu0
  %1219 = vdwg.mxu0
  %v1220 = vadd.f32 %v1163, %v1215
  %v1221 = vpack.c.bf16 %v705, %v705
  %v1226 = vunpack.c.l.b16 %v751
  %v1227 = vunpack.c.l.b16 %v752
  %v1228 = vunpack.c.l.b16 %v753
  %v1229 = vunpack.c.l.b16 %v754
  %v1230 = vpack.c.b16 %v1227, %v1226
  %v1231 = vpack.c.b16 %v1229, %v1228
  %v1235 = vsel %vm837, %v1221, 0
  %1237 = vmatprep.subr.bf16.mxu0 0
  %1238 = vmatpush1.bf16.msra.mxu0 0
  %1239 = vmatprep.subr.bf16.mxu0 0
  %1240 = vmatpush1.bf16.msra.mxu0 0
  %1241 = vmatprep.subr.bf16.mxu0 0
  %1242 = vmatpush1.bf16.msra.mxu0 0
  %1243 = vmatprep.subr.bf16.mxu0 0
  %1244 = vmatpush1.bf16.msra.mxu0 0
  %1245 = vmatprep.subr.bf16.mxu0 0
  %1246 = vmatpush1.bf16.msra.mxu0 0
  %1247 = vmatprep.subr.bf16.mxu0 0
  %1248 = vmatpush1.bf16.msra.mxu0 0
  %1249 = vmatprep.subr.bf16.mxu0 0
  %1250 = vmatpush1.bf16.msra.mxu0 %v1231
  %1251 = vmatprep.subr.bf16.mxu0 0
  %1252 = vmatpush1.bf16.msra.mxu0 %v1230
  %1253 = vmatprep.subr.bf16.mxu0 0
  %1254 = vmatpush2.bf16.msra.mxu0 0
  %1255 = vmatprep.subr.bf16.mxu0 0
  %1256 = vmatpush2.bf16.msra.mxu0 0
  %1257 = vmatprep.subr.bf16.mxu0 0
  %1258 = vmatpush2.bf16.msra.mxu0 0
  %1259 = vmatprep.subr.bf16.mxu0 0
  %1260 = vmatpush2.bf16.msra.mxu0 0
  %1261 = vmatprep.subr.bf16.mxu0 0
  %1262 = vmatpush2.bf16.msra.mxu0 0
  %1263 = vmatprep.subr.bf16.mxu0 0
  %1264 = vmatpush2.bf16.msra.mxu0 0
  %1265 = vmatprep.subr.bf16.mxu0 0
  %1266 = vmatpush2.bf16.msra.mxu0 0
  %1267 = vmatprep.subr.bf16.mxu0 0
  %1268 = vmatpush2.bf16.msra.mxu0 0
  %1269 = vmatprep.mubr.bf16.mxu0 0
  %1270 = vmatmul.mubr.bf16.gmra.mxu0 %v1235
  %v1271 = vpop.f32.mrf.mxu0
  %v1272 = vadd.f32 0.0, %v1271
  %v1273 = vpop.f32.mrf.mxu0
  %v1274 = vpop.f32.mrf.mxu0
  %v1275 = vpop.f32.mrf.mxu0
  %1276 = vdwg.mxu0
  %v1277 = vadd.f32 %v1220, %v1272
  %v1278 = vpack.c.bf16 %v706, %v706
  %v1283 = vunpack.c.l.b16 %v755
  %v1284 = vunpack.c.l.b16 %v756
  %v1285 = vunpack.c.l.b16 %v757
  %v1286 = vunpack.c.l.b16 %v758
  %v1287 = vpack.c.b16 %v1284, %v1283
  %v1288 = vpack.c.b16 %v1286, %v1285
  %v1292 = vsel %vm837, %v1278, 0
  %1294 = vmatprep.subr.bf16.mxu0 0
  %1295 = vmatpush1.bf16.msra.mxu0 0
  %1296 = vmatprep.subr.bf16.mxu0 0
  %1297 = vmatpush1.bf16.msra.mxu0 0
  %1298 = vmatprep.subr.bf16.mxu0 0
  %1299 = vmatpush1.bf16.msra.mxu0 0
  %1300 = vmatprep.subr.bf16.mxu0 0
  %1301 = vmatpush1.bf16.msra.mxu0 0
  %1302 = vmatprep.subr.bf16.mxu0 0
  %1303 = vmatpush1.bf16.msra.mxu0 0
  %1304 = vmatprep.subr.bf16.mxu0 0
  %1305 = vmatpush1.bf16.msra.mxu0 0
  %1306 = vmatprep.subr.bf16.mxu0 0
  %1307 = vmatpush1.bf16.msra.mxu0 %v1288
  %1308 = vmatprep.subr.bf16.mxu0 0
  %1309 = vmatpush1.bf16.msra.mxu0 %v1287
  %1310 = vmatprep.subr.bf16.mxu0 0
  %1311 = vmatpush2.bf16.msra.mxu0 0
  %1312 = vmatprep.subr.bf16.mxu0 0
  %1313 = vmatpush2.bf16.msra.mxu0 0
  %1314 = vmatprep.subr.bf16.mxu0 0
  %1315 = vmatpush2.bf16.msra.mxu0 0
  %1316 = vmatprep.subr.bf16.mxu0 0
  %1317 = vmatpush2.bf16.msra.mxu0 0
  %1318 = vmatprep.subr.bf16.mxu0 0
  %1319 = vmatpush2.bf16.msra.mxu0 0
  %1320 = vmatprep.subr.bf16.mxu0 0
  %1321 = vmatpush2.bf16.msra.mxu0 0
  %1322 = vmatprep.subr.bf16.mxu0 0
  %1323 = vmatpush2.bf16.msra.mxu0 0
  %1324 = vmatprep.subr.bf16.mxu0 0
  %1325 = vmatpush2.bf16.msra.mxu0 0
  %1326 = vmatprep.mubr.bf16.mxu0 0
  %1327 = vmatmul.mubr.bf16.gmra.mxu0 %v1292
  %v1328 = vpop.f32.mrf.mxu0
  %v1329 = vadd.f32 0.0, %v1328
  %v1330 = vpop.f32.mrf.mxu0
  %v1331 = vpop.f32.mrf.mxu0
  %v1332 = vpop.f32.mrf.mxu0
  %1333 = vdwg.mxu0
  %v1334 = vadd.f32 %v1277, %v1329
  %v1335 = vpack.c.bf16 %v707, %v707
  %v1340 = vunpack.c.l.b16 %v759
  %v1341 = vunpack.c.l.b16 %v760
  %v1342 = vunpack.c.l.b16 %v761
  %v1343 = vunpack.c.l.b16 %v762
  %v1344 = vpack.c.b16 %v1341, %v1340
  %v1345 = vpack.c.b16 %v1343, %v1342
  %v1349 = vsel %vm837, %v1335, 0
  %1351 = vmatprep.subr.bf16.mxu0 0
  %1352 = vmatpush1.bf16.msra.mxu0 0
  %1353 = vmatprep.subr.bf16.mxu0 0
  %1354 = vmatpush1.bf16.msra.mxu0 0
  %1355 = vmatprep.subr.bf16.mxu0 0
  %1356 = vmatpush1.bf16.msra.mxu0 0
  %1357 = vmatprep.subr.bf16.mxu0 0
  %1358 = vmatpush1.bf16.msra.mxu0 0
  %1359 = vmatprep.subr.bf16.mxu0 0
  %1360 = vmatpush1.bf16.msra.mxu0 0
  %1361 = vmatprep.subr.bf16.mxu0 0
  %1362 = vmatpush1.bf16.msra.mxu0 0
  %1363 = vmatprep.subr.bf16.mxu0 0
  %1364 = vmatpush1.bf16.msra.mxu0 %v1345
  %1365 = vmatprep.subr.bf16.mxu0 0
  %1366 = vmatpush1.bf16.msra.mxu0 %v1344
  %1367 = vmatprep.subr.bf16.mxu0 0
  %1368 = vmatpush2.bf16.msra.mxu0 0
  %1369 = vmatprep.subr.bf16.mxu0 0
  %1370 = vmatpush2.bf16.msra.mxu0 0
  %1371 = vmatprep.subr.bf16.mxu0 0
  %1372 = vmatpush2.bf16.msra.mxu0 0
  %1373 = vmatprep.subr.bf16.mxu0 0
  %1374 = vmatpush2.bf16.msra.mxu0 0
  %1375 = vmatprep.subr.bf16.mxu0 0
  %1376 = vmatpush2.bf16.msra.mxu0 0
  %1377 = vmatprep.subr.bf16.mxu0 0
  %1378 = vmatpush2.bf16.msra.mxu0 0
  %1379 = vmatprep.subr.bf16.mxu0 0
  %1380 = vmatpush2.bf16.msra.mxu0 0
  %1381 = vmatprep.subr.bf16.mxu0 0
  %1382 = vmatpush2.bf16.msra.mxu0 0
  %1383 = vmatprep.mubr.bf16.mxu0 0
  %1384 = vmatmul.mubr.bf16.gmra.mxu0 %v1349
  %v1385 = vpop.f32.mrf.mxu0
  %v1386 = vadd.f32 0.0, %v1385
  %v1387 = vpop.f32.mrf.mxu0
  %v1388 = vpop.f32.mrf.mxu0
  %v1389 = vpop.f32.mrf.mxu0
  %1390 = vdwg.mxu0
  %v1391 = vadd.f32 %v1334, %v1386
  %v1392 = vpack.c.bf16 %v708, %v708
  %v1397 = vunpack.c.l.b16 %v763
  %v1398 = vunpack.c.l.b16 %v764
  %v1399 = vunpack.c.l.b16 %v765
  %v1400 = vunpack.c.l.b16 %v766
  %v1401 = vpack.c.b16 %v1398, %v1397
  %v1402 = vpack.c.b16 %v1400, %v1399
  %v1406 = vsel %vm837, %v1392, 0
  %1408 = vmatprep.subr.bf16.mxu0 0
  %1409 = vmatpush1.bf16.msra.mxu0 0
  %1410 = vmatprep.subr.bf16.mxu0 0
  %1411 = vmatpush1.bf16.msra.mxu0 0
  %1412 = vmatprep.subr.bf16.mxu0 0
  %1413 = vmatpush1.bf16.msra.mxu0 0
  %1414 = vmatprep.subr.bf16.mxu0 0
  %1415 = vmatpush1.bf16.msra.mxu0 0
  %1416 = vmatprep.subr.bf16.mxu0 0
  %1417 = vmatpush1.bf16.msra.mxu0 0
  %1418 = vmatprep.subr.bf16.mxu0 0
  %1419 = vmatpush1.bf16.msra.mxu0 0
  %1420 = vmatprep.subr.bf16.mxu0 0
  %1421 = vmatpush1.bf16.msra.mxu0 %v1402
  %1422 = vmatprep.subr.bf16.mxu0 0
  %1423 = vmatpush1.bf16.msra.mxu0 %v1401
  %1424 = vmatprep.subr.bf16.mxu0 0
  %1425 = vmatpush2.bf16.msra.mxu0 0
  %1426 = vmatprep.subr.bf16.mxu0 0
  %1427 = vmatpush2.bf16.msra.mxu0 0
  %1428 = vmatprep.subr.bf16.mxu0 0
  %1429 = vmatpush2.bf16.msra.mxu0 0
  %1430 = vmatprep.subr.bf16.mxu0 0
  %1431 = vmatpush2.bf16.msra.mxu0 0
  %1432 = vmatprep.subr.bf16.mxu0 0
  %1433 = vmatpush2.bf16.msra.mxu0 0
  %1434 = vmatprep.subr.bf16.mxu0 0
  %1435 = vmatpush2.bf16.msra.mxu0 0
  %1436 = vmatprep.subr.bf16.mxu0 0
  %1437 = vmatpush2.bf16.msra.mxu0 0
  %1438 = vmatprep.subr.bf16.mxu0 0
  %1439 = vmatpush2.bf16.msra.mxu0 0
  %1440 = vmatprep.mubr.bf16.mxu0 0
  %1441 = vmatmul.mubr.bf16.gmra.mxu0 %v1406
  %v1442 = vpop.f32.mrf.mxu0
  %v1443 = vadd.f32 0.0, %v1442
  %v1444 = vpop.f32.mrf.mxu0
  %v1445 = vpop.f32.mrf.mxu0
  %v1446 = vpop.f32.mrf.mxu0
  %1447 = vdwg.mxu0
  %v1448 = vadd.f32 %v1391, %v1443
  %v1449 = vpack.c.bf16 %v709, %v709
  %v1454 = vunpack.c.l.b16 %v767
  %v1455 = vunpack.c.l.b16 %v768
  %v1456 = vunpack.c.l.b16 %v769
  %v1457 = vunpack.c.l.b16 %v770
  %v1458 = vpack.c.b16 %v1455, %v1454
  %v1459 = vpack.c.b16 %v1457, %v1456
  %v1463 = vsel %vm837, %v1449, 0
  %1465 = vmatprep.subr.bf16.mxu0 0
  %1466 = vmatpush1.bf16.msra.mxu0 0
  %1467 = vmatprep.subr.bf16.mxu0 0
  %1468 = vmatpush1.bf16.msra.mxu0 0
  %1469 = vmatprep.subr.bf16.mxu0 0
  %1470 = vmatpush1.bf16.msra.mxu0 0
  %1471 = vmatprep.subr.bf16.mxu0 0
  %1472 = vmatpush1.bf16.msra.mxu0 0
  %1473 = vmatprep.subr.bf16.mxu0 0
  %1474 = vmatpush1.bf16.msra.mxu0 0
  %1475 = vmatprep.subr.bf16.mxu0 0
  %1476 = vmatpush1.bf16.msra.mxu0 0
  %1477 = vmatprep.subr.bf16.mxu0 0
  %1478 = vmatpush1.bf16.msra.mxu0 %v1459
  %1479 = vmatprep.subr.bf16.mxu0 0
  %1480 = vmatpush1.bf16.msra.mxu0 %v1458
  %1481 = vmatprep.subr.bf16.mxu0 0
  %1482 = vmatpush2.bf16.msra.mxu0 0
  %1483 = vmatprep.subr.bf16.mxu0 0
  %1484 = vmatpush2.bf16.msra.mxu0 0
  %1485 = vmatprep.subr.bf16.mxu0 0
  %1486 = vmatpush2.bf16.msra.mxu0 0
  %1487 = vmatprep.subr.bf16.mxu0 0
  %1488 = vmatpush2.bf16.msra.mxu0 0
  %1489 = vmatprep.subr.bf16.mxu0 0
  %1490 = vmatpush2.bf16.msra.mxu0 0
  %1491 = vmatprep.subr.bf16.mxu0 0
  %1492 = vmatpush2.bf16.msra.mxu0 0
  %1493 = vmatprep.subr.bf16.mxu0 0
  %1494 = vmatpush2.bf16.msra.mxu0 0
  %1495 = vmatprep.subr.bf16.mxu0 0
  %1496 = vmatpush2.bf16.msra.mxu0 0
  %1497 = vmatprep.mubr.bf16.mxu0 0
  %1498 = vmatmul.mubr.bf16.gmra.mxu0 %v1463
  %v1499 = vpop.f32.mrf.mxu0
  %v1500 = vadd.f32 0.0, %v1499
  %v1501 = vpop.f32.mrf.mxu0
  %v1502 = vpop.f32.mrf.mxu0
  %v1503 = vpop.f32.mrf.mxu0
  %1504 = vdwg.mxu0
  %v1505 = vadd.f32 %v1448, %v1500
  %v1506 = vpack.c.bf16 %v710, %v710
  %v1511 = vunpack.c.l.b16 %v771
  %v1512 = vunpack.c.l.b16 %v772
  %v1513 = vunpack.c.l.b16 %v773
  %v1514 = vunpack.c.l.b16 %v774
  %v1515 = vpack.c.b16 %v1512, %v1511
  %v1516 = vpack.c.b16 %v1514, %v1513
  %v1520 = vsel %vm837, %v1506, 0
  %1522 = vmatprep.subr.bf16.mxu0 0
  %1523 = vmatpush1.bf16.msra.mxu0 0
  %1524 = vmatprep.subr.bf16.mxu0 0
  %1525 = vmatpush1.bf16.msra.mxu0 0
  %1526 = vmatprep.subr.bf16.mxu0 0
  %1527 = vmatpush1.bf16.msra.mxu0 0
  %1528 = vmatprep.subr.bf16.mxu0 0
  %1529 = vmatpush1.bf16.msra.mxu0 0
  %1530 = vmatprep.subr.bf16.mxu0 0
  %1531 = vmatpush1.bf16.msra.mxu0 0
  %1532 = vmatprep.subr.bf16.mxu0 0
  %1533 = vmatpush1.bf16.msra.mxu0 0
  %1534 = vmatprep.subr.bf16.mxu0 0
  %1535 = vmatpush1.bf16.msra.mxu0 %v1516
  %1536 = vmatprep.subr.bf16.mxu0 0
  %1537 = vmatpush1.bf16.msra.mxu0 %v1515
  %1538 = vmatprep.subr.bf16.mxu0 0
  %1539 = vmatpush2.bf16.msra.mxu0 0
  %1540 = vmatprep.subr.bf16.mxu0 0
  %1541 = vmatpush2.bf16.msra.mxu0 0
  %1542 = vmatprep.subr.bf16.mxu0 0
  %1543 = vmatpush2.bf16.msra.mxu0 0
  %1544 = vmatprep.subr.bf16.mxu0 0
  %1545 = vmatpush2.bf16.msra.mxu0 0
  %1546 = vmatprep.subr.bf16.mxu0 0
  %1547 = vmatpush2.bf16.msra.mxu0 0
  %1548 = vmatprep.subr.bf16.mxu0 0
  %1549 = vmatpush2.bf16.msra.mxu0 0
  %1550 = vmatprep.subr.bf16.mxu0 0
  %1551 = vmatpush2.bf16.msra.mxu0 0
  %1552 = vmatprep.subr.bf16.mxu0 0
  %1553 = vmatpush2.bf16.msra.mxu0 0
  %1554 = vmatprep.mubr.bf16.mxu0 0
  %1555 = vmatmul.mubr.bf16.gmra.mxu0 %v1520
  %v1556 = vpop.f32.mrf.mxu0
  %v1557 = vadd.f32 0.0, %v1556
  %v1558 = vpop.f32.mrf.mxu0
  %v1559 = vpop.f32.mrf.mxu0
  %v1560 = vpop.f32.mrf.mxu0
  %1561 = vdwg.mxu0
  %v1562 = vadd.f32 %v1505, %v1557
  %v1563 = vpack.c.bf16 %v711, %v711
  %v1568 = vunpack.c.l.b16 %v775
  %v1569 = vunpack.c.l.b16 %v776
  %v1570 = vunpack.c.l.b16 %v777
  %v1571 = vunpack.c.l.b16 %v778
  %v1572 = vpack.c.b16 %v1569, %v1568
  %v1573 = vpack.c.b16 %v1571, %v1570
  %v1577 = vsel %vm837, %v1563, 0
  %1579 = vmatprep.subr.bf16.mxu0 0
  %1580 = vmatpush1.bf16.msra.mxu0 0
  %1581 = vmatprep.subr.bf16.mxu0 0
  %1582 = vmatpush1.bf16.msra.mxu0 0
  %1583 = vmatprep.subr.bf16.mxu0 0
  %1584 = vmatpush1.bf16.msra.mxu0 0
  %1585 = vmatprep.subr.bf16.mxu0 0
  %1586 = vmatpush1.bf16.msra.mxu0 0
  %1587 = vmatprep.subr.bf16.mxu0 0
  %1588 = vmatpush1.bf16.msra.mxu0 0
  %1589 = vmatprep.subr.bf16.mxu0 0
  %1590 = vmatpush1.bf16.msra.mxu0 0
  %1591 = vmatprep.subr.bf16.mxu0 0
  %1592 = vmatpush1.bf16.msra.mxu0 %v1573
  %1593 = vmatprep.subr.bf16.mxu0 0
  %1594 = vmatpush1.bf16.msra.mxu0 %v1572
  %1595 = vmatprep.subr.bf16.mxu0 0
  %1596 = vmatpush2.bf16.msra.mxu0 0
  %1597 = vmatprep.subr.bf16.mxu0 0
  %1598 = vmatpush2.bf16.msra.mxu0 0
  %1599 = vmatprep.subr.bf16.mxu0 0
  %1600 = vmatpush2.bf16.msra.mxu0 0
  %1601 = vmatprep.subr.bf16.mxu0 0
  %1602 = vmatpush2.bf16.msra.mxu0 0
  %1603 = vmatprep.subr.bf16.mxu0 0
  %1604 = vmatpush2.bf16.msra.mxu0 0
  %1605 = vmatprep.subr.bf16.mxu0 0
  %1606 = vmatpush2.bf16.msra.mxu0 0
  %1607 = vmatprep.subr.bf16.mxu0 0
  %1608 = vmatpush2.bf16.msra.mxu0 0
  %1609 = vmatprep.subr.bf16.mxu0 0
  %1610 = vmatpush2.bf16.msra.mxu0 0
  %1611 = vmatprep.mubr.bf16.mxu0 0
  %1612 = vmatmul.mubr.bf16.gmra.mxu0 %v1577
  %v1613 = vpop.f32.mrf.mxu0
  %v1614 = vadd.f32 0.0, %v1613
  %v1615 = vpop.f32.mrf.mxu0
  %v1616 = vpop.f32.mrf.mxu0
  %v1617 = vpop.f32.mrf.mxu0
  %1618 = vdwg.mxu0
  %v1619 = vadd.f32 %v1562, %v1614
  %v1620 = vpack.c.bf16 %v712, %v712
  %v1625 = vunpack.c.l.b16 %v779
  %v1626 = vunpack.c.l.b16 %v780
  %v1627 = vunpack.c.l.b16 %v781
  %v1628 = vunpack.c.l.b16 %v782
  %v1629 = vpack.c.b16 %v1626, %v1625
  %v1630 = vpack.c.b16 %v1628, %v1627
  %v1634 = vsel %vm837, %v1620, 0
  %1636 = vmatprep.subr.bf16.mxu0 0
  %1637 = vmatpush1.bf16.msra.mxu0 0
  %1638 = vmatprep.subr.bf16.mxu0 0
  %1639 = vmatpush1.bf16.msra.mxu0 0
  %1640 = vmatprep.subr.bf16.mxu0 0
  %1641 = vmatpush1.bf16.msra.mxu0 0
  %1642 = vmatprep.subr.bf16.mxu0 0
  %1643 = vmatpush1.bf16.msra.mxu0 0
  %1644 = vmatprep.subr.bf16.mxu0 0
  %1645 = vmatpush1.bf16.msra.mxu0 0
  %1646 = vmatprep.subr.bf16.mxu0 0
  %1647 = vmatpush1.bf16.msra.mxu0 0
  %1648 = vmatprep.subr.bf16.mxu0 0
  %1649 = vmatpush1.bf16.msra.mxu0 %v1630
  %1650 = vmatprep.subr.bf16.mxu0 0
  %1651 = vmatpush1.bf16.msra.mxu0 %v1629
  %1652 = vmatprep.subr.bf16.mxu0 0
  %1653 = vmatpush2.bf16.msra.mxu0 0
  %1654 = vmatprep.subr.bf16.mxu0 0
  %1655 = vmatpush2.bf16.msra.mxu0 0
  %1656 = vmatprep.subr.bf16.mxu0 0
  %1657 = vmatpush2.bf16.msra.mxu0 0
  %1658 = vmatprep.subr.bf16.mxu0 0
  %1659 = vmatpush2.bf16.msra.mxu0 0
  %1660 = vmatprep.subr.bf16.mxu0 0
  %1661 = vmatpush2.bf16.msra.mxu0 0
  %1662 = vmatprep.subr.bf16.mxu0 0
  %1663 = vmatpush2.bf16.msra.mxu0 0
  %1664 = vmatprep.subr.bf16.mxu0 0
  %1665 = vmatpush2.bf16.msra.mxu0 0
  %1666 = vmatprep.subr.bf16.mxu0 0
  %1667 = vmatpush2.bf16.msra.mxu0 0
  %1668 = vmatprep.mubr.bf16.mxu0 0
  %1669 = vmatmul.mubr.bf16.gmra.mxu0 %v1634
  %v1670 = vpop.f32.mrf.mxu0
  %v1671 = vadd.f32 0.0, %v1670
  %v1672 = vpop.f32.mrf.mxu0
  %v1673 = vpop.f32.mrf.mxu0
  %v1674 = vpop.f32.mrf.mxu0
  %1675 = vdwg.mxu0
  %v1676 = vadd.f32 %v1619, %v1671
  %v1677 = vpack.c.bf16 %v713, %v713
  %v1682 = vunpack.c.l.b16 %v783
  %v1683 = vunpack.c.l.b16 %v784
  %v1684 = vunpack.c.l.b16 %v785
  %v1685 = vunpack.c.l.b16 %v786
  %v1686 = vpack.c.b16 %v1683, %v1682
  %v1687 = vpack.c.b16 %v1685, %v1684
  %v1691 = vsel %vm837, %v1677, 0
  %1693 = vmatprep.subr.bf16.mxu0 0
  %1694 = vmatpush1.bf16.msra.mxu0 0
  %1695 = vmatprep.subr.bf16.mxu0 0
  %1696 = vmatpush1.bf16.msra.mxu0 0
  %1697 = vmatprep.subr.bf16.mxu0 0
  %1698 = vmatpush1.bf16.msra.mxu0 0
  %1699 = vmatprep.subr.bf16.mxu0 0
  %1700 = vmatpush1.bf16.msra.mxu0 0
  %1701 = vmatprep.subr.bf16.mxu0 0
  %1702 = vmatpush1.bf16.msra.mxu0 0
  %1703 = vmatprep.subr.bf16.mxu0 0
  %1704 = vmatpush1.bf16.msra.mxu0 0
  %1705 = vmatprep.subr.bf16.mxu0 0
  %1706 = vmatpush1.bf16.msra.mxu0 %v1687
  %1707 = vmatprep.subr.bf16.mxu0 0
  %1708 = vmatpush1.bf16.msra.mxu0 %v1686
  %1709 = vmatprep.subr.bf16.mxu0 0
  %1710 = vmatpush2.bf16.msra.mxu0 0
  %1711 = vmatprep.subr.bf16.mxu0 0
  %1712 = vmatpush2.bf16.msra.mxu0 0
  %1713 = vmatprep.subr.bf16.mxu0 0
  %1714 = vmatpush2.bf16.msra.mxu0 0
  %1715 = vmatprep.subr.bf16.mxu0 0
  %1716 = vmatpush2.bf16.msra.mxu0 0
  %1717 = vmatprep.subr.bf16.mxu0 0
  %1718 = vmatpush2.bf16.msra.mxu0 0
  %1719 = vmatprep.subr.bf16.mxu0 0
  %1720 = vmatpush2.bf16.msra.mxu0 0
  %1721 = vmatprep.subr.bf16.mxu0 0
  %1722 = vmatpush2.bf16.msra.mxu0 0
  %1723 = vmatprep.subr.bf16.mxu0 0
  %1724 = vmatpush2.bf16.msra.mxu0 0
  %1725 = vmatprep.mubr.bf16.mxu0 0
  %1726 = vmatmul.mubr.bf16.gmra.mxu0 %v1691
  %v1727 = vpop.f32.mrf.mxu0
  %v1728 = vadd.f32 0.0, %v1727
  %v1729 = vpop.f32.mrf.mxu0
  %v1730 = vpop.f32.mrf.mxu0
  %v1731 = vpop.f32.mrf.mxu0
  %1732 = vdwg.mxu0
  %v1733 = vadd.f32 %v1676, %v1728
  %v1734 = vpack.c.bf16 %v714, %v714
  %v1739 = vunpack.c.l.b16 %v787
  %v1740 = vunpack.c.l.b16 %v788
  %v1741 = vunpack.c.l.b16 %v789
  %v1742 = vunpack.c.l.b16 %v790
  %v1743 = vpack.c.b16 %v1740, %v1739
  %v1744 = vpack.c.b16 %v1742, %v1741
  %v1748 = vsel %vm837, %v1734, 0
  %1750 = vmatprep.subr.bf16.mxu0 0
  %1751 = vmatpush1.bf16.msra.mxu0 0
  %1752 = vmatprep.subr.bf16.mxu0 0
  %1753 = vmatpush1.bf16.msra.mxu0 0
  %1754 = vmatprep.subr.bf16.mxu0 0
  %1755 = vmatpush1.bf16.msra.mxu0 0
  %1756 = vmatprep.subr.bf16.mxu0 0
  %1757 = vmatpush1.bf16.msra.mxu0 0
  %1758 = vmatprep.subr.bf16.mxu0 0
  %1759 = vmatpush1.bf16.msra.mxu0 0
  %1760 = vmatprep.subr.bf16.mxu0 0
  %1761 = vmatpush1.bf16.msra.mxu0 0
  %1762 = vmatprep.subr.bf16.mxu0 0
  %1763 = vmatpush1.bf16.msra.mxu0 %v1744
  %1764 = vmatprep.subr.bf16.mxu0 0
  %1765 = vmatpush1.bf16.msra.mxu0 %v1743
  %1766 = vmatprep.subr.bf16.mxu0 0
  %1767 = vmatpush2.bf16.msra.mxu0 0
  %1768 = vmatprep.subr.bf16.mxu0 0
  %1769 = vmatpush2.bf16.msra.mxu0 0
  %1770 = vmatprep.subr.bf16.mxu0 0
  %1771 = vmatpush2.bf16.msra.mxu0 0
  %1772 = vmatprep.subr.bf16.mxu0 0
  %1773 = vmatpush2.bf16.msra.mxu0 0
  %1774 = vmatprep.subr.bf16.mxu0 0
  %1775 = vmatpush2.bf16.msra.mxu0 0
  %1776 = vmatprep.subr.bf16.mxu0 0
  %1777 = vmatpush2.bf16.msra.mxu0 0
  %1778 = vmatprep.subr.bf16.mxu0 0
  %1779 = vmatpush2.bf16.msra.mxu0 0
  %1780 = vmatprep.subr.bf16.mxu0 0
  %1781 = vmatpush2.bf16.msra.mxu0 0
  %1782 = vmatprep.mubr.bf16.mxu0 0
  %1783 = vmatmul.mubr.bf16.gmra.mxu0 %v1748
  %v1784 = vpop.f32.mrf.mxu0
  %v1785 = vadd.f32 0.0, %v1784
  %v1786 = vpop.f32.mrf.mxu0
  %v1787 = vpop.f32.mrf.mxu0
  %v1788 = vpop.f32.mrf.mxu0
  %1789 = vdwg.mxu0
  %v1790 = vadd.f32 %v1733, %v1785
  %v1791 = vpack.c.bf16 %v715, %v715
  %v1796 = vunpack.c.l.b16 %v791
  %v1797 = vunpack.c.l.b16 %v792
  %v1798 = vunpack.c.l.b16 %v793
  %v1799 = vunpack.c.l.b16 %v794
  %v1800 = vpack.c.b16 %v1797, %v1796
  %v1801 = vpack.c.b16 %v1799, %v1798
  %v1805 = vsel %vm837, %v1791, 0
  %1807 = vmatprep.subr.bf16.mxu0 0
  %1808 = vmatpush1.bf16.msra.mxu0 0
  %1809 = vmatprep.subr.bf16.mxu0 0
  %1810 = vmatpush1.bf16.msra.mxu0 0
  %1811 = vmatprep.subr.bf16.mxu0 0
  %1812 = vmatpush1.bf16.msra.mxu0 0
  %1813 = vmatprep.subr.bf16.mxu0 0
  %1814 = vmatpush1.bf16.msra.mxu0 0
  %1815 = vmatprep.subr.bf16.mxu0 0
  %1816 = vmatpush1.bf16.msra.mxu0 0
  %1817 = vmatprep.subr.bf16.mxu0 0
  %1818 = vmatpush1.bf16.msra.mxu0 0
  %1819 = vmatprep.subr.bf16.mxu0 0
  %1820 = vmatpush1.bf16.msra.mxu0 %v1801
  %1821 = vmatprep.subr.bf16.mxu0 0
  %1822 = vmatpush1.bf16.msra.mxu0 %v1800
  %1823 = vmatprep.subr.bf16.mxu0 0
  %1824 = vmatpush2.bf16.msra.mxu0 0
  %1825 = vmatprep.subr.bf16.mxu0 0
  %1826 = vmatpush2.bf16.msra.mxu0 0
  %1827 = vmatprep.subr.bf16.mxu0 0
  %1828 = vmatpush2.bf16.msra.mxu0 0
  %1829 = vmatprep.subr.bf16.mxu0 0
  %1830 = vmatpush2.bf16.msra.mxu0 0
  %1831 = vmatprep.subr.bf16.mxu0 0
  %1832 = vmatpush2.bf16.msra.mxu0 0
  %1833 = vmatprep.subr.bf16.mxu0 0
  %1834 = vmatpush2.bf16.msra.mxu0 0
  %1835 = vmatprep.subr.bf16.mxu0 0
  %1836 = vmatpush2.bf16.msra.mxu0 0
  %1837 = vmatprep.subr.bf16.mxu0 0
  %1838 = vmatpush2.bf16.msra.mxu0 0
  %1839 = vmatprep.mubr.bf16.mxu0 0
  %1840 = vmatmul.mubr.bf16.gmra.mxu0 %v1805
  %v1841 = vpop.f32.mrf.mxu0
  %v1842 = vadd.f32 0.0, %v1841
  %v1843 = vpop.f32.mrf.mxu0
  %v1844 = vpop.f32.mrf.mxu0
  %v1845 = vpop.f32.mrf.mxu0
  %1846 = vdwg.mxu0
  %v1847 = vadd.f32 %v1790, %v1842
  %v1848 = vpack.c.bf16 %v716, %v716
  %v1853 = vunpack.c.l.b16 %v795
  %v1854 = vunpack.c.l.b16 %v796
  %v1855 = vunpack.c.l.b16 %v797
  %v1856 = vunpack.c.l.b16 %v798
  %v1857 = vpack.c.b16 %v1854, %v1853
  %v1858 = vpack.c.b16 %v1856, %v1855
  %v1862 = vsel %vm837, %v1848, 0
  %1864 = vmatprep.subr.bf16.mxu0 0
  %1865 = vmatpush1.bf16.msra.mxu0 0
  %1866 = vmatprep.subr.bf16.mxu0 0
  %1867 = vmatpush1.bf16.msra.mxu0 0
  %1868 = vmatprep.subr.bf16.mxu0 0
  %1869 = vmatpush1.bf16.msra.mxu0 0
  %1870 = vmatprep.subr.bf16.mxu0 0
  %1871 = vmatpush1.bf16.msra.mxu0 0
  %1872 = vmatprep.subr.bf16.mxu0 0
  %1873 = vmatpush1.bf16.msra.mxu0 0
  %1874 = vmatprep.subr.bf16.mxu0 0
  %1875 = vmatpush1.bf16.msra.mxu0 0
  %1876 = vmatprep.subr.bf16.mxu0 0
  %1877 = vmatpush1.bf16.msra.mxu0 %v1858
  %1878 = vmatprep.subr.bf16.mxu0 0
  %1879 = vmatpush1.bf16.msra.mxu0 %v1857
  %1880 = vmatprep.subr.bf16.mxu0 0
  %1881 = vmatpush2.bf16.msra.mxu0 0
  %1882 = vmatprep.subr.bf16.mxu0 0
  %1883 = vmatpush2.bf16.msra.mxu0 0
  %1884 = vmatprep.subr.bf16.mxu0 0
  %1885 = vmatpush2.bf16.msra.mxu0 0
  %1886 = vmatprep.subr.bf16.mxu0 0
  %1887 = vmatpush2.bf16.msra.mxu0 0
  %1888 = vmatprep.subr.bf16.mxu0 0
  %1889 = vmatpush2.bf16.msra.mxu0 0
  %1890 = vmatprep.subr.bf16.mxu0 0
  %1891 = vmatpush2.bf16.msra.mxu0 0
  %1892 = vmatprep.subr.bf16.mxu0 0
  %1893 = vmatpush2.bf16.msra.mxu0 0
  %1894 = vmatprep.subr.bf16.mxu0 0
  %1895 = vmatpush2.bf16.msra.mxu0 0
  %1896 = vmatprep.mubr.bf16.mxu0 0
  %1897 = vmatmul.mubr.bf16.gmra.mxu0 %v1862
  %v1898 = vpop.f32.mrf.mxu0
  %v1899 = vadd.f32 0.0, %v1898
  %v1900 = vpop.f32.mrf.mxu0
  %v1901 = vpop.f32.mrf.mxu0
  %v1902 = vpop.f32.mrf.mxu0
  %1903 = vdwg.mxu0
  %v1904 = vadd.f32 %v1847, %v1899
  %v1905 = vpack.c.bf16 %v717, %v717
  %v1910 = vunpack.c.l.b16 %v799
  %v1911 = vunpack.c.l.b16 %v800
  %v1912 = vunpack.c.l.b16 %v801
  %v1913 = vunpack.c.l.b16 %v802
  %v1914 = vpack.c.b16 %v1911, %v1910
  %v1915 = vpack.c.b16 %v1913, %v1912
  %v1919 = vsel %vm837, %v1905, 0
  %1921 = vmatprep.subr.bf16.mxu0 0
  %1922 = vmatpush1.bf16.msra.mxu0 0
  %1923 = vmatprep.subr.bf16.mxu0 0
  %1924 = vmatpush1.bf16.msra.mxu0 0
  %1925 = vmatprep.subr.bf16.mxu0 0
  %1926 = vmatpush1.bf16.msra.mxu0 0
  %1927 = vmatprep.subr.bf16.mxu0 0
  %1928 = vmatpush1.bf16.msra.mxu0 0
  %1929 = vmatprep.subr.bf16.mxu0 0
  %1930 = vmatpush1.bf16.msra.mxu0 0
  %1931 = vmatprep.subr.bf16.mxu0 0
  %1932 = vmatpush1.bf16.msra.mxu0 0
  %1933 = vmatprep.subr.bf16.mxu0 0
  %1934 = vmatpush1.bf16.msra.mxu0 %v1915
  %1935 = vmatprep.subr.bf16.mxu0 0
  %1936 = vmatpush1.bf16.msra.mxu0 %v1914
  %1937 = vmatprep.subr.bf16.mxu0 0
  %1938 = vmatpush2.bf16.msra.mxu0 0
  %1939 = vmatprep.subr.bf16.mxu0 0
  %1940 = vmatpush2.bf16.msra.mxu0 0
  %1941 = vmatprep.subr.bf16.mxu0 0
  %1942 = vmatpush2.bf16.msra.mxu0 0
  %1943 = vmatprep.subr.bf16.mxu0 0
  %1944 = vmatpush2.bf16.msra.mxu0 0
  %1945 = vmatprep.subr.bf16.mxu0 0
  %1946 = vmatpush2.bf16.msra.mxu0 0
  %1947 = vmatprep.subr.bf16.mxu0 0
  %1948 = vmatpush2.bf16.msra.mxu0 0
  %1949 = vmatprep.subr.bf16.mxu0 0
  %1950 = vmatpush2.bf16.msra.mxu0 0
  %1951 = vmatprep.subr.bf16.mxu0 0
  %1952 = vmatpush2.bf16.msra.mxu0 0
  %1953 = vmatprep.mubr.bf16.mxu0 0
  %1954 = vmatmul.mubr.bf16.gmra.mxu0 %v1919
  %v1955 = vpop.f32.mrf.mxu0
  %v1956 = vadd.f32 0.0, %v1955
  %v1957 = vpop.f32.mrf.mxu0
  %v1958 = vpop.f32.mrf.mxu0
  %v1959 = vpop.f32.mrf.mxu0
  %1960 = vdwg.mxu0
  %v1961 = vadd.f32 %v1904, %v1956
  %v1962 = vpack.c.bf16 %v718, %v718
  %v1967 = vunpack.c.l.b16 %v803
  %v1968 = vunpack.c.l.b16 %v804
  %v1969 = vunpack.c.l.b16 %v805
  %v1970 = vunpack.c.l.b16 %v806
  %v1971 = vpack.c.b16 %v1968, %v1967
  %v1972 = vpack.c.b16 %v1970, %v1969
  %v1976 = vsel %vm837, %v1962, 0
  %1978 = vmatprep.subr.bf16.mxu0 0
  %1979 = vmatpush1.bf16.msra.mxu0 0
  %1980 = vmatprep.subr.bf16.mxu0 0
  %1981 = vmatpush1.bf16.msra.mxu0 0
  %1982 = vmatprep.subr.bf16.mxu0 0
  %1983 = vmatpush1.bf16.msra.mxu0 0
  %1984 = vmatprep.subr.bf16.mxu0 0
  %1985 = vmatpush1.bf16.msra.mxu0 0
  %1986 = vmatprep.subr.bf16.mxu0 0
  %1987 = vmatpush1.bf16.msra.mxu0 0
  %1988 = vmatprep.subr.bf16.mxu0 0
  %1989 = vmatpush1.bf16.msra.mxu0 0
  %1990 = vmatprep.subr.bf16.mxu0 0
  %1991 = vmatpush1.bf16.msra.mxu0 %v1972
  %1992 = vmatprep.subr.bf16.mxu0 0
  %1993 = vmatpush1.bf16.msra.mxu0 %v1971
  %1994 = vmatprep.subr.bf16.mxu0 0
  %1995 = vmatpush2.bf16.msra.mxu0 0
  %1996 = vmatprep.subr.bf16.mxu0 0
  %1997 = vmatpush2.bf16.msra.mxu0 0
  %1998 = vmatprep.subr.bf16.mxu0 0
  %1999 = vmatpush2.bf16.msra.mxu0 0
  %2000 = vmatprep.subr.bf16.mxu0 0
  %2001 = vmatpush2.bf16.msra.mxu0 0
  %2002 = vmatprep.subr.bf16.mxu0 0
  %2003 = vmatpush2.bf16.msra.mxu0 0
  %2004 = vmatprep.subr.bf16.mxu0 0
  %2005 = vmatpush2.bf16.msra.mxu0 0
  %2006 = vmatprep.subr.bf16.mxu0 0
  %2007 = vmatpush2.bf16.msra.mxu0 0
  %2008 = vmatprep.subr.bf16.mxu0 0
  %2009 = vmatpush2.bf16.msra.mxu0 0
  %2010 = vmatprep.mubr.bf16.mxu0 0
  %2011 = vmatmul.mubr.bf16.gmra.mxu0 %v1976
  %v2012 = vpop.f32.mrf.mxu0
  %v2013 = vadd.f32 0.0, %v2012
  %v2014 = vpop.f32.mrf.mxu0
  %v2015 = vpop.f32.mrf.mxu0
  %v2016 = vpop.f32.mrf.mxu0
  %2017 = vdwg.mxu0
  %v2018 = vadd.f32 %v1961, %v2013
  %v2019 = vpack.c.bf16 %v719, %v719
  %v2024 = vunpack.c.l.b16 %v807
  %v2025 = vunpack.c.l.b16 %v808
  %v2026 = vunpack.c.l.b16 %v809
  %v2027 = vunpack.c.l.b16 %v810
  %v2028 = vpack.c.b16 %v2025, %v2024
  %v2029 = vpack.c.b16 %v2027, %v2026
  %v2033 = vsel %vm837, %v2019, 0
  %2035 = vmatprep.subr.bf16.mxu0 0
  %2036 = vmatpush1.bf16.msra.mxu0 0
  %2037 = vmatprep.subr.bf16.mxu0 0
  %2038 = vmatpush1.bf16.msra.mxu0 0
  %2039 = vmatprep.subr.bf16.mxu0 0
  %2040 = vmatpush1.bf16.msra.mxu0 0
  %2041 = vmatprep.subr.bf16.mxu0 0
  %2042 = vmatpush1.bf16.msra.mxu0 0
  %2043 = vmatprep.subr.bf16.mxu0 0
  %2044 = vmatpush1.bf16.msra.mxu0 0
  %2045 = vmatprep.subr.bf16.mxu0 0
  %2046 = vmatpush1.bf16.msra.mxu0 0
  %2047 = vmatprep.subr.bf16.mxu0 0
  %2048 = vmatpush1.bf16.msra.mxu0 %v2029
  %2049 = vmatprep.subr.bf16.mxu0 0
  %2050 = vmatpush1.bf16.msra.mxu0 %v2028
  %2051 = vmatprep.subr.bf16.mxu0 0
  %2052 = vmatpush2.bf16.msra.mxu0 0
  %2053 = vmatprep.subr.bf16.mxu0 0
  %2054 = vmatpush2.bf16.msra.mxu0 0
  %2055 = vmatprep.subr.bf16.mxu0 0
  %2056 = vmatpush2.bf16.msra.mxu0 0
  %2057 = vmatprep.subr.bf16.mxu0 0
  %2058 = vmatpush2.bf16.msra.mxu0 0
  %2059 = vmatprep.subr.bf16.mxu0 0
  %2060 = vmatpush2.bf16.msra.mxu0 0
  %2061 = vmatprep.subr.bf16.mxu0 0
  %2062 = vmatpush2.bf16.msra.mxu0 0
  %2063 = vmatprep.subr.bf16.mxu0 0
  %2064 = vmatpush2.bf16.msra.mxu0 0
  %2065 = vmatprep.subr.bf16.mxu0 0
  %2066 = vmatpush2.bf16.msra.mxu0 0
  %2067 = vmatprep.mubr.bf16.mxu0 0
  %2068 = vmatmul.mubr.bf16.gmra.mxu0 %v2033
  %v2069 = vpop.f32.mrf.mxu0
  %v2070 = vadd.f32 0.0, %v2069
  %v2071 = vpop.f32.mrf.mxu0
  %v2072 = vpop.f32.mrf.mxu0
  %v2073 = vpop.f32.mrf.mxu0
  %2074 = vdwg.mxu0
  %v2075 = vadd.f32 %v2018, %v2070
  %v2076 = vpack.c.bf16 %v720, %v720
  %v2081 = vunpack.c.l.b16 %v811
  %v2082 = vunpack.c.l.b16 %v812
  %v2083 = vunpack.c.l.b16 %v813
  %v2084 = vunpack.c.l.b16 %v814
  %v2085 = vpack.c.b16 %v2082, %v2081
  %v2086 = vpack.c.b16 %v2084, %v2083
  %v2090 = vsel %vm837, %v2076, 0
  %2092 = vmatprep.subr.bf16.mxu0 0
  %2093 = vmatpush1.bf16.msra.mxu0 0
  %2094 = vmatprep.subr.bf16.mxu0 0
  %2095 = vmatpush1.bf16.msra.mxu0 0
  %2096 = vmatprep.subr.bf16.mxu0 0
  %2097 = vmatpush1.bf16.msra.mxu0 0
  %2098 = vmatprep.subr.bf16.mxu0 0
  %2099 = vmatpush1.bf16.msra.mxu0 0
  %2100 = vmatprep.subr.bf16.mxu0 0
  %2101 = vmatpush1.bf16.msra.mxu0 0
  %2102 = vmatprep.subr.bf16.mxu0 0
  %2103 = vmatpush1.bf16.msra.mxu0 0
  %2104 = vmatprep.subr.bf16.mxu0 0
  %2105 = vmatpush1.bf16.msra.mxu0 %v2086
  %2106 = vmatprep.subr.bf16.mxu0 0
  %2107 = vmatpush1.bf16.msra.mxu0 %v2085
  %2108 = vmatprep.subr.bf16.mxu0 0
  %2109 = vmatpush2.bf16.msra.mxu0 0
  %2110 = vmatprep.subr.bf16.mxu0 0
  %2111 = vmatpush2.bf16.msra.mxu0 0
  %2112 = vmatprep.subr.bf16.mxu0 0
  %2113 = vmatpush2.bf16.msra.mxu0 0
  %2114 = vmatprep.subr.bf16.mxu0 0
  %2115 = vmatpush2.bf16.msra.mxu0 0
  %2116 = vmatprep.subr.bf16.mxu0 0
  %2117 = vmatpush2.bf16.msra.mxu0 0
  %2118 = vmatprep.subr.bf16.mxu0 0
  %2119 = vmatpush2.bf16.msra.mxu0 0
  %2120 = vmatprep.subr.bf16.mxu0 0
  %2121 = vmatpush2.bf16.msra.mxu0 0
  %2122 = vmatprep.subr.bf16.mxu0 0
  %2123 = vmatpush2.bf16.msra.mxu0 0
  %2124 = vmatprep.mubr.bf16.mxu0 0
  %2125 = vmatmul.mubr.bf16.gmra.mxu0 %v2090
  %v2126 = vpop.f32.mrf.mxu0
  %v2127 = vadd.f32 0.0, %v2126
  %v2128 = vpop.f32.mrf.mxu0
  %v2129 = vpop.f32.mrf.mxu0
  %v2130 = vpop.f32.mrf.mxu0
  %2131 = vdwg.mxu0
  %v2132 = vadd.f32 %v2075, %v2127
  %v2133 = vpack.c.bf16 %v721, %v721
  %v2138 = vunpack.c.l.b16 %v815
  %v2139 = vunpack.c.l.b16 %v816
  %v2140 = vunpack.c.l.b16 %v817
  %v2141 = vunpack.c.l.b16 %v818
  %v2142 = vpack.c.b16 %v2139, %v2138
  %v2143 = vpack.c.b16 %v2141, %v2140
  %v2147 = vsel %vm837, %v2133, 0
  %2149 = vmatprep.subr.bf16.mxu0 0
  %2150 = vmatpush1.bf16.msra.mxu0 0
  %2151 = vmatprep.subr.bf16.mxu0 0
  %2152 = vmatpush1.bf16.msra.mxu0 0
  %2153 = vmatprep.subr.bf16.mxu0 0
  %2154 = vmatpush1.bf16.msra.mxu0 0
  %2155 = vmatprep.subr.bf16.mxu0 0
  %2156 = vmatpush1.bf16.msra.mxu0 0
  %2157 = vmatprep.subr.bf16.mxu0 0
  %2158 = vmatpush1.bf16.msra.mxu0 0
  %2159 = vmatprep.subr.bf16.mxu0 0
  %2160 = vmatpush1.bf16.msra.mxu0 0
  %2161 = vmatprep.subr.bf16.mxu0 0
  %2162 = vmatpush1.bf16.msra.mxu0 %v2143
  %2163 = vmatprep.subr.bf16.mxu0 0
  %2164 = vmatpush1.bf16.msra.mxu0 %v2142
  %2165 = vmatprep.subr.bf16.mxu0 0
  %2166 = vmatpush2.bf16.msra.mxu0 0
  %2167 = vmatprep.subr.bf16.mxu0 0
  %2168 = vmatpush2.bf16.msra.mxu0 0
  %2169 = vmatprep.subr.bf16.mxu0 0
  %2170 = vmatpush2.bf16.msra.mxu0 0
  %2171 = vmatprep.subr.bf16.mxu0 0
  %2172 = vmatpush2.bf16.msra.mxu0 0
  %2173 = vmatprep.subr.bf16.mxu0 0
  %2174 = vmatpush2.bf16.msra.mxu0 0
  %2175 = vmatprep.subr.bf16.mxu0 0
  %2176 = vmatpush2.bf16.msra.mxu0 0
  %2177 = vmatprep.subr.bf16.mxu0 0
  %2178 = vmatpush2.bf16.msra.mxu0 0
  %2179 = vmatprep.subr.bf16.mxu0 0
  %2180 = vmatpush2.bf16.msra.mxu0 0
  %2181 = vmatprep.mubr.bf16.mxu0 0
  %2182 = vmatmul.mubr.bf16.gmra.mxu0 %v2147
  %v2183 = vpop.f32.mrf.mxu0
  %v2184 = vadd.f32 0.0, %v2183
  %v2185 = vpop.f32.mrf.mxu0
  %v2186 = vpop.f32.mrf.mxu0
  %v2187 = vpop.f32.mrf.mxu0
  %2188 = vdwg.mxu0
  %v2189 = vadd.f32 %v2132, %v2184
  %v2190 = vpack.c.bf16 %v722, %v722
  %v2195 = vunpack.c.l.b16 %v819
  %v2196 = vunpack.c.l.b16 %v820
  %v2197 = vunpack.c.l.b16 %v821
  %v2198 = vunpack.c.l.b16 %v822
  %v2199 = vpack.c.b16 %v2196, %v2195
  %v2200 = vpack.c.b16 %v2198, %v2197
  %v2204 = vsel %vm837, %v2190, 0
  %2206 = vmatprep.subr.bf16.mxu0 0
  %2207 = vmatpush1.bf16.msra.mxu0 0
  %2208 = vmatprep.subr.bf16.mxu0 0
  %2209 = vmatpush1.bf16.msra.mxu0 0
  %2210 = vmatprep.subr.bf16.mxu0 0
  %2211 = vmatpush1.bf16.msra.mxu0 0
  %2212 = vmatprep.subr.bf16.mxu0 0
  %2213 = vmatpush1.bf16.msra.mxu0 0
  %2214 = vmatprep.subr.bf16.mxu0 0
  %2215 = vmatpush1.bf16.msra.mxu0 0
  %2216 = vmatprep.subr.bf16.mxu0 0
  %2217 = vmatpush1.bf16.msra.mxu0 0
  %2218 = vmatprep.subr.bf16.mxu0 0
  %2219 = vmatpush1.bf16.msra.mxu0 %v2200
  %2220 = vmatprep.subr.bf16.mxu0 0
  %2221 = vmatpush1.bf16.msra.mxu0 %v2199
  %2222 = vmatprep.subr.bf16.mxu0 0
  %2223 = vmatpush2.bf16.msra.mxu0 0
  %2224 = vmatprep.subr.bf16.mxu0 0
  %2225 = vmatpush2.bf16.msra.mxu0 0
  %2226 = vmatprep.subr.bf16.mxu0 0
  %2227 = vmatpush2.bf16.msra.mxu0 0
  %2228 = vmatprep.subr.bf16.mxu0 0
  %2229 = vmatpush2.bf16.msra.mxu0 0
  %2230 = vmatprep.subr.bf16.mxu0 0
  %2231 = vmatpush2.bf16.msra.mxu0 0
  %2232 = vmatprep.subr.bf16.mxu0 0
  %2233 = vmatpush2.bf16.msra.mxu0 0
  %2234 = vmatprep.subr.bf16.mxu0 0
  %2235 = vmatpush2.bf16.msra.mxu0 0
  %2236 = vmatprep.subr.bf16.mxu0 0
  %2237 = vmatpush2.bf16.msra.mxu0 0
  %2238 = vmatprep.mubr.bf16.mxu0 0
  %2239 = vmatmul.mubr.bf16.gmra.mxu0 %v2204
  %v2240 = vpop.f32.mrf.mxu0
  %v2241 = vadd.f32 0.0, %v2240
  %v2242 = vpop.f32.mrf.mxu0
  %v2243 = vpop.f32.mrf.mxu0
  %v2244 = vpop.f32.mrf.mxu0
  %2245 = vdwg.mxu0
  %v2246 = vadd.f32 %v2189, %v2241
  %v2247 = vld [vmem:[%s4] sm:$0x1]
  %v2249 = vlaneseq
  %v2250 = vshrl.u32 %v2249, 7
  %v2251 = vsub.s32 0, %v2250
  %v2252 = vrot.slane %v2247, %v2251
  %v2254 = vadd.f32 %v2246, %v2252
  %v2255 = vmax.f32 %v2254, 0.0
  %v2256 = vpack.c.bf16 %v2255, %v2255
  %v2257 = vld [vmem:[%s5] sm:$0xf]
  %v2258 = vld [vmem:[%s5 + $0x4] sm:$0xf]
  %v2259 = vld [vmem:[%s5 + $0x8] sm:$0xf]
  %v2260 = vld [vmem:[%s5 + $0xc] sm:$0xf]
  %v2261 = vld [vmem:[%s6] sm:$0x1]
  %v2263 = vlaneseq
  %v2264 = vshrl.u32 %v2263, 7
  %v2265 = vsub.s32 0, %v2264
  %v2266 = vrot.slane %v2261, %v2265
  %v2272 = vunpack.c.l.b16 %v2257
  %v2273 = vunpack.c.l.b16 %v2258
  %v2274 = vunpack.c.l.b16 %v2259
  %v2275 = vunpack.c.l.b16 %v2260
  %v2276 = vpack.c.b16 %v2273, %v2272
  %v2277 = vpack.c.b16 %v2275, %v2274
  %v2281 = vsel %vm837, %v2256, 0
  %2283 = vmatprep.subr.bf16.mxu0 0
  %2284 = vmatpush1.bf16.msra.mxu0 0
  %2285 = vmatprep.subr.bf16.mxu0 0
  %2286 = vmatpush1.bf16.msra.mxu0 0
  %2287 = vmatprep.subr.bf16.mxu0 0
  %2288 = vmatpush1.bf16.msra.mxu0 0
  %2289 = vmatprep.subr.bf16.mxu0 0
  %2290 = vmatpush1.bf16.msra.mxu0 0
  %2291 = vmatprep.subr.bf16.mxu0 0
  %2292 = vmatpush1.bf16.msra.mxu0 0
  %2293 = vmatprep.subr.bf16.mxu0 0
  %2294 = vmatpush1.bf16.msra.mxu0 0
  %2295 = vmatprep.subr.bf16.mxu0 0
  %2296 = vmatpush1.bf16.msra.mxu0 %v2277
  %2297 = vmatprep.subr.bf16.mxu0 0
  %2298 = vmatpush1.bf16.msra.mxu0 %v2276
  %2299 = vmatprep.subr.bf16.mxu0 0
  %2300 = vmatpush2.bf16.msra.mxu0 0
  %2301 = vmatprep.subr.bf16.mxu0 0
  %2302 = vmatpush2.bf16.msra.mxu0 0
  %2303 = vmatprep.subr.bf16.mxu0 0
  %2304 = vmatpush2.bf16.msra.mxu0 0
  %2305 = vmatprep.subr.bf16.mxu0 0
  %2306 = vmatpush2.bf16.msra.mxu0 0
  %2307 = vmatprep.subr.bf16.mxu0 0
  %2308 = vmatpush2.bf16.msra.mxu0 0
  %2309 = vmatprep.subr.bf16.mxu0 0
  %2310 = vmatpush2.bf16.msra.mxu0 0
  %2311 = vmatprep.subr.bf16.mxu0 0
  %2312 = vmatpush2.bf16.msra.mxu0 0
  %2313 = vmatprep.subr.bf16.mxu0 0
  %2314 = vmatpush2.bf16.msra.mxu0 0
  %2315 = vmatprep.mubr.bf16.mxu0 0
  %2316 = vmatmul.mubr.bf16.gmra.mxu0 %v2281
  %v2317 = vpop.f32.mrf.mxu0
  %v2318 = vadd.f32 %v2266, %v2317
  %v2319 = vpop.f32.mrf.mxu0
  %v2320 = vpop.f32.mrf.mxu0
  %v2321 = vpop.f32.mrf.mxu0
  %2322 = vdwg.mxu0
  %vm2323 = vcmask 31744
  %2324 = vst.msk [vmem:[%s7] sm:$0xff] %vm2323, %v2318
  // Predicated region
  $region30: #{dqn_forward.3} parent=0 // pred_check
    _
  $region31: #{dqn_forward.3} parent=0 // pred_check_branch
    %2326 = sbr.rel (0) target = $region33
  $region32: #{dqn_forward.3} parent=0 // pred_region
    _
  $region33: #{dqn_forward.3} parent=0 // pred_fallthru
    _
  // Predicated region
  $region34: #{dqn_forward.3} parent=0 // pred_check
    _
  $region35: #{dqn_forward.3} parent=0 // pred_check_branch
    %2328 = sbr.rel (0) target = $region37
  $region36: #{dqn_forward.3} parent=0 // pred_region
    _
  $region37: #{dqn_forward.3} parent=0 // pred_fallthru
    _

</llo_original>
